<compile_context>
chip_gen: v7x
topology: tpu7x:2x2x1
jax: 0.10.0
libtpu: 0.0.40
codegen_flags: <defaults>
</compile_context>

<pallas_src>
import functools

import numpy as np
import jax
import jax.numpy as jnp
from jax import lax
from jax.experimental import pallas as pl
from jax.experimental.pallas import tpu as pltpu


AUG = 8  # augmentation rows appended to the channel (contraction) axis


# ----------------------------------------------------------------------------- kernel
def _swa_kernel(n_heads, x_ref, w_ref, b_ref, kpad_ref, gamma_ref, out_ref):
    """One batch element per grid step.

    x_ref    : (1, C, N) f32   input, spatial flattened on the lane axis (N = H*W)
    w_ref    : (3C, C)  bf16   fused [Wq; Wk; Wv] 1x1-conv weights
    b_ref    : (3C, 1)  f32    fused biases
    kpad_ref : (AUG, N) f32    rows [log(kw)_hi, log(kw)_lo, 0, ...] appended to k
    gamma_ref: (1,)     f32    residual gate (SMEM scalar)
    out_ref  : (1, C, N) f32
    """
    C = x_ref.shape[1]
    N = x_ref.shape[2]
    d = C // n_heads
    Ca = C + AUG

    x = x_ref[0]                                                     # (C, N) f32

    # Fused 1x1 QKV conv == one channel-mixing matmul on the MXU.
    qkv = jnp.dot(w_ref[...], x.astype(jnp.bfloat16),
                  preferred_element_type=jnp.float32) + b_ref[...]   # (3C, N) f32
    q = qkv[:C]
    k = qkv[C:2 * C]
    v = qkv[2 * C:]

    # Augment the contraction axis with the key-multiplicity bias:
    #   energy[n, m] = sum_c k[c,n] * q[c,m] + log(kw)[n]
    # log(kw) rides in as two extra K rows (hi/lo split keeps the bias near-f32
    # accurate although the MXU operands are bf16); q gets matching ones rows.
    # Padding to C+8 rows keeps every shape a multiple of the (8,128) tile.
    qpad = (lax.broadcasted_iota(jnp.int32, (AUG, N), 0) < 2).astype(jnp.float32)
    q_aug = jnp.concatenate([q, qpad], axis=0)                       # (Ca, N) f32
    k_aug = jnp.concatenate([k, kpad_ref[...]], axis=0)              # (Ca, N) f32

    # Loop-invariant bf16 operands; the single transpose (keys -> sublanes) is
    # hoisted out of the head loop.
    q_augb = q_aug.astype(jnp.bfloat16)                              # (Ca, N)
    k_augTb = k_aug.T.astype(jnp.bfloat16)                           # (N, Ca)
    vb = v.astype(jnp.bfloat16)                                      # (C, N)

    row_aug = lax.broadcasted_iota(jnp.int32, (Ca, 1), 0)
    row_c = lax.broadcasted_iota(jnp.int32, (C, 1), 0)

    def head_body(h, acc):
        lo = h * d
        hi = lo + d
        # 0/1 masks pick this head's channels (plus the two bias rows on q);
        # masked rows contribute nothing to the contraction.
        qmask = (((row_aug >= lo) & (row_aug < hi)) |
                 ((row_aug >= C) & (row_aug < C + 2))).astype(jnp.bfloat16)
        vmask = ((row_c >= lo) & (row_c < hi)).astype(jnp.bfloat16)

        # energy: keys on sublanes, queries on lanes  (N, Ca) @ (Ca, N) -> (N, N)
        e = jnp.dot(k_augTb, q_augb * qmask,
                    preferred_element_type=jnp.float32)

        # softmax over keys (axis 0); reductions land lane-major (1, N) so the
        # deferred normalization needs no relayout.  Elementwise math stays f32.
        m = jnp.max(e, axis=0, keepdims=True)                        # (1, N)
        p = jnp.exp(e - m)                                           # (N, N) f32
        denom = jnp.sum(p, axis=0, keepdims=True)                    # (1, N)
        r = pl.reciprocal(denom, approx=True)                        # (1, N)

        # out_h[c, m] = sum_n v[c, n] * p[n, m]   (MXU, K = N); normalize the
        # small (C, N) result instead of the (N, N) probability matrix.
        oh = jnp.dot(vb * vmask, p.astype(jnp.bfloat16),
                     preferred_element_type=jnp.float32)             # (C, N)
        return acc + oh * r

    out_window = lax.fori_loop(0, n_heads, head_body,
                               jnp.zeros((C, N), jnp.float32), unroll=True)

    out_ref[0] = gamma_ref[0] * out_window + x                       # residual


# ----------------------------------------------------------------------------- glue
def _window_axis_weights(size, window_size):
    """Per-axis key-pixel multiplicity: fold the PyTorch unfold() duplication over
    the reflect padding.  w[s] = #{(wi, i) : padded coord i+wi reflects to s}."""
    p = window_size // 2
    padded = size + 2 * p
    n_win = padded - window_size + 1
    w = np.zeros((size,), np.float32)
    for y in range(padded):
        lo = max(0, y - window_size + 1)            # min sliding-window start
        hi = min(n_win - 1, y)                      # max sliding-window start
        mult = hi - lo + 1
        if mult <= 0:
            continue
        t = y - p                                   # 'reflect' (no edge repeat)
        if t < 0:
            s = -t
        elif t > size - 1:
            s = 2 * (size - 1) - t
        else:
            s = t
        w[s] += mult
    return w


def swa_forward(x, wq, bq, wk, bk, wv, bv, gamma, *, n_heads=8, window_size=8):
    """Pallas TPU forward of SWA.  x: (B, C, H, W) NCHW; conv params in PyTorch layout."""
    B, C, H, W = x.shape
    assert C % n_heads == 0, "in_channels must be divisible by n_heads"
    assert window_size // 2 < min(H, W), "reflect pad must be smaller than spatial dims"
    N = H * W

    x3 = x.reshape(B, C, N).astype(jnp.float32)          # spatial on the lane axis

    w_qkv = jnp.concatenate(
        [wq.reshape(C, C), wk.reshape(C, C), wv.reshape(C, C)],
        axis=0).astype(jnp.bfloat16)                     # (3C, C) fused, bf16 for the MXU
    b_qkv = jnp.concatenate(
        [bq.reshape(C, 1), bk.reshape(C, 1), bv.reshape(C, 1)],
        axis=0).astype(jnp.float32)                      # (3C, 1)

    # Key multiplicity weights (reflect pad x unfold folded) as a matmul bias:
    # log(kw) split into bf16 hi + residual lo rows so f32 accumulation recovers
    # near-f32 accuracy of the bias.
    wy = _window_axis_weights(H, window_size)
    wx = _window_axis_weights(W, window_size)
    log_kw = jnp.asarray(np.log(np.outer(wy, wx)).reshape(1, N), jnp.float32)
    lkw_hi = log_kw.astype(jnp.bfloat16).astype(jnp.float32)
    lkw_lo = log_kw - lkw_hi
    kpad = jnp.concatenate(
        [lkw_hi, lkw_lo, jnp.zeros((AUG - 2, N), jnp.float32)], axis=0)   # (AUG, N)

    g = jnp.asarray(gamma, jnp.float32).reshape(1)

    kernel = functools.partial(_swa_kernel, n_heads)
    bcast = lambda b: (0, 0)

    # Note (v5e/v6e): if the production batch is large, several batch elements
    # could be blocked per grid step to amortize the ~0.35us/step overhead.
    out3 = pl.pallas_call(
        kernel,
        out_shape=jax.ShapeDtypeStruct((B, C, N), jnp.float32),
        grid=(B,),
        in_specs=[
            pl.BlockSpec((1, C, N), lambda b: (b, 0, 0)),          # x
            pl.BlockSpec((3 * C, C), bcast),                       # fused Wqkv (bf16)
            pl.BlockSpec((3 * C, 1), bcast),                       # fused bias
            pl.BlockSpec((AUG, N), bcast),                         # log(kw) hi/lo rows
            pl.BlockSpec(memory_space=pltpu.MemorySpace.SMEM),     # gamma scalar
        ],
        out_specs=pl.BlockSpec((1, C, N), lambda b: (b, 0, 0)),    # lane-dense output
        compiler_params=pltpu.CompilerParams(
            dimension_semantics=("parallel",)),
        # TODO(synk): on v7x, switch the batch axis to pltpu.CORE_PARALLEL (or
        # pl.core_map over a 2-TC mesh) to guarantee both TensorCores are used.
    )(x3, w_qkv, b_qkv, kpad, g)

    return out3.reshape(B, C, H, W)


# ----------------------------------------------------------------------------- reference
def swa_reference(x, wq, bq, wk, bk, wv, bv, gamma, n_heads, window_size):
    """Literal JAX port of SWA.forward (reflect pad + unfold + full-length softmax)."""
    B, C, H, W = x.shape
    d = C // n_heads
    ws = window_size
    p = ws // 2
    hi = jax.lax.Precision.HIGHEST

    def conv1x1(w, b, t):
        return (jnp.einsum('oi,bihw->bohw', w.reshape(C, C), t, precision=hi)
                + b.reshape(1, C, 1, 1))

    xp = jnp.pad(x, ((0, 0), (0, 0), (p, p), (p, p)), mode='reflect')
    q = conv1x1(wq, bq, x).reshape(B, n_heads, d, H * W)
    kp = conv1x1(wk, bk, xp)
    vp = conv1x1(wv, bv, xp)
    Hp, Wp = H + 2 * p, W + 2 * p
    Hn, Wn = Hp - ws + 1, Wp - ws + 1

    def unfold(t):  # (B, C, Hp, Wp) -> (B, n_heads, d, ws*ws*Hn*Wn), PyTorch unfold order
        slabs = [t[:, :, i:i + Hn, j:j + Wn] for i in range(ws) for j in range(ws)]
        u = jnp.stack(slabs, axis=2)                       # (B, C, ws*ws, Hn, Wn)
        return u.reshape(B, n_heads, d, ws * ws * Hn * Wn)

    K = unfold(kp)
    V = unfold(vp)
    energy = jnp.einsum('bhdm,bhdl->bhml', q, K, precision=hi)
    attn = jax.nn.softmax(energy, axis=-1)
    outw = jnp.einsum('bhml,bhdl->bhdm', attn, V, precision=hi)
    return gamma * outw.reshape(B, C, H, W) + x


# ----------------------------------------------------------------------------- main
if __name__ == "__main__":
    B, C, H, W = 2, 16, 16, 16
    n_heads, window_size = 8, 8          # SWA defaults; C must be divisible by n_heads

    key = jax.random.PRNGKey(0)
    ks = jax.random.split(key, 7)
    bound = 1.0 / (C ** 0.5)             # PyTorch Conv2d default init range
    x = jax.random.normal(ks[0], (B, C, H, W), jnp.float32)
    wq = jax.random.uniform(ks[1], (C, C, 1, 1), jnp.float32, -bound, bound)
    wk = jax.random.uniform(ks[2], (C, C, 1, 1), jnp.float32, -bound, bound)
    wv = jax.random.uniform(ks[3], (C, C, 1, 1), jnp.float32, -bound, bound)
    bq = jax.random.uniform(ks[4], (C,), jnp.float32, -bound, bound)
    bk = jax.random.uniform(ks[5], (C,), jnp.float32, -bound, bound)
    bv = jax.random.uniform(ks[6], (C,), jnp.float32, -bound, bound)
    # gamma is a learnable scalar (initialised to 0 in the module); use a nonzero
    # value so the attention path is actually exercised.
    gamma = 1.0

    fwd = jax.jit(swa_forward, static_argnames=("n_heads", "window_size"))
    out = fwd(x, wq, bq, wk, bk, wv, bv, gamma,
              n_heads=n_heads, window_size=window_size)
    jax.block_until_ready(out)
    assert out.shape == (B, C, H, W)

    # Correctness check against the literal (unfold + full softmax) formulation.
    ref = jax.jit(functools.partial(swa_reference, n_heads=n_heads,
                                    window_size=window_size))(
        x, wq, bq, wk, bk, wv, bv, gamma)
    jax.block_until_ready(ref)
    err = float(jnp.max(jnp.abs(out - ref)))
    # Tolerance reflects bf16 MXU operands (per the perf review); a wrong
    # algorithm would show O(1) deviations.
    assert err < 5e-2, f"kernel deviates from reference: max abs err = {err}"
    print("KERNEL_OK")
</pallas_src>

<mosaic_0001>
module attributes {stable_mosaic.version = 11 : i64} {
  func.func @_swa_kernel(%arg0: i32, %arg1: memref<1x16x256xf32, #tpu.memory_space<vmem>>, %arg2: memref<48x16xbf16, #tpu.memory_space<vmem>>, %arg3: memref<48x1xf32, #tpu.memory_space<vmem>>, %arg4: memref<8x256xf32, #tpu.memory_space<vmem>>, %arg5: memref<1xf32, #tpu.memory_space<smem>>, %arg6: memref<1x16x256xf32, #tpu.memory_space<vmem>>) attributes {dimension_semantics = [#tpu.dimension_semantics<parallel>], iteration_bounds = array<i64: 2>, scalar_prefetch = 0 : i64, scratch_operands = 0 : i64, tpu.core_type = #tpu.core_type<tc>, window_params = [{transform_indices = @transform_0, window_bounds = array<i64: 1, 16, 256>}, {pipeline_mode = #tpu.pipeline_mode<synchronous>, transform_indices = @transform_1, window_bounds = array<i64: 48, 16>}, {pipeline_mode = #tpu.pipeline_mode<synchronous>, transform_indices = @transform_2, window_bounds = array<i64: 48, 1>}, {pipeline_mode = #tpu.pipeline_mode<synchronous>, transform_indices = @transform_3, window_bounds = array<i64: 8, 256>}, {transform_indices = @transform_4, window_bounds = array<i64: 1>}, {transform_indices = @transform_5, window_bounds = array<i64: 1, 16, 256>}]} {
    %c0 = arith.constant 0 : index
    %c0_0 = arith.constant 0 : index
    %c0_1 = arith.constant 0 : index
    %0 = vector.load %arg1[%c0, %c0_0, %c0_1] : memref<1x16x256xf32, #tpu.memory_space<vmem>>, vector<1x16x256xf32>
    %1 = vector.shape_cast %0 : vector<1x16x256xf32> to vector<16x256xf32>
    %c0_2 = arith.constant 0 : index
    %c0_3 = arith.constant 0 : index
    %2 = vector.load %arg2[%c0_2, %c0_3] : memref<48x16xbf16, #tpu.memory_space<vmem>>, vector<48x16xbf16>
    %3 = arith.truncf %1 : vector<16x256xf32> to vector<16x256xbf16>
    %cst = arith.constant dense<0.000000e+00> : vector<48x256xf32>
    %4 = tpu.matmul %2, %3, %cst {dimension_numbers = #tpu.dot_dimension_numbers<[1], [0], [0], [1], [0, 0, 1, 1], [], []>} : vector<48x16xbf16>, vector<16x256xbf16>, vector<48x256xf32> -> vector<48x256xf32>
    %c0_4 = arith.constant 0 : index
    %c0_5 = arith.constant 0 : index
    %5 = vector.load %arg3[%c0_4, %c0_5] : memref<48x1xf32, #tpu.memory_space<vmem>>, vector<48x1xf32>
    %6 = vector.broadcast %5 : vector<48x1xf32> to vector<48x256xf32>
    %7 = arith.addf %4, %6 : vector<48x256xf32>
    %8 = vector.extract_strided_slice %7 {offsets = [0, 0], sizes = [16, 256], strides = [1, 1]} : vector<48x256xf32> to vector<16x256xf32>
    %9 = vector.extract_strided_slice %7 {offsets = [16, 0], sizes = [16, 256], strides = [1, 1]} : vector<48x256xf32> to vector<16x256xf32>
    %10 = vector.extract_strided_slice %7 {offsets = [32, 0], sizes = [16, 256], strides = [1, 1]} : vector<48x256xf32> to vector<16x256xf32>
    %11 = tpu.iota {dimensions = array<i32: 0>} : vector<8x256xi32>
    %c2_i32 = arith.constant 2 : i32
    %12 = vector.broadcast %c2_i32 : i32 to vector<8x256xi32>
    %13 = arith.cmpi slt, %11, %12 : vector<8x256xi32>
    %14 = arith.extui %13 : vector<8x256xi1> to vector<8x256xi32>
    %15 = arith.sitofp %14 : vector<8x256xi32> to vector<8x256xf32>
    %16 = tpu.concatenate %8, %15 in 0 : vector<16x256xf32>, vector<8x256xf32> -> vector<24x256xf32>
    %c0_6 = arith.constant 0 : index
    %c0_7 = arith.constant 0 : index
    %17 = vector.load %arg4[%c0_6, %c0_7] : memref<8x256xf32, #tpu.memory_space<vmem>>, vector<8x256xf32>
    %18 = tpu.concatenate %9, %17 in 0 : vector<16x256xf32>, vector<8x256xf32> -> vector<24x256xf32>
    %19 = arith.truncf %16 : vector<24x256xf32> to vector<24x256xbf16>
    %20 = tpu.transpose %18, [1, 0] : vector<24x256xf32> -> vector<256x24xf32>
    %21 = arith.truncf %20 : vector<256x24xf32> to vector<256x24xbf16>
    %22 = arith.truncf %10 : vector<16x256xf32> to vector<16x256xbf16>
    %23 = tpu.iota {dimensions = array<i32: 0>} : vector<24x1xi32>
    %24 = tpu.iota {dimensions = array<i32: 0>} : vector<16x1xi32>
    %cst_8 = arith.constant 0.000000e+00 : f32
    %25 = vector.broadcast %cst_8 : f32 to vector<16x256xf32>
    %c0_i32 = arith.constant 0 : i32
    %c2_i32_9 = arith.constant 2 : i32
    %26 = arith.muli %c0_i32, %c2_i32_9 : i32
    %c2_i32_10 = arith.constant 2 : i32
    %27 = arith.addi %26, %c2_i32_10 : i32
    %28 = vector.broadcast %26 : i32 to vector<24x1xi32>
    %29 = arith.cmpi sge, %23, %28 : vector<24x1xi32>
    %30 = vector.broadcast %27 : i32 to vector<24x1xi32>
    %31 = arith.cmpi slt, %23, %30 : vector<24x1xi32>
    %32 = arith.andi %29, %31 : vector<24x1xi1>
    %c16_i32 = arith.constant 16 : i32
    %33 = vector.broadcast %c16_i32 : i32 to vector<24x1xi32>
    %34 = arith.cmpi sge, %23, %33 : vector<24x1xi32>
    %c18_i32 = arith.constant 18 : i32
    %35 = vector.broadcast %c18_i32 : i32 to vector<24x1xi32>
    %36 = arith.cmpi slt, %23, %35 : vector<24x1xi32>
    %37 = arith.andi %34, %36 : vector<24x1xi1>
    %38 = arith.ori %32, %37 : vector<24x1xi1>
    %39 = arith.extui %38 : vector<24x1xi1> to vector<24x1xi32>
    %40 = arith.sitofp %39 : vector<24x1xi32> to vector<24x1xf32>
    %41 = arith.truncf %40 : vector<24x1xf32> to vector<24x1xbf16>
    %42 = vector.broadcast %26 : i32 to vector<16x1xi32>
    %43 = arith.cmpi sge, %24, %42 : vector<16x1xi32>
    %44 = vector.broadcast %27 : i32 to vector<16x1xi32>
    %45 = arith.cmpi slt, %24, %44 : vector<16x1xi32>
    %46 = arith.andi %43, %45 : vector<16x1xi1>
    %47 = arith.extui %46 : vector<16x1xi1> to vector<16x1xi32>
    %48 = arith.sitofp %47 : vector<16x1xi32> to vector<16x1xf32>
    %49 = arith.truncf %48 : vector<16x1xf32> to vector<16x1xbf16>
    %50 = vector.broadcast %41 : vector<24x1xbf16> to vector<24x256xbf16>
    %51 = arith.mulf %19, %50 : vector<24x256xbf16>
    %cst_11 = arith.constant dense<0.000000e+00> : vector<256x256xf32>
    %52 = tpu.matmul %21, %51, %cst_11 {dimension_numbers = #tpu.dot_dimension_numbers<[1], [0], [0], [1], [0, 0, 1, 1], [], []>} : vector<256x24xbf16>, vector<24x256xbf16>, vector<256x256xf32> -> vector<256x256xf32>
    %cst_12 = arith.constant dense<0xFF800000> : vector<256xf32>
    %53 = vector.multi_reduction <maximumf>, %52, %cst_12 [0] : vector<256x256xf32> to vector<256xf32>
    %54 = vector.shape_cast %53 : vector<256xf32> to vector<1x256xf32>
    %55 = vector.broadcast %54 : vector<1x256xf32> to vector<256x256xf32>
    %56 = arith.subf %52, %55 : vector<256x256xf32>
    %57 = math.exp %56 : vector<256x256xf32>
    %cst_13 = arith.constant dense<0.000000e+00> : vector<256xf32>
    %58 = vector.multi_reduction <add>, %57, %cst_13 [0] : vector<256x256xf32> to vector<256xf32>
    %59 = vector.shape_cast %58 : vector<256xf32> to vector<1x256xf32>
    %60 = tpu.reciprocal %59 {approx = true} : vector<1x256xf32> -> vector<1x256xf32>
    %61 = vector.broadcast %49 : vector<16x1xbf16> to vector<16x256xbf16>
    %62 = arith.mulf %22, %61 : vector<16x256xbf16>
    %63 = arith.truncf %57 : vector<256x256xf32> to vector<256x256xbf16>
    %cst_14 = arith.constant dense<0.000000e+00> : vector<16x256xf32>
    %64 = tpu.matmul %62, %63, %cst_14 {dimension_numbers = #tpu.dot_dimension_numbers<[1], [0], [0], [1], [0, 0, 1, 1], [], []>} : vector<16x256xbf16>, vector<256x256xbf16>, vector<16x256xf32> -> vector<16x256xf32>
    %65 = vector.broadcast %60 : vector<1x256xf32> to vector<16x256xf32>
    %66 = arith.mulf %64, %65 : vector<16x256xf32>
    %67 = arith.addf %25, %66 : vector<16x256xf32>
    %c1_i32 = arith.constant 1 : i32
    %c2_i32_15 = arith.constant 2 : i32
    %68 = arith.muli %c1_i32, %c2_i32_15 : i32
    %c2_i32_16 = arith.constant 2 : i32
    %69 = arith.addi %68, %c2_i32_16 : i32
    %70 = vector.broadcast %68 : i32 to vector<24x1xi32>
    %71 = arith.cmpi sge, %23, %70 : vector<24x1xi32>
    %72 = vector.broadcast %69 : i32 to vector<24x1xi32>
    %73 = arith.cmpi slt, %23, %72 : vector<24x1xi32>
    %74 = arith.andi %71, %73 : vector<24x1xi1>
    %c16_i32_17 = arith.constant 16 : i32
    %75 = vector.broadcast %c16_i32_17 : i32 to vector<24x1xi32>
    %76 = arith.cmpi sge, %23, %75 : vector<24x1xi32>
    %c18_i32_18 = arith.constant 18 : i32
    %77 = vector.broadcast %c18_i32_18 : i32 to vector<24x1xi32>
    %78 = arith.cmpi slt, %23, %77 : vector<24x1xi32>
    %79 = arith.andi %76, %78 : vector<24x1xi1>
    %80 = arith.ori %74, %79 : vector<24x1xi1>
    %81 = arith.extui %80 : vector<24x1xi1> to vector<24x1xi32>
    %82 = arith.sitofp %81 : vector<24x1xi32> to vector<24x1xf32>
    %83 = arith.truncf %82 : vector<24x1xf32> to vector<24x1xbf16>
    %84 = vector.broadcast %68 : i32 to vector<16x1xi32>
    %85 = arith.cmpi sge, %24, %84 : vector<16x1xi32>
    %86 = vector.broadcast %69 : i32 to vector<16x1xi32>
    %87 = arith.cmpi slt, %24, %86 : vector<16x1xi32>
    %88 = arith.andi %85, %87 : vector<16x1xi1>
    %89 = arith.extui %88 : vector<16x1xi1> to vector<16x1xi32>
    %90 = arith.sitofp %89 : vector<16x1xi32> to vector<16x1xf32>
    %91 = arith.truncf %90 : vector<16x1xf32> to vector<16x1xbf16>
    %92 = vector.broadcast %83 : vector<24x1xbf16> to vector<24x256xbf16>
    %93 = arith.mulf %19, %92 : vector<24x256xbf16>
    %cst_19 = arith.constant dense<0.000000e+00> : vector<256x256xf32>
    %94 = tpu.matmul %21, %93, %cst_19 {dimension_numbers = #tpu.dot_dimension_numbers<[1], [0], [0], [1], [0, 0, 1, 1], [], []>} : vector<256x24xbf16>, vector<24x256xbf16>, vector<256x256xf32> -> vector<256x256xf32>
    %cst_20 = arith.constant dense<0xFF800000> : vector<256xf32>
    %95 = vector.multi_reduction <maximumf>, %94, %cst_20 [0] : vector<256x256xf32> to vector<256xf32>
    %96 = vector.shape_cast %95 : vector<256xf32> to vector<1x256xf32>
    %97 = vector.broadcast %96 : vector<1x256xf32> to vector<256x256xf32>
    %98 = arith.subf %94, %97 : vector<256x256xf32>
    %99 = math.exp %98 : vector<256x256xf32>
    %cst_21 = arith.constant dense<0.000000e+00> : vector<256xf32>
    %100 = vector.multi_reduction <add>, %99, %cst_21 [0] : vector<256x256xf32> to vector<256xf32>
    %101 = vector.shape_cast %100 : vector<256xf32> to vector<1x256xf32>
    %102 = tpu.reciprocal %101 {approx = true} : vector<1x256xf32> -> vector<1x256xf32>
    %103 = vector.broadcast %91 : vector<16x1xbf16> to vector<16x256xbf16>
    %104 = arith.mulf %22, %103 : vector<16x256xbf16>
    %105 = arith.truncf %99 : vector<256x256xf32> to vector<256x256xbf16>
    %cst_22 = arith.constant dense<0.000000e+00> : vector<16x256xf32>
    %106 = tpu.matmul %104, %105, %cst_22 {dimension_numbers = #tpu.dot_dimension_numbers<[1], [0], [0], [1], [0, 0, 1, 1], [], []>} : vector<16x256xbf16>, vector<256x256xbf16>, vector<16x256xf32> -> vector<16x256xf32>
    %107 = vector.broadcast %102 : vector<1x256xf32> to vector<16x256xf32>
    %108 = arith.mulf %106, %107 : vector<16x256xf32>
    %109 = arith.addf %67, %108 : vector<16x256xf32>
    %c2_i32_23 = arith.constant 2 : i32
    %c2_i32_24 = arith.constant 2 : i32
    %110 = arith.muli %c2_i32_23, %c2_i32_24 : i32
    %c2_i32_25 = arith.constant 2 : i32
    %111 = arith.addi %110, %c2_i32_25 : i32
    %112 = vector.broadcast %110 : i32 to vector<24x1xi32>
    %113 = arith.cmpi sge, %23, %112 : vector<24x1xi32>
    %114 = vector.broadcast %111 : i32 to vector<24x1xi32>
    %115 = arith.cmpi slt, %23, %114 : vector<24x1xi32>
    %116 = arith.andi %113, %115 : vector<24x1xi1>
    %c16_i32_26 = arith.constant 16 : i32
    %117 = vector.broadcast %c16_i32_26 : i32 to vector<24x1xi32>
    %118 = arith.cmpi sge, %23, %117 : vector<24x1xi32>
    %c18_i32_27 = arith.constant 18 : i32
    %119 = vector.broadcast %c18_i32_27 : i32 to vector<24x1xi32>
    %120 = arith.cmpi slt, %23, %119 : vector<24x1xi32>
    %121 = arith.andi %118, %120 : vector<24x1xi1>
    %122 = arith.ori %116, %121 : vector<24x1xi1>
    %123 = arith.extui %122 : vector<24x1xi1> to vector<24x1xi32>
    %124 = arith.sitofp %123 : vector<24x1xi32> to vector<24x1xf32>
    %125 = arith.truncf %124 : vector<24x1xf32> to vector<24x1xbf16>
    %126 = vector.broadcast %110 : i32 to vector<16x1xi32>
    %127 = arith.cmpi sge, %24, %126 : vector<16x1xi32>
    %128 = vector.broadcast %111 : i32 to vector<16x1xi32>
    %129 = arith.cmpi slt, %24, %128 : vector<16x1xi32>
    %130 = arith.andi %127, %129 : vector<16x1xi1>
    %131 = arith.extui %130 : vector<16x1xi1> to vector<16x1xi32>
    %132 = arith.sitofp %131 : vector<16x1xi32> to vector<16x1xf32>
    %133 = arith.truncf %132 : vector<16x1xf32> to vector<16x1xbf16>
    %134 = vector.broadcast %125 : vector<24x1xbf16> to vector<24x256xbf16>
    %135 = arith.mulf %19, %134 : vector<24x256xbf16>
    %cst_28 = arith.constant dense<0.000000e+00> : vector<256x256xf32>
    %136 = tpu.matmul %21, %135, %cst_28 {dimension_numbers = #tpu.dot_dimension_numbers<[1], [0], [0], [1], [0, 0, 1, 1], [], []>} : vector<256x24xbf16>, vector<24x256xbf16>, vector<256x256xf32> -> vector<256x256xf32>
    %cst_29 = arith.constant dense<0xFF800000> : vector<256xf32>
    %137 = vector.multi_reduction <maximumf>, %136, %cst_29 [0] : vector<256x256xf32> to vector<256xf32>
    %138 = vector.shape_cast %137 : vector<256xf32> to vector<1x256xf32>
    %139 = vector.broadcast %138 : vector<1x256xf32> to vector<256x256xf32>
    %140 = arith.subf %136, %139 : vector<256x256xf32>
    %141 = math.exp %140 : vector<256x256xf32>
    %cst_30 = arith.constant dense<0.000000e+00> : vector<256xf32>
    %142 = vector.multi_reduction <add>, %141, %cst_30 [0] : vector<256x256xf32> to vector<256xf32>
    %143 = vector.shape_cast %142 : vector<256xf32> to vector<1x256xf32>
    %144 = tpu.reciprocal %143 {approx = true} : vector<1x256xf32> -> vector<1x256xf32>
    %145 = vector.broadcast %133 : vector<16x1xbf16> to vector<16x256xbf16>
    %146 = arith.mulf %22, %145 : vector<16x256xbf16>
    %147 = arith.truncf %141 : vector<256x256xf32> to vector<256x256xbf16>
    %cst_31 = arith.constant dense<0.000000e+00> : vector<16x256xf32>
    %148 = tpu.matmul %146, %147, %cst_31 {dimension_numbers = #tpu.dot_dimension_numbers<[1], [0], [0], [1], [0, 0, 1, 1], [], []>} : vector<16x256xbf16>, vector<256x256xbf16>, vector<16x256xf32> -> vector<16x256xf32>
    %149 = vector.broadcast %144 : vector<1x256xf32> to vector<16x256xf32>
    %150 = arith.mulf %148, %149 : vector<16x256xf32>
    %151 = arith.addf %109, %150 : vector<16x256xf32>
    %c3_i32 = arith.constant 3 : i32
    %c2_i32_32 = arith.constant 2 : i32
    %152 = arith.muli %c3_i32, %c2_i32_32 : i32
    %c2_i32_33 = arith.constant 2 : i32
    %153 = arith.addi %152, %c2_i32_33 : i32
    %154 = vector.broadcast %152 : i32 to vector<24x1xi32>
    %155 = arith.cmpi sge, %23, %154 : vector<24x1xi32>
    %156 = vector.broadcast %153 : i32 to vector<24x1xi32>
    %157 = arith.cmpi slt, %23, %156 : vector<24x1xi32>
    %158 = arith.andi %155, %157 : vector<24x1xi1>
    %c16_i32_34 = arith.constant 16 : i32
    %159 = vector.broadcast %c16_i32_34 : i32 to vector<24x1xi32>
    %160 = arith.cmpi sge, %23, %159 : vector<24x1xi32>
    %c18_i32_35 = arith.constant 18 : i32
    %161 = vector.broadcast %c18_i32_35 : i32 to vector<24x1xi32>
    %162 = arith.cmpi slt, %23, %161 : vector<24x1xi32>
    %163 = arith.andi %160, %162 : vector<24x1xi1>
    %164 = arith.ori %158, %163 : vector<24x1xi1>
    %165 = arith.extui %164 : vector<24x1xi1> to vector<24x1xi32>
    %166 = arith.sitofp %165 : vector<24x1xi32> to vector<24x1xf32>
    %167 = arith.truncf %166 : vector<24x1xf32> to vector<24x1xbf16>
    %168 = vector.broadcast %152 : i32 to vector<16x1xi32>
    %169 = arith.cmpi sge, %24, %168 : vector<16x1xi32>
    %170 = vector.broadcast %153 : i32 to vector<16x1xi32>
    %171 = arith.cmpi slt, %24, %170 : vector<16x1xi32>
    %172 = arith.andi %169, %171 : vector<16x1xi1>
    %173 = arith.extui %172 : vector<16x1xi1> to vector<16x1xi32>
    %174 = arith.sitofp %173 : vector<16x1xi32> to vector<16x1xf32>
    %175 = arith.truncf %174 : vector<16x1xf32> to vector<16x1xbf16>
    %176 = vector.broadcast %167 : vector<24x1xbf16> to vector<24x256xbf16>
    %177 = arith.mulf %19, %176 : vector<24x256xbf16>
    %cst_36 = arith.constant dense<0.000000e+00> : vector<256x256xf32>
    %178 = tpu.matmul %21, %177, %cst_36 {dimension_numbers = #tpu.dot_dimension_numbers<[1], [0], [0], [1], [0, 0, 1, 1], [], []>} : vector<256x24xbf16>, vector<24x256xbf16>, vector<256x256xf32> -> vector<256x256xf32>
    %cst_37 = arith.constant dense<0xFF800000> : vector<256xf32>
    %179 = vector.multi_reduction <maximumf>, %178, %cst_37 [0] : vector<256x256xf32> to vector<256xf32>
    %180 = vector.shape_cast %179 : vector<256xf32> to vector<1x256xf32>
    %181 = vector.broadcast %180 : vector<1x256xf32> to vector<256x256xf32>
    %182 = arith.subf %178, %181 : vector<256x256xf32>
    %183 = math.exp %182 : vector<256x256xf32>
    %cst_38 = arith.constant dense<0.000000e+00> : vector<256xf32>
    %184 = vector.multi_reduction <add>, %183, %cst_38 [0] : vector<256x256xf32> to vector<256xf32>
    %185 = vector.shape_cast %184 : vector<256xf32> to vector<1x256xf32>
    %186 = tpu.reciprocal %185 {approx = true} : vector<1x256xf32> -> vector<1x256xf32>
    %187 = vector.broadcast %175 : vector<16x1xbf16> to vector<16x256xbf16>
    %188 = arith.mulf %22, %187 : vector<16x256xbf16>
    %189 = arith.truncf %183 : vector<256x256xf32> to vector<256x256xbf16>
    %cst_39 = arith.constant dense<0.000000e+00> : vector<16x256xf32>
    %190 = tpu.matmul %188, %189, %cst_39 {dimension_numbers = #tpu.dot_dimension_numbers<[1], [0], [0], [1], [0, 0, 1, 1], [], []>} : vector<16x256xbf16>, vector<256x256xbf16>, vector<16x256xf32> -> vector<16x256xf32>
    %191 = vector.broadcast %186 : vector<1x256xf32> to vector<16x256xf32>
    %192 = arith.mulf %190, %191 : vector<16x256xf32>
    %193 = arith.addf %151, %192 : vector<16x256xf32>
    %c4_i32 = arith.constant 4 : i32
    %c2_i32_40 = arith.constant 2 : i32
    %194 = arith.muli %c4_i32, %c2_i32_40 : i32
    %c2_i32_41 = arith.constant 2 : i32
    %195 = arith.addi %194, %c2_i32_41 : i32
    %196 = vector.broadcast %194 : i32 to vector<24x1xi32>
    %197 = arith.cmpi sge, %23, %196 : vector<24x1xi32>
    %198 = vector.broadcast %195 : i32 to vector<24x1xi32>
    %199 = arith.cmpi slt, %23, %198 : vector<24x1xi32>
    %200 = arith.andi %197, %199 : vector<24x1xi1>
    %c16_i32_42 = arith.constant 16 : i32
    %201 = vector.broadcast %c16_i32_42 : i32 to vector<24x1xi32>
    %202 = arith.cmpi sge, %23, %201 : vector<24x1xi32>
    %c18_i32_43 = arith.constant 18 : i32
    %203 = vector.broadcast %c18_i32_43 : i32 to vector<24x1xi32>
    %204 = arith.cmpi slt, %23, %203 : vector<24x1xi32>
    %205 = arith.andi %202, %204 : vector<24x1xi1>
    %206 = arith.ori %200, %205 : vector<24x1xi1>
    %207 = arith.extui %206 : vector<24x1xi1> to vector<24x1xi32>
    %208 = arith.sitofp %207 : vector<24x1xi32> to vector<24x1xf32>
    %209 = arith.truncf %208 : vector<24x1xf32> to vector<24x1xbf16>
    %210 = vector.broadcast %194 : i32 to vector<16x1xi32>
    %211 = arith.cmpi sge, %24, %210 : vector<16x1xi32>
    %212 = vector.broadcast %195 : i32 to vector<16x1xi32>
    %213 = arith.cmpi slt, %24, %212 : vector<16x1xi32>
    %214 = arith.andi %211, %213 : vector<16x1xi1>
    %215 = arith.extui %214 : vector<16x1xi1> to vector<16x1xi32>
    %216 = arith.sitofp %215 : vector<16x1xi32> to vector<16x1xf32>
    %217 = arith.truncf %216 : vector<16x1xf32> to vector<16x1xbf16>
    %218 = vector.broadcast %209 : vector<24x1xbf16> to vector<24x256xbf16>
    %219 = arith.mulf %19, %218 : vector<24x256xbf16>
    %cst_44 = arith.constant dense<0.000000e+00> : vector<256x256xf32>
    %220 = tpu.matmul %21, %219, %cst_44 {dimension_numbers = #tpu.dot_dimension_numbers<[1], [0], [0], [1], [0, 0, 1, 1], [], []>} : vector<256x24xbf16>, vector<24x256xbf16>, vector<256x256xf32> -> vector<256x256xf32>
    %cst_45 = arith.constant dense<0xFF800000> : vector<256xf32>
    %221 = vector.multi_reduction <maximumf>, %220, %cst_45 [0] : vector<256x256xf32> to vector<256xf32>
    %222 = vector.shape_cast %221 : vector<256xf32> to vector<1x256xf32>
    %223 = vector.broadcast %222 : vector<1x256xf32> to vector<256x256xf32>
    %224 = arith.subf %220, %223 : vector<256x256xf32>
    %225 = math.exp %224 : vector<256x256xf32>
    %cst_46 = arith.constant dense<0.000000e+00> : vector<256xf32>
    %226 = vector.multi_reduction <add>, %225, %cst_46 [0] : vector<256x256xf32> to vector<256xf32>
    %227 = vector.shape_cast %226 : vector<256xf32> to vector<1x256xf32>
    %228 = tpu.reciprocal %227 {approx = true} : vector<1x256xf32> -> vector<1x256xf32>
    %229 = vector.broadcast %217 : vector<16x1xbf16> to vector<16x256xbf16>
    %230 = arith.mulf %22, %229 : vector<16x256xbf16>
    %231 = arith.truncf %225 : vector<256x256xf32> to vector<256x256xbf16>
    %cst_47 = arith.constant dense<0.000000e+00> : vector<16x256xf32>
    %232 = tpu.matmul %230, %231, %cst_47 {dimension_numbers = #tpu.dot_dimension_numbers<[1], [0], [0], [1], [0, 0, 1, 1], [], []>} : vector<16x256xbf16>, vector<256x256xbf16>, vector<16x256xf32> -> vector<16x256xf32>
    %233 = vector.broadcast %228 : vector<1x256xf32> to vector<16x256xf32>
    %234 = arith.mulf %232, %233 : vector<16x256xf32>
    %235 = arith.addf %193, %234 : vector<16x256xf32>
    %c5_i32 = arith.constant 5 : i32
    %c2_i32_48 = arith.constant 2 : i32
    %236 = arith.muli %c5_i32, %c2_i32_48 : i32
    %c2_i32_49 = arith.constant 2 : i32
    %237 = arith.addi %236, %c2_i32_49 : i32
    %238 = vector.broadcast %236 : i32 to vector<24x1xi32>
    %239 = arith.cmpi sge, %23, %238 : vector<24x1xi32>
    %240 = vector.broadcast %237 : i32 to vector<24x1xi32>
    %241 = arith.cmpi slt, %23, %240 : vector<24x1xi32>
    %242 = arith.andi %239, %241 : vector<24x1xi1>
    %c16_i32_50 = arith.constant 16 : i32
    %243 = vector.broadcast %c16_i32_50 : i32 to vector<24x1xi32>
    %244 = arith.cmpi sge, %23, %243 : vector<24x1xi32>
    %c18_i32_51 = arith.constant 18 : i32
    %245 = vector.broadcast %c18_i32_51 : i32 to vector<24x1xi32>
    %246 = arith.cmpi slt, %23, %245 : vector<24x1xi32>
    %247 = arith.andi %244, %246 : vector<24x1xi1>
    %248 = arith.ori %242, %247 : vector<24x1xi1>
    %249 = arith.extui %248 : vector<24x1xi1> to vector<24x1xi32>
    %250 = arith.sitofp %249 : vector<24x1xi32> to vector<24x1xf32>
    %251 = arith.truncf %250 : vector<24x1xf32> to vector<24x1xbf16>
    %252 = vector.broadcast %236 : i32 to vector<16x1xi32>
    %253 = arith.cmpi sge, %24, %252 : vector<16x1xi32>
    %254 = vector.broadcast %237 : i32 to vector<16x1xi32>
    %255 = arith.cmpi slt, %24, %254 : vector<16x1xi32>
    %256 = arith.andi %253, %255 : vector<16x1xi1>
    %257 = arith.extui %256 : vector<16x1xi1> to vector<16x1xi32>
    %258 = arith.sitofp %257 : vector<16x1xi32> to vector<16x1xf32>
    %259 = arith.truncf %258 : vector<16x1xf32> to vector<16x1xbf16>
    %260 = vector.broadcast %251 : vector<24x1xbf16> to vector<24x256xbf16>
    %261 = arith.mulf %19, %260 : vector<24x256xbf16>
    %cst_52 = arith.constant dense<0.000000e+00> : vector<256x256xf32>
    %262 = tpu.matmul %21, %261, %cst_52 {dimension_numbers = #tpu.dot_dimension_numbers<[1], [0], [0], [1], [0, 0, 1, 1], [], []>} : vector<256x24xbf16>, vector<24x256xbf16>, vector<256x256xf32> -> vector<256x256xf32>
    %cst_53 = arith.constant dense<0xFF800000> : vector<256xf32>
    %263 = vector.multi_reduction <maximumf>, %262, %cst_53 [0] : vector<256x256xf32> to vector<256xf32>
    %264 = vector.shape_cast %263 : vector<256xf32> to vector<1x256xf32>
    %265 = vector.broadcast %264 : vector<1x256xf32> to vector<256x256xf32>
    %266 = arith.subf %262, %265 : vector<256x256xf32>
    %267 = math.exp %266 : vector<256x256xf32>
    %cst_54 = arith.constant dense<0.000000e+00> : vector<256xf32>
    %268 = vector.multi_reduction <add>, %267, %cst_54 [0] : vector<256x256xf32> to vector<256xf32>
    %269 = vector.shape_cast %268 : vector<256xf32> to vector<1x256xf32>
    %270 = tpu.reciprocal %269 {approx = true} : vector<1x256xf32> -> vector<1x256xf32>
    %271 = vector.broadcast %259 : vector<16x1xbf16> to vector<16x256xbf16>
    %272 = arith.mulf %22, %271 : vector<16x256xbf16>
    %273 = arith.truncf %267 : vector<256x256xf32> to vector<256x256xbf16>
    %cst_55 = arith.constant dense<0.000000e+00> : vector<16x256xf32>
    %274 = tpu.matmul %272, %273, %cst_55 {dimension_numbers = #tpu.dot_dimension_numbers<[1], [0], [0], [1], [0, 0, 1, 1], [], []>} : vector<16x256xbf16>, vector<256x256xbf16>, vector<16x256xf32> -> vector<16x256xf32>
    %275 = vector.broadcast %270 : vector<1x256xf32> to vector<16x256xf32>
    %276 = arith.mulf %274, %275 : vector<16x256xf32>
    %277 = arith.addf %235, %276 : vector<16x256xf32>
    %c6_i32 = arith.constant 6 : i32
    %c2_i32_56 = arith.constant 2 : i32
    %278 = arith.muli %c6_i32, %c2_i32_56 : i32
    %c2_i32_57 = arith.constant 2 : i32
    %279 = arith.addi %278, %c2_i32_57 : i32
    %280 = vector.broadcast %278 : i32 to vector<24x1xi32>
    %281 = arith.cmpi sge, %23, %280 : vector<24x1xi32>
    %282 = vector.broadcast %279 : i32 to vector<24x1xi32>
    %283 = arith.cmpi slt, %23, %282 : vector<24x1xi32>
    %284 = arith.andi %281, %283 : vector<24x1xi1>
    %c16_i32_58 = arith.constant 16 : i32
    %285 = vector.broadcast %c16_i32_58 : i32 to vector<24x1xi32>
    %286 = arith.cmpi sge, %23, %285 : vector<24x1xi32>
    %c18_i32_59 = arith.constant 18 : i32
    %287 = vector.broadcast %c18_i32_59 : i32 to vector<24x1xi32>
    %288 = arith.cmpi slt, %23, %287 : vector<24x1xi32>
    %289 = arith.andi %286, %288 : vector<24x1xi1>
    %290 = arith.ori %284, %289 : vector<24x1xi1>
    %291 = arith.extui %290 : vector<24x1xi1> to vector<24x1xi32>
    %292 = arith.sitofp %291 : vector<24x1xi32> to vector<24x1xf32>
    %293 = arith.truncf %292 : vector<24x1xf32> to vector<24x1xbf16>
    %294 = vector.broadcast %278 : i32 to vector<16x1xi32>
    %295 = arith.cmpi sge, %24, %294 : vector<16x1xi32>
    %296 = vector.broadcast %279 : i32 to vector<16x1xi32>
    %297 = arith.cmpi slt, %24, %296 : vector<16x1xi32>
    %298 = arith.andi %295, %297 : vector<16x1xi1>
    %299 = arith.extui %298 : vector<16x1xi1> to vector<16x1xi32>
    %300 = arith.sitofp %299 : vector<16x1xi32> to vector<16x1xf32>
    %301 = arith.truncf %300 : vector<16x1xf32> to vector<16x1xbf16>
    %302 = vector.broadcast %293 : vector<24x1xbf16> to vector<24x256xbf16>
    %303 = arith.mulf %19, %302 : vector<24x256xbf16>
    %cst_60 = arith.constant dense<0.000000e+00> : vector<256x256xf32>
    %304 = tpu.matmul %21, %303, %cst_60 {dimension_numbers = #tpu.dot_dimension_numbers<[1], [0], [0], [1], [0, 0, 1, 1], [], []>} : vector<256x24xbf16>, vector<24x256xbf16>, vector<256x256xf32> -> vector<256x256xf32>
    %cst_61 = arith.constant dense<0xFF800000> : vector<256xf32>
    %305 = vector.multi_reduction <maximumf>, %304, %cst_61 [0] : vector<256x256xf32> to vector<256xf32>
    %306 = vector.shape_cast %305 : vector<256xf32> to vector<1x256xf32>
    %307 = vector.broadcast %306 : vector<1x256xf32> to vector<256x256xf32>
    %308 = arith.subf %304, %307 : vector<256x256xf32>
    %309 = math.exp %308 : vector<256x256xf32>
    %cst_62 = arith.constant dense<0.000000e+00> : vector<256xf32>
    %310 = vector.multi_reduction <add>, %309, %cst_62 [0] : vector<256x256xf32> to vector<256xf32>
    %311 = vector.shape_cast %310 : vector<256xf32> to vector<1x256xf32>
    %312 = tpu.reciprocal %311 {approx = true} : vector<1x256xf32> -> vector<1x256xf32>
    %313 = vector.broadcast %301 : vector<16x1xbf16> to vector<16x256xbf16>
    %314 = arith.mulf %22, %313 : vector<16x256xbf16>
    %315 = arith.truncf %309 : vector<256x256xf32> to vector<256x256xbf16>
    %cst_63 = arith.constant dense<0.000000e+00> : vector<16x256xf32>
    %316 = tpu.matmul %314, %315, %cst_63 {dimension_numbers = #tpu.dot_dimension_numbers<[1], [0], [0], [1], [0, 0, 1, 1], [], []>} : vector<16x256xbf16>, vector<256x256xbf16>, vector<16x256xf32> -> vector<16x256xf32>
    %317 = vector.broadcast %312 : vector<1x256xf32> to vector<16x256xf32>
    %318 = arith.mulf %316, %317 : vector<16x256xf32>
    %319 = arith.addf %277, %318 : vector<16x256xf32>
    %c7_i32 = arith.constant 7 : i32
    %c2_i32_64 = arith.constant 2 : i32
    %320 = arith.muli %c7_i32, %c2_i32_64 : i32
    %c2_i32_65 = arith.constant 2 : i32
    %321 = arith.addi %320, %c2_i32_65 : i32
    %322 = vector.broadcast %320 : i32 to vector<24x1xi32>
    %323 = arith.cmpi sge, %23, %322 : vector<24x1xi32>
    %324 = vector.broadcast %321 : i32 to vector<24x1xi32>
    %325 = arith.cmpi slt, %23, %324 : vector<24x1xi32>
    %326 = arith.andi %323, %325 : vector<24x1xi1>
    %c16_i32_66 = arith.constant 16 : i32
    %327 = vector.broadcast %c16_i32_66 : i32 to vector<24x1xi32>
    %328 = arith.cmpi sge, %23, %327 : vector<24x1xi32>
    %c18_i32_67 = arith.constant 18 : i32
    %329 = vector.broadcast %c18_i32_67 : i32 to vector<24x1xi32>
    %330 = arith.cmpi slt, %23, %329 : vector<24x1xi32>
    %331 = arith.andi %328, %330 : vector<24x1xi1>
    %332 = arith.ori %326, %331 : vector<24x1xi1>
    %333 = arith.extui %332 : vector<24x1xi1> to vector<24x1xi32>
    %334 = arith.sitofp %333 : vector<24x1xi32> to vector<24x1xf32>
    %335 = arith.truncf %334 : vector<24x1xf32> to vector<24x1xbf16>
    %336 = vector.broadcast %320 : i32 to vector<16x1xi32>
    %337 = arith.cmpi sge, %24, %336 : vector<16x1xi32>
    %338 = vector.broadcast %321 : i32 to vector<16x1xi32>
    %339 = arith.cmpi slt, %24, %338 : vector<16x1xi32>
    %340 = arith.andi %337, %339 : vector<16x1xi1>
    %341 = arith.extui %340 : vector<16x1xi1> to vector<16x1xi32>
    %342 = arith.sitofp %341 : vector<16x1xi32> to vector<16x1xf32>
    %343 = arith.truncf %342 : vector<16x1xf32> to vector<16x1xbf16>
    %344 = vector.broadcast %335 : vector<24x1xbf16> to vector<24x256xbf16>
    %345 = arith.mulf %19, %344 : vector<24x256xbf16>
    %cst_68 = arith.constant dense<0.000000e+00> : vector<256x256xf32>
    %346 = tpu.matmul %21, %345, %cst_68 {dimension_numbers = #tpu.dot_dimension_numbers<[1], [0], [0], [1], [0, 0, 1, 1], [], []>} : vector<256x24xbf16>, vector<24x256xbf16>, vector<256x256xf32> -> vector<256x256xf32>
    %cst_69 = arith.constant dense<0xFF800000> : vector<256xf32>
    %347 = vector.multi_reduction <maximumf>, %346, %cst_69 [0] : vector<256x256xf32> to vector<256xf32>
    %348 = vector.shape_cast %347 : vector<256xf32> to vector<1x256xf32>
    %349 = vector.broadcast %348 : vector<1x256xf32> to vector<256x256xf32>
    %350 = arith.subf %346, %349 : vector<256x256xf32>
    %351 = math.exp %350 : vector<256x256xf32>
    %cst_70 = arith.constant dense<0.000000e+00> : vector<256xf32>
    %352 = vector.multi_reduction <add>, %351, %cst_70 [0] : vector<256x256xf32> to vector<256xf32>
    %353 = vector.shape_cast %352 : vector<256xf32> to vector<1x256xf32>
    %354 = tpu.reciprocal %353 {approx = true} : vector<1x256xf32> -> vector<1x256xf32>
    %355 = vector.broadcast %343 : vector<16x1xbf16> to vector<16x256xbf16>
    %356 = arith.mulf %22, %355 : vector<16x256xbf16>
    %357 = arith.truncf %351 : vector<256x256xf32> to vector<256x256xbf16>
    %cst_71 = arith.constant dense<0.000000e+00> : vector<16x256xf32>
    %358 = tpu.matmul %356, %357, %cst_71 {dimension_numbers = #tpu.dot_dimension_numbers<[1], [0], [0], [1], [0, 0, 1, 1], [], []>} : vector<16x256xbf16>, vector<256x256xbf16>, vector<16x256xf32> -> vector<16x256xf32>
    %359 = vector.broadcast %354 : vector<1x256xf32> to vector<16x256xf32>
    %360 = arith.mulf %358, %359 : vector<16x256xf32>
    %361 = arith.addf %319, %360 : vector<16x256xf32>
    %c8_i32 = arith.constant 8 : i32
    %c0_72 = arith.constant 0 : index
    %362 = memref.load %arg5[%c0_72] : memref<1xf32, #tpu.memory_space<smem>>
    %363 = vector.broadcast %362 : f32 to vector<16x256xf32>
    %364 = arith.mulf %363, %361 : vector<16x256xf32>
    %365 = arith.addf %364, %1 : vector<16x256xf32>
    %c0_73 = arith.constant 0 : index
    %c0_74 = arith.constant 0 : index
    %c0_75 = arith.constant 0 : index
    %366 = vector.load %arg6[%c0_73, %c0_74, %c0_75] : memref<1x16x256xf32, #tpu.memory_space<vmem>>, vector<1x16x256xf32>
    %367 = vector.shape_cast %366 : vector<1x16x256xf32> to vector<16x256xf32>
    %368 = vector.shape_cast %365 : vector<16x256xf32> to vector<1x16x256xf32>
    tpu.vector_store %arg6[%c0_73, %c0_74, %c0_75], %368 {strides = array<i32>} : memref<1x16x256xf32, #tpu.memory_space<vmem>>, vector<1x16x256xf32>,
    return
  }
  func.func @transform_0(%arg0: i32) -> (i32, i32, i32) {
    %c0_i32 = arith.constant 0 : i32
    %c0_i32_0 = arith.constant 0 : i32
    %c0_i32_1 = arith.constant 0 : i32
    return %arg0, %c0_i32, %c0_i32_0 : i32, i32, i32
  }
  func.func @transform_1(%arg0: i32) -> (i32, i32) {
    %c0_i32 = arith.constant 0 : i32
    %c0_i32_0 = arith.constant 0 : i32
    %c0_i32_1 = arith.constant 0 : i32
    return %c0_i32, %c0_i32_0 : i32, i32
  }
  func.func @transform_2(%arg0: i32) -> (i32, i32) {
    %c0_i32 = arith.constant 0 : i32
    %c0_i32_0 = arith.constant 0 : i32
    %c0_i32_1 = arith.constant 0 : i32
    return %c0_i32, %c0_i32_0 : i32, i32
  }
  func.func @transform_3(%arg0: i32) -> (i32, i32) {
    %c0_i32 = arith.constant 0 : i32
    %c0_i32_0 = arith.constant 0 : i32
    %c0_i32_1 = arith.constant 0 : i32
    return %c0_i32, %c0_i32_0 : i32, i32
  }
  func.func @transform_4(%arg0: i32) -> i32 {
    %c0_i32 = arith.constant 0 : i32
    %c0_i32_0 = arith.constant 0 : i32
    return %c0_i32 : i32
  }
  func.func @transform_5(%arg0: i32) -> (i32, i32, i32) {
    %c0_i32 = arith.constant 0 : i32
    %c0_i32_0 = arith.constant 0 : i32
    %c0_i32_1 = arith.constant 0 : i32
    return %arg0, %c0_i32, %c0_i32_0 : i32, i32, i32
  }
}

</mosaic_0001>

<llo_original>
// kernel: swa_forward.1
$region0: #{swa_forward.1}
  #allocation0 [shape = 'u32[]', space=smem, size = 0x4, offset = 0x4, fixed_abs, tag = 'smem constant byte address 0x4 - core index']
  #allocation1 [shape = 'u32[144,128]{1,0:T(1,128)}', space=vmem, size = 0x12000, scoped, tag = 'internal scratch']
  #allocation2 [shape = 'f32[1]{0:T(128)S(6)}', space=smem, size = 0x200, scoped, tag = 'scoped memory for swa_forward.1']
  %s0 = inlined_call_operand.vmem [shape: f32[2,16,256], index: 0, kind: input, shape index: {}]
  %s1 = inlined_call_operand.vmem [shape: bf16[48,16], index: 1, kind: input, shape index: {}]
  %s2 = inlined_call_operand.vmem [shape: f32[48,1], index: 2, kind: input, shape index: {}]
  %s3 = inlined_call_operand.vmem [shape: f32[8,256], index: 3, kind: input, shape index: {}]
  %s4 = inlined_call_operand.<no memory space> [shape: f32[1], index: 4, kind: input, shape index: {}]
  %s5 = inlined_call_operand.vmem [shape: f32[2,16,256], index: 5, kind: output, shape index: {}]
  %s6 = sld [smem:[#allocation0]]
  $region53: #{swa_forward.1} parent=0
    _
  %s8 = ssub.s32 1, %s6
  %s9 = scalar_select 0, %s8, %s6
  %10 = sst [smem:[#allocation2]] %s4
  loop: start=0, step=1, limit=4
  $region2: #{swa_forward.1} parent=0 // loop_pre_header
    _
  $region3: #{swa_forward.1} parent=0 // loop_header
    %s12 = sphi 0, %s16
    %p13 = scmp.ge.s32.totalorder %s12, 4
    %s22 = sphi 0, %s24
    %s25 = sphi 0, %s22
    %s26 = sphi 0, %s25
    %s42 = sphi 0, %s26
    %s46 = sphi 0, %s46
    %s48 = sphi 0, %s46
    %s49 = sphi 0, %s48
    %s63 = sphi 0, %s49
    %s67 = sphi 0, %s67
    %s69 = sphi 0, %s67
    %s70 = sphi 0, %s69
    %s84 = sphi 0, %s70
    %s88 = sphi 0, %s88
    %s90 = sphi 0, %s88
    %s91 = sphi 0, %s90
    %s105 = sphi 0, %s91
    %s109 = sphi 0, %s109
    %s111 = sphi 0, %s109
    %s112 = sphi 0, %s111
    %s126 = sphi 0, %s112
    %s132 = sphi 0, %s134
    %s135 = sphi 0, %s132
    %s136 = sphi 0, %s135
    %s152 = sphi 0, %s136
  $region4: #{swa_forward.1} parent=0 // loop_header_branch
    %15 = sbr.rel (%p13) target = $region8
  $region5: #{swa_forward.1} parent=0 // loop_body
    %s17 = ssub.s32 %s12, 1
    %s18 = ssub.s32 %s12, 2
    %s19 = sadd.s32 %s12, 1
    %s20 = ssub.s32 %s12, %s19
    %p21 = scmp.eq.s32.totalorder %s20, 0
    %s23 = sadd.s32 %s22, 1
    %s24 = scalar_select %p21, %s22, %s23
    %p27 = pneg %p21
    %p28 = scmp.eq.s32.totalorder %s12, 1
    %p29 = por %p27, %p28
    %p30 = scmp.ne.s32.totalorder %s22, %s25
    %p31 = scmp.eq.s32.totalorder %s12, 0
    %p32 = por %p30, %p31
    %p33 = scmp.ne.s32.totalorder %s22, %s25
    %p34 = scmp.eq.s32.totalorder %s17, 1
    %p35 = por %p33, %p34
    %p36 = scmp.ne.s32.totalorder %s25, %s26
    %p37 = scmp.eq.s32.totalorder %s17, 0
    %p38 = por %p36, %p37
    %p39 = scmp.ne.s32.totalorder %s25, %s26
    %p40 = scmp.eq.s32.totalorder %s18, 1
    %p41 = por %p39, %p40
    %p43 = scmp.ne.s32.totalorder %s26, %s42
    %p44 = scmp.eq.s32.totalorder %s18, 0
    %p45 = por %p43, %p44
    %s47 = sadd.s32 %s46, 1
    %p50 = scmp.eq.s32.totalorder %s12, 1
    %p51 = scmp.ne.s32.totalorder %s46, %s48
    %p52 = scmp.eq.s32.totalorder %s12, 0
    %p53 = por %p51, %p52
    %p54 = scmp.ne.s32.totalorder %s46, %s48
    %p55 = scmp.eq.s32.totalorder %s17, 1
    %p56 = por %p54, %p55
    %p57 = scmp.ne.s32.totalorder %s48, %s49
    %p58 = scmp.eq.s32.totalorder %s17, 0
    %p59 = por %p57, %p58
    %p60 = scmp.ne.s32.totalorder %s48, %s49
    %p61 = scmp.eq.s32.totalorder %s18, 1
    %p62 = por %p60, %p61
    %p64 = scmp.ne.s32.totalorder %s49, %s63
    %p65 = scmp.eq.s32.totalorder %s18, 0
    %p66 = por %p64, %p65
    %s68 = sadd.s32 %s67, 1
    %p71 = scmp.eq.s32.totalorder %s12, 1
    %p72 = scmp.ne.s32.totalorder %s67, %s69
    %p73 = scmp.eq.s32.totalorder %s12, 0
    %p74 = por %p72, %p73
    %p75 = scmp.ne.s32.totalorder %s67, %s69
    %p76 = scmp.eq.s32.totalorder %s17, 1
    %p77 = por %p75, %p76
    %p78 = scmp.ne.s32.totalorder %s69, %s70
    %p79 = scmp.eq.s32.totalorder %s17, 0
    %p80 = por %p78, %p79
    %p81 = scmp.ne.s32.totalorder %s69, %s70
    %p82 = scmp.eq.s32.totalorder %s18, 1
    %p83 = por %p81, %p82
    %p85 = scmp.ne.s32.totalorder %s70, %s84
    %p86 = scmp.eq.s32.totalorder %s18, 0
    %p87 = por %p85, %p86
    %s89 = sadd.s32 %s88, 1
    %p92 = scmp.eq.s32.totalorder %s12, 1
    %p93 = scmp.ne.s32.totalorder %s88, %s90
    %p94 = scmp.eq.s32.totalorder %s12, 0
    %p95 = por %p93, %p94
    %p96 = scmp.ne.s32.totalorder %s88, %s90
    %p97 = scmp.eq.s32.totalorder %s17, 1
    %p98 = por %p96, %p97
    %p99 = scmp.ne.s32.totalorder %s90, %s91
    %p100 = scmp.eq.s32.totalorder %s17, 0
    %p101 = por %p99, %p100
    %p102 = scmp.ne.s32.totalorder %s90, %s91
    %p103 = scmp.eq.s32.totalorder %s18, 1
    %p104 = por %p102, %p103
    %p106 = scmp.ne.s32.totalorder %s91, %s105
    %p107 = scmp.eq.s32.totalorder %s18, 0
    %p108 = por %p106, %p107
    %s110 = sadd.s32 %s109, 1
    %p113 = scmp.eq.s32.totalorder %s12, 1
    %p114 = scmp.ne.s32.totalorder %s109, %s111
    %p115 = scmp.eq.s32.totalorder %s12, 0
    %p116 = por %p114, %p115
    %p117 = scmp.ne.s32.totalorder %s109, %s111
    %p118 = scmp.eq.s32.totalorder %s17, 1
    %p119 = por %p117, %p118
    %p120 = scmp.ne.s32.totalorder %s111, %s112
    %p121 = scmp.eq.s32.totalorder %s17, 0
    %p122 = por %p120, %p121
    %p123 = scmp.ne.s32.totalorder %s111, %s112
    %p124 = scmp.eq.s32.totalorder %s18, 1
    %p125 = por %p123, %p124
    %p127 = scmp.ne.s32.totalorder %s112, %s126
    %p128 = scmp.eq.s32.totalorder %s18, 0
    %p129 = por %p127, %p128
    %s130 = ssub.s32 %s12, %s19
    %p131 = scmp.eq.s32.totalorder %s130, 0
    %s133 = sadd.s32 %s132, 1
    %s134 = scalar_select %p131, %s132, %s133
    %p137 = pneg %p131
    %p138 = scmp.eq.s32.totalorder %s12, 1
    %p139 = por %p137, %p138
    %p140 = scmp.ne.s32.totalorder %s132, %s135
    %p141 = scmp.eq.s32.totalorder %s12, 0
    %p142 = por %p140, %p141
    %p143 = scmp.ne.s32.totalorder %s132, %s135
    %p144 = scmp.eq.s32.totalorder %s17, 1
    %p145 = por %p143, %p144
    %p146 = scmp.ne.s32.totalorder %s135, %s136
    %p147 = scmp.eq.s32.totalorder %s17, 0
    %p148 = por %p146, %p147
    %p149 = scmp.ne.s32.totalorder %s135, %s136
    %p150 = scmp.eq.s32.totalorder %s18, 1
    %p151 = por %p149, %p150
    %p153 = scmp.ne.s32.totalorder %s136, %s152
    %p154 = scmp.eq.s32.totalorder %s18, 0
    %p155 = por %p153, %p154
    %p156 = scmp.le.s32.totalorder 1, %s12
    %p157 = scmp.lt.s32.totalorder %s12, 3
    %p158 = pnand %p156, %p157
    %p159 = pneg %p158
    // Predicated region
    $region9: #{swa_forward.1} parent=5 // pred_check
      _
    $region10: #{swa_forward.1} parent=5 // pred_check_branch
      %161 = sbr.rel (%p158) target = $region12
    $region11: #{swa_forward.1} parent=5 // pred_region
      %s162 = ssub.s32 %s12, 1
      // Predicated region
      $region13: #{swa_forward.1} parent=11 // pred_check
        %p163 = pneg %p59
      $region14: #{swa_forward.1} parent=11 // pred_check_branch
        %165 = sbr.rel (%p163) target = $region16
      $region15: #{swa_forward.1} parent=11 // pred_region
        _
      $region16: #{swa_forward.1} parent=11 // pred_fallthru
        _
      // Predicated region
      $region17: #{swa_forward.1} parent=11 // pred_check
        %p166 = pneg %p80
      $region18: #{swa_forward.1} parent=11 // pred_check_branch
        %168 = sbr.rel (%p166) target = $region20
      $region19: #{swa_forward.1} parent=11 // pred_region
        _
      $region20: #{swa_forward.1} parent=11 // pred_fallthru
        _
      // Predicated region
      $region21: #{swa_forward.1} parent=11 // pred_check
        %p169 = pneg %p101
      $region22: #{swa_forward.1} parent=11 // pred_check_branch
        %171 = sbr.rel (%p169) target = $region24
      $region23: #{swa_forward.1} parent=11 // pred_region
        _
      $region24: #{swa_forward.1} parent=11 // pred_fallthru
        _
      // Predicated region
      $region25: #{swa_forward.1} parent=11 // pred_check
        %p172 = pneg %p122
      $region26: #{swa_forward.1} parent=11 // pred_check_branch
        %174 = sbr.rel (%p172) target = $region28
      $region27: #{swa_forward.1} parent=11 // pred_region
        _
      $region28: #{swa_forward.1} parent=11 // pred_fallthru
        _
    $region12: #{swa_forward.1} parent=5 // pred_fallthru
      _
    %p175 = scmp.lt.s32.totalorder %s12, 2
    // Predicated region
    $region29: #{swa_forward.1} parent=5 // pred_check
      %p176 = pneg %p175
    $region30: #{swa_forward.1} parent=5 // pred_check_branch
      %178 = sbr.rel (%p176) target = $region32
    $region31: #{swa_forward.1} parent=5 // pred_region
      // Predicated region
      $region33: #{swa_forward.1} parent=31 // pred_check
        %p179 = pneg %p32
      $region34: #{swa_forward.1} parent=31 // pred_check_branch
        %181 = sbr.rel (%p179) target = $region36
      $region35: #{swa_forward.1} parent=31 // pred_region
        %p182 = scmp.lt.s32.totalorder %s12, 1
        %s183 = scalar_select %p182, %s12, 1
        %s184 = smul.addr %s183, 4
        %s185 = smul.addr %s184, 8
        %s186 = scalar_lea.vmem %s0, %s185
      $region36: #{swa_forward.1} parent=31 // pred_fallthru
        _
    $region32: #{swa_forward.1} parent=5 // pred_fallthru
      _
    %p187 = scmp.le.s32.totalorder 1, %s12
    %p188 = scmp.lt.s32.totalorder %s12, 3
    %p189 = pnand %p187, %p188
    %p190 = pneg %p189
    // Predicated region
    $region37: #{swa_forward.1} parent=5 // pred_check
      _
    $region38: #{swa_forward.1} parent=5 // pred_check_branch
      %192 = sbr.rel (%p189) target = $region40
    $region39: #{swa_forward.1} parent=5 // pred_region
      %s193 = ssub.s32 %s12, 1
      %p194 = scmp.lt.s32.totalorder %s17, 1
      %s195 = scalar_select %p194, %s17, 1
      %s196 = smul.addr %s195, 4
      %s197 = smul.addr %s196, 8
      %s198 = scalar_lea.vmem %s0, %s197
      %p199 = pneg %p38
      %p200 = pneg %p35
      %p201 = pneg %p59
      %p202 = pneg %p56
      %p203 = pneg %p80
      %p204 = pneg %p77
      %p205 = pneg %p101
      %p206 = pneg %p98
      %p207 = pneg %p122
      %p208 = pneg %p119
      %p209 = pneg %p148
      %p210 = pneg %p145
      %p211 = scmp.lt.s32.totalorder %s17, 1
      %s212 = scalar_select %p211, %s17, 1
      %s213 = smul.addr %s212, 4
      %s214 = smul.addr %s213, 8
      %s215 = scalar_lea.vmem %s5, %s214
      %p216 = scmp.lt.s32.totalorder %s17, 1
      %s217 = scalar_select %p216, %s17, 1
      %s218 = smul.addr %s217, 4
      %s219 = smul.addr %s218, 8
      %s220 = scalar_lea.vmem %s0, %s219
      %p221 = scmp.lt.s32.totalorder %s17, 1
      %s222 = scalar_select %p221, %s17, 1
      %s223 = smul.addr %s222, 4
      %s224 = smul.addr %s223, 8
      %s225 = scalar_lea.vmem %s5, %s224
      %v227 = vld [vmem:[%s220] sm:$0xff]
      %v228 = vld [vmem:[%s220 + $0x8] sm:$0xff]
      %v229 = vld [vmem:[%s220 + $0x10] sm:$0xff]
      %v230 = vld [vmem:[%s220 + $0x18] sm:$0xff]
      %v231 = vld [vmem:[%s1] sm:$0xf]
      %v232 = vld [vmem:[%s1 + $0x4] sm:$0xf]
      %v233 = vld [vmem:[%s1 + $0x8] sm:$0xf]
      %v234 = vld [vmem:[%s1 + $0xc] sm:$0xf]
      %v235 = vld [vmem:[%s1 + $0x10] sm:$0xf]
      %v236 = vld [vmem:[%s1 + $0x14] sm:$0xf]
      %v237 = vpack.c.bf16 %v229, %v227
      %v238 = vpack.c.bf16 %v230, %v228
      %v239 = vld [vmem:[%s2] sm:$0xff]
      %v240 = vld [vmem:[%s2 + $0x8] sm:$0xff]
      %v241 = vld [vmem:[%s2 + $0x10] sm:$0xff]
      %v242 = vld [vmem:[%s2 + $0x18] sm:$0xff]
      %v243 = vld [vmem:[%s2 + $0x20] sm:$0xff]
      %v244 = vld [vmem:[%s2 + $0x28] sm:$0xff]
      %246 = vset.pattern.permute.xlu0 0
      %247 = vperm.xlu0 %246, %v239
      %v248 = vpop.permute.xlu0 %247
      %251 = vset.pattern.permute.xlu0 0
      %252 = vperm.xlu0 %251, %v240
      %v253 = vpop.permute.xlu0 %252
      %256 = vset.pattern.permute.xlu0 0
      %257 = vperm.xlu0 %256, %v241
      %v258 = vpop.permute.xlu0 %257
      %261 = vset.pattern.permute.xlu0 0
      %262 = vperm.xlu0 %261, %v242
      %v263 = vpop.permute.xlu0 %262
      %266 = vset.pattern.permute.xlu0 0
      %267 = vperm.xlu0 %266, %v243
      %v268 = vpop.permute.xlu0 %267
      %271 = vset.pattern.permute.xlu0 0
      %272 = vperm.xlu0 %271, %v244
      %v273 = vpop.permute.xlu0 %272
      %v281 = vunpack.c.l.b16 %v231
      %v282 = vunpack.c.l.b16 %v232
      %v283 = vunpack.c.l.b16 %v233
      %v284 = vunpack.c.l.b16 %v234
      %v285 = vunpack.c.l.b16 %v235
      %v286 = vunpack.c.l.b16 %v236
      %v287 = vpack.c.b16 %v282, %v281
      %v288 = vpack.c.b16 %v284, %v283
      %v289 = vpack.c.b16 %v286, %v285
      %vm290 = vcmask 130048
      %v292 = vsel %vm290, %v287, 0
      %v295 = vsel %vm290, %v288, 0
      %v298 = vsel %vm290, %v289, 0
      %300 = vmatprep.subr.bf16.mxu0 %v238
      %301 = vmatpush1.bf16.msra.mxu0 %v237
      %302 = vmatprep.subr.bf16.mxu0 0
      %303 = vmatpush1.bf16.msra.mxu0 0
      %304 = vmatprep.subr.bf16.mxu0 0
      %305 = vmatpush1.bf16.msra.mxu0 0
      %306 = vmatprep.subr.bf16.mxu0 0
      %307 = vmatpush1.bf16.msra.mxu0 0
      %308 = vmatprep.subr.bf16.mxu0 0
      %309 = vmatpush1.bf16.msra.mxu0 0
      %310 = vmatprep.subr.bf16.mxu0 0
      %311 = vmatpush1.bf16.msra.mxu0 0
      %312 = vmatprep.subr.bf16.mxu0 0
      %313 = vmatpush1.bf16.msra.mxu0 0
      %314 = vmatprep.subr.bf16.mxu0 0
      %315 = vmatpush1.bf16.msra.mxu0 0
      %316 = vmatprep.subr.bf16.mxu0 0
      %317 = vmatpush1.bf16.msra.mxu0 0
      %318 = vmatprep.subr.bf16.mxu0 0
      %319 = vmatpush1.bf16.msra.mxu0 0
      %320 = vmatprep.subr.bf16.mxu0 0
      %321 = vmatpush1.bf16.msra.mxu0 0
      %322 = vmatprep.subr.bf16.mxu0 0
      %323 = vmatpush1.bf16.msra.mxu0 0
      %324 = vmatprep.subr.bf16.mxu0 0
      %325 = vmatpush1.bf16.msra.mxu0 0
      %326 = vmatprep.subr.bf16.mxu0 0
      %327 = vmatpush1.bf16.msra.mxu0 0
      %328 = vmatprep.subr.bf16.mxu0 0
      %329 = vmatpush1.bf16.msra.mxu0 0
      %330 = vmatprep.subr.bf16.mxu0 0
      %331 = vmatpush1.bf16.msra.mxu0 0
      %332 = vmatprep.mubr.bf16.mxu0 0
      %333 = vmatmul.mubr.bf16.gmra.mrb[0].mxu0 %v292
      %v334 = vpop.f32.mrb[0].mxu0
      %v335 = vadd.f32 %v248, %v334
      %v336 = vpop.f32.mrb[0].mxu0
      %v337 = vadd.f32 %v248, %v336
      %v338 = vpop.f32.mrb[0].mxu0
      %v339 = vadd.f32 %v253, %v338
      %v340 = vpop.f32.mrb[0].mxu0
      %v341 = vadd.f32 %v253, %v340
      %342 = vmatprep.mubr.bf16.mxu0 0
      %343 = vmatmul.mubr.bf16.gmra.mrb[0].mxu0 %v295
      %v344 = vpop.f32.mrb[0].mxu0
      %v345 = vadd.f32 %v258, %v344
      %v346 = vpop.f32.mrb[0].mxu0
      %v347 = vadd.f32 %v258, %v346
      %v348 = vpop.f32.mrb[0].mxu0
      %v349 = vadd.f32 %v263, %v348
      %v350 = vpop.f32.mrb[0].mxu0
      %v351 = vadd.f32 %v263, %v350
      %352 = vmatprep.mubr.bf16.mxu0 0
      %353 = vmatmul.mubr.bf16.gmra.mrb[0].mxu0 %v298
      %v354 = vpop.f32.mrb[0].mxu0
      %v355 = vadd.f32 %v268, %v354
      %v356 = vpop.f32.mrb[0].mxu0
      %v357 = vadd.f32 %v268, %v356
      %v358 = vpop.f32.mrb[0].mxu0
      %v359 = vadd.f32 %v273, %v358
      %v360 = vpop.f32.mrb[0].mxu0
      %v361 = vadd.f32 %v273, %v360
      %362 = vdwg.mxu0
      %v363 = vlaneseq
      %v364 = vshrl.u32 %v363, 7
      %vm365 = vcmp.lt.s32.totalorder %v364, 2
      %v366 = vsel %vm365, 1, 0
      %v367 = vcvt.s32.f32 %v366
      %v368 = vld [vmem:[%s3] sm:$0xff]
      %v369 = vld [vmem:[%s3 + $0x8] sm:$0xff]
      %v370 = vpack.c.bf16 %v339, %v335
      %v371 = vpack.c.bf16 %v341, %v337
      %v372 = vpack.c.bf16 %v367, %v367
      %373 = vxpose.xlu0.b32.start [1/16] %v345, 128
      %374 = vxpose.xlu0.b32.cont [2/16] %v349, 128
      %375 = vxpose.xlu0.b32.cont [3/16] %v368, 128
      %376 = vxpose.xlu0.b32.cont [4/16] 0.0, 128
      %377 = vxpose.xlu0.b32.cont [5/16] 0.0, 128
      %378 = vxpose.xlu0.b32.cont [6/16] 0.0, 128
      %379 = vxpose.xlu0.b32.cont [7/16] 0.0, 128
      %380 = vxpose.xlu0.b32.cont [8/16] 0.0, 128
      %381 = vxpose.xlu0.b32.cont [9/16] 0.0, 128
      %382 = vxpose.xlu0.b32.cont [10/16] 0.0, 128
      %383 = vxpose.xlu0.b32.cont [11/16] 0.0, 128
      %384 = vxpose.xlu0.b32.cont [12/16] 0.0, 128
      %385 = vxpose.xlu0.b32.cont [13/16] 0.0, 128
      %386 = vxpose.xlu0.b32.cont [14/16] 0.0, 128
      %387 = vxpose.xlu0.b32.cont [15/16] 0.0, 128
      %388 = vxpose.xlu0.b32.end [16/16] 0.0, 128
      %v389 = vpop.trf.xlu0
      %v390 = vpop.trf.xlu0
      %v391 = vpop.trf.xlu0
      %v392 = vpop.trf.xlu0
      %v393 = vpop.trf.xlu0
      %v394 = vpop.trf.xlu0
      %v395 = vpop.trf.xlu0
      %v396 = vpop.trf.xlu0
      %v397 = vpop.trf.xlu0
      %v398 = vpop.trf.xlu0
      %v399 = vpop.trf.xlu0
      %v400 = vpop.trf.xlu0
      %v401 = vpop.trf.xlu0
      %v402 = vpop.trf.xlu0
      %v403 = vpop.trf.xlu0
      %v404 = vpop.trf.xlu0
      %405 = vxpose.xlu0.b32.start [1/16] %v347, 128
      %406 = vxpose.xlu0.b32.cont [2/16] %v351, 128
      %407 = vxpose.xlu0.b32.cont [3/16] %v369, 128
      %408 = vxpose.xlu0.b32.cont [4/16] 0.0, 128
      %409 = vxpose.xlu0.b32.cont [5/16] 0.0, 128
      %410 = vxpose.xlu0.b32.cont [6/16] 0.0, 128
      %411 = vxpose.xlu0.b32.cont [7/16] 0.0, 128
      %412 = vxpose.xlu0.b32.cont [8/16] 0.0, 128
      %413 = vxpose.xlu0.b32.cont [9/16] 0.0, 128
      %414 = vxpose.xlu0.b32.cont [10/16] 0.0, 128
      %415 = vxpose.xlu0.b32.cont [11/16] 0.0, 128
      %416 = vxpose.xlu0.b32.cont [12/16] 0.0, 128
      %417 = vxpose.xlu0.b32.cont [13/16] 0.0, 128
      %418 = vxpose.xlu0.b32.cont [14/16] 0.0, 128
      %419 = vxpose.xlu0.b32.cont [15/16] 0.0, 128
      %420 = vxpose.xlu0.b32.end [16/16] 0.0, 128
      %v421 = vpop.trf.xlu0
      %v422 = vpop.trf.xlu0
      %v423 = vpop.trf.xlu0
      %v424 = vpop.trf.xlu0
      %v425 = vpop.trf.xlu0
      %v426 = vpop.trf.xlu0
      %v427 = vpop.trf.xlu0
      %v428 = vpop.trf.xlu0
      %v429 = vpop.trf.xlu0
      %v430 = vpop.trf.xlu0
      %v431 = vpop.trf.xlu0
      %v432 = vpop.trf.xlu0
      %v433 = vpop.trf.xlu0
      %v434 = vpop.trf.xlu0
      %v435 = vpop.trf.xlu0
      %v436 = vpop.trf.xlu0
      %v437 = vpack.c.bf16 %v390, %v389
      %v438 = vpack.c.bf16 %v392, %v391
      %v439 = vpack.c.bf16 %v394, %v393
      %v440 = vpack.c.bf16 %v396, %v395
      %v441 = vpack.c.bf16 %v398, %v397
      %v442 = vpack.c.bf16 %v400, %v399
      %v443 = vpack.c.bf16 %v402, %v401
      %v444 = vpack.c.bf16 %v404, %v403
      %v445 = vpack.c.bf16 %v422, %v421
      %v446 = vpack.c.bf16 %v424, %v423
      %v447 = vpack.c.bf16 %v426, %v425
      %v448 = vpack.c.bf16 %v428, %v427
      %v449 = vpack.c.bf16 %v430, %v429
      %v450 = vpack.c.bf16 %v432, %v431
      %v451 = vpack.c.bf16 %v434, %v433
      %v452 = vpack.c.bf16 %v436, %v435
      %v453 = vpack.c.bf16 %v359, %v355
      %v454 = vpack.c.bf16 %v361, %v357
      %v455 = vadd.s32 %v364, 8
      %v456 = vadd.s32 %v364, 16
      %vm457 = vcmp.ge.s32.totalorder %v364, 0
      %vm458 = vcmp.ge.s32.totalorder %v455, 0
      %vm459 = vcmp.ge.s32.totalorder %v456, 0
      %vm460 = vcmp.lt.s32.totalorder %v455, 2
      %vm461 = vcmp.lt.s32.totalorder %v456, 2
      %vm462 = vmand %vm457, %vm365
      %vm463 = vmand %vm458, %vm460
      %vm464 = vmand %vm459, %vm461
      %vm465 = vcmp.ge.s32.totalorder %v364, 16
      %vm466 = vcmp.ge.s32.totalorder %v455, 16
      %vm467 = vcmp.ge.s32.totalorder %v456, 16
      %vm468 = vcmp.lt.s32.totalorder %v364, 18
      %vm469 = vcmp.lt.s32.totalorder %v455, 18
      %vm470 = vcmp.lt.s32.totalorder %v456, 18
      %vm471 = vmand %vm465, %vm468
      %vm472 = vmand %vm466, %vm469
      %vm473 = vmand %vm467, %vm470
      %vm474 = vmor %vm462, %vm471
      %vm475 = vmor %vm463, %vm472
      %vm476 = vmor %vm464, %vm473
      %v477 = vsel %vm474, 1, 0
      %v478 = vsel %vm475, 1, 0
      %v479 = vsel %vm476, 1, 0
      %v480 = vcvt.s32.f32 %v477
      %v481 = vcvt.s32.f32 %v478
      %v482 = vcvt.s32.f32 %v479
      %v483 = vpack.c.bf16 %v481, %v480
      %v484 = vpack.c.bf16 %v482, %v482
      %v485 = vsel %vm462, 1, 0
      %v486 = vsel %vm463, 1, 0
      %v487 = vcvt.s32.f32 %v485
      %v488 = vcvt.s32.f32 %v486
      %v489 = vpack.c.bf16 %v488, %v487
      %v490 = vmul.bf16 %v370, %v483
      %v491 = vmul.bf16 %v371, %v483
      %v492 = vmul.bf16 %v372, %v484
      %vm493 = vcmask 195584
      %v495 = vsel %vm493, %v437, 0
      %v498 = vsel %vm493, %v438, 0
      %v501 = vsel %vm493, %v439, 0
      %v504 = vsel %vm493, %v440, 0
      %v507 = vsel %vm493, %v441, 0
      %v510 = vsel %vm493, %v442, 0
      %v513 = vsel %vm493, %v443, 0
      %v516 = vsel %vm493, %v444, 0
      %v519 = vsel %vm493, %v445, 0
      %v522 = vsel %vm493, %v446, 0
      %v525 = vsel %vm493, %v447, 0
      %v528 = vsel %vm493, %v448, 0
      %v531 = vsel %vm493, %v449, 0
      %v534 = vsel %vm493, %v450, 0
      %v537 = vsel %vm493, %v451, 0
      %v540 = vsel %vm493, %v452, 0
      %vm542 = vcmask 1043456
      %v544 = vsel %vm542, %v492, 0
      %546 = vmatprep.subr.bf16.mxu0 %v491
      %547 = vmatpush1.bf16.msra.mxu0 %v490
      %548 = vmatprep.subr.bf16.mxu0 %v544
      %549 = vmatpush1.bf16.msra.mxu0 %v544
      %550 = vmatprep.subr.bf16.mxu0 0
      %551 = vmatpush1.bf16.msra.mxu0 0
      %552 = vmatprep.subr.bf16.mxu0 0
      %553 = vmatpush1.bf16.msra.mxu0 0
      %554 = vmatprep.subr.bf16.mxu0 0
      %555 = vmatpush1.bf16.msra.mxu0 0
      %556 = vmatprep.subr.bf16.mxu0 0
      %557 = vmatpush1.bf16.msra.mxu0 0
      %558 = vmatprep.subr.bf16.mxu0 0
      %559 = vmatpush1.bf16.msra.mxu0 0
      %560 = vmatprep.subr.bf16.mxu0 0
      %561 = vmatpush1.bf16.msra.mxu0 0
      %562 = vmatprep.subr.bf16.mxu0 0
      %563 = vmatpush1.bf16.msra.mxu0 0
      %564 = vmatprep.subr.bf16.mxu0 0
      %565 = vmatpush1.bf16.msra.mxu0 0
      %566 = vmatprep.subr.bf16.mxu0 0
      %567 = vmatpush1.bf16.msra.mxu0 0
      %568 = vmatprep.subr.bf16.mxu0 0
      %569 = vmatpush1.bf16.msra.mxu0 0
      %570 = vmatprep.subr.bf16.mxu0 0
      %571 = vmatpush1.bf16.msra.mxu0 0
      %572 = vmatprep.subr.bf16.mxu0 0
      %573 = vmatpush1.bf16.msra.mxu0 0
      %574 = vmatprep.subr.bf16.mxu0 0
      %575 = vmatpush1.bf16.msra.mxu0 0
      %576 = vmatprep.subr.bf16.mxu0 0
      %577 = vmatpush1.bf16.msra.mxu0 0
      %578 = vmatprep.mubr.bf16.mxu0 0
      %579 = vmatmul.mubr.bf16.gmra.mrb[0].mxu0 %v495
      %v580 = vpop.f32.mrb[0].mxu0
      %v581 = vadd.f32 0.0, %v580
      %v582 = vpop.f32.mrb[0].mxu0
      %v583 = vadd.f32 0.0, %v582
      %v584 = vpop.f32.mrb[0].mxu0
      %v585 = vadd.f32 0.0, %v584
      %v586 = vpop.f32.mrb[0].mxu0
      %v587 = vadd.f32 0.0, %v586
      %588 = vmatprep.mubr.bf16.mxu0 0
      %589 = vmatmul.mubr.bf16.gmra.mrb[0].mxu0 %v498
      %v590 = vpop.f32.mrb[0].mxu0
      %v591 = vadd.f32 0.0, %v590
      %v592 = vpop.f32.mrb[0].mxu0
      %v593 = vadd.f32 0.0, %v592
      %v594 = vpop.f32.mrb[0].mxu0
      %v595 = vadd.f32 0.0, %v594
      %v596 = vpop.f32.mrb[0].mxu0
      %v597 = vadd.f32 0.0, %v596
      %598 = vmatprep.mubr.bf16.mxu0 0
      %599 = vmatmul.mubr.bf16.gmra.mrb[0].mxu0 %v501
      %v600 = vpop.f32.mrb[0].mxu0
      %v601 = vadd.f32 0.0, %v600
      %v602 = vpop.f32.mrb[0].mxu0
      %v603 = vadd.f32 0.0, %v602
      %v604 = vpop.f32.mrb[0].mxu0
      %v605 = vadd.f32 0.0, %v604
      %v606 = vpop.f32.mrb[0].mxu0
      %v607 = vadd.f32 0.0, %v606
      %608 = vmatprep.mubr.bf16.mxu0 0
      %609 = vmatmul.mubr.bf16.gmra.mrb[0].mxu0 %v504
      %v610 = vpop.f32.mrb[0].mxu0
      %v611 = vadd.f32 0.0, %v610
      %v612 = vpop.f32.mrb[0].mxu0
      %v613 = vadd.f32 0.0, %v612
      %v614 = vpop.f32.mrb[0].mxu0
      %v615 = vadd.f32 0.0, %v614
      %v616 = vpop.f32.mrb[0].mxu0
      %v617 = vadd.f32 0.0, %v616
      %618 = vmatprep.mubr.bf16.mxu0 0
      %619 = vmatmul.mubr.bf16.gmra.mrb[0].mxu0 %v507
      %v620 = vpop.f32.mrb[0].mxu0
      %v621 = vadd.f32 0.0, %v620
      %v622 = vpop.f32.mrb[0].mxu0
      %v623 = vadd.f32 0.0, %v622
      %v624 = vpop.f32.mrb[0].mxu0
      %v625 = vadd.f32 0.0, %v624
      %v626 = vpop.f32.mrb[0].mxu0
      %v627 = vadd.f32 0.0, %v626
      %628 = vmatprep.mubr.bf16.mxu0 0
      %629 = vmatmul.mubr.bf16.gmra.mrb[0].mxu0 %v510
      %v630 = vpop.f32.mrb[0].mxu0
      %v631 = vadd.f32 0.0, %v630
      %v632 = vpop.f32.mrb[0].mxu0
      %v633 = vadd.f32 0.0, %v632
      %v634 = vpop.f32.mrb[0].mxu0
      %v635 = vadd.f32 0.0, %v634
      %v636 = vpop.f32.mrb[0].mxu0
      %v637 = vadd.f32 0.0, %v636
      %638 = vmatprep.mubr.bf16.mxu0 0
      %639 = vmatmul.mubr.bf16.gmra.mrb[0].mxu0 %v513
      %v640 = vpop.f32.mrb[0].mxu0
      %v641 = vadd.f32 0.0, %v640
      %v642 = vpop.f32.mrb[0].mxu0
      %v643 = vadd.f32 0.0, %v642
      %v644 = vpop.f32.mrb[0].mxu0
      %v645 = vadd.f32 0.0, %v644
      %v646 = vpop.f32.mrb[0].mxu0
      %v647 = vadd.f32 0.0, %v646
      %648 = vmatprep.mubr.bf16.mxu0 0
      %649 = vmatmul.mubr.bf16.gmra.mrb[0].mxu0 %v516
      %v650 = vpop.f32.mrb[0].mxu0
      %v651 = vadd.f32 0.0, %v650
      %v652 = vpop.f32.mrb[0].mxu0
      %v653 = vadd.f32 0.0, %v652
      %v654 = vpop.f32.mrb[0].mxu0
      %v655 = vadd.f32 0.0, %v654
      %v656 = vpop.f32.mrb[0].mxu0
      %v657 = vadd.f32 0.0, %v656
      %658 = vmatprep.mubr.bf16.mxu0 0
      %659 = vmatmul.mubr.bf16.gmra.mrb[0].mxu0 %v519
      %v660 = vpop.f32.mrb[0].mxu0
      %v661 = vadd.f32 0.0, %v660
      %v662 = vpop.f32.mrb[0].mxu0
      %v663 = vadd.f32 0.0, %v662
      %v664 = vpop.f32.mrb[0].mxu0
      %v665 = vadd.f32 0.0, %v664
      %v666 = vpop.f32.mrb[0].mxu0
      %v667 = vadd.f32 0.0, %v666
      %668 = vmatprep.mubr.bf16.mxu0 0
      %669 = vmatmul.mubr.bf16.gmra.mrb[0].mxu0 %v522
      %v670 = vpop.f32.mrb[0].mxu0
      %v671 = vadd.f32 0.0, %v670
      %v672 = vpop.f32.mrb[0].mxu0
      %v673 = vadd.f32 0.0, %v672
      %v674 = vpop.f32.mrb[0].mxu0
      %v675 = vadd.f32 0.0, %v674
      %v676 = vpop.f32.mrb[0].mxu0
      %v677 = vadd.f32 0.0, %v676
      %678 = vmatprep.mubr.bf16.mxu0 0
      %679 = vmatmul.mubr.bf16.gmra.mrb[0].mxu0 %v525
      %v680 = vpop.f32.mrb[0].mxu0
      %v681 = vadd.f32 0.0, %v680
      %v682 = vpop.f32.mrb[0].mxu0
      %v683 = vadd.f32 0.0, %v682
      %v684 = vpop.f32.mrb[0].mxu0
      %v685 = vadd.f32 0.0, %v684
      %v686 = vpop.f32.mrb[0].mxu0
      %v687 = vadd.f32 0.0, %v686
      %688 = vmatprep.mubr.bf16.mxu0 0
      %689 = vmatmul.mubr.bf16.gmra.mrb[0].mxu0 %v528
      %v690 = vpop.f32.mrb[0].mxu0
      %v691 = vadd.f32 0.0, %v690
      %v692 = vpop.f32.mrb[0].mxu0
      %v693 = vadd.f32 0.0, %v692
      %v694 = vpop.f32.mrb[0].mxu0
      %v695 = vadd.f32 0.0, %v694
      %v696 = vpop.f32.mrb[0].mxu0
      %v697 = vadd.f32 0.0, %v696
      %698 = vmatprep.mubr.bf16.mxu0 0
      %699 = vmatmul.mubr.bf16.gmra.mrb[0].mxu0 %v531
      %v700 = vpop.f32.mrb[0].mxu0
      %v701 = vadd.f32 0.0, %v700
      %v702 = vpop.f32.mrb[0].mxu0
      %v703 = vadd.f32 0.0, %v702
      %v704 = vpop.f32.mrb[0].mxu0
      %v705 = vadd.f32 0.0, %v704
      %v706 = vpop.f32.mrb[0].mxu0
      %v707 = vadd.f32 0.0, %v706
      %708 = vmatprep.mubr.bf16.mxu0 0
      %709 = vmatmul.mubr.bf16.gmra.mrb[0].mxu0 %v534
      %v710 = vpop.f32.mrb[0].mxu0
      %v711 = vadd.f32 0.0, %v710
      %v712 = vpop.f32.mrb[0].mxu0
      %v713 = vadd.f32 0.0, %v712
      %v714 = vpop.f32.mrb[0].mxu0
      %v715 = vadd.f32 0.0, %v714
      %v716 = vpop.f32.mrb[0].mxu0
      %v717 = vadd.f32 0.0, %v716
      %718 = vmatprep.mubr.bf16.mxu0 0
      %719 = vmatmul.mubr.bf16.gmra.mrb[0].mxu0 %v537
      %v720 = vpop.f32.mrb[0].mxu0
      %v721 = vadd.f32 0.0, %v720
      %v722 = vpop.f32.mrb[0].mxu0
      %v723 = vadd.f32 0.0, %v722
      %v724 = vpop.f32.mrb[0].mxu0
      %v725 = vadd.f32 0.0, %v724
      %v726 = vpop.f32.mrb[0].mxu0
      %v727 = vadd.f32 0.0, %v726
      %728 = vmatprep.mubr.bf16.mxu0 0
      %729 = vmatmul.mubr.bf16.gmra.mrb[0].mxu0 %v540
      %v730 = vpop.f32.mrb[0].mxu0
      %v731 = vadd.f32 0.0, %v730
      %v732 = vpop.f32.mrb[0].mxu0
      %v733 = vadd.f32 0.0, %v732
      %v734 = vpop.f32.mrb[0].mxu0
      %v735 = vadd.f32 0.0, %v734
      %v736 = vpop.f32.mrb[0].mxu0
      %v737 = vadd.f32 0.0, %v736
      %738 = vdwg.mxu0
      %v739 = vmax.f32 %v581, %v591
      %v740 = vmax.f32 %v585, %v595
      %v741 = vmax.f32 %v739, %v601
      %v742 = vmax.f32 %v740, %v605
      %v743 = vmax.f32 %v741, %v611
      %v744 = vmax.f32 %v742, %v615
      %v745 = vmax.f32 %v743, %v621
      %v746 = vmax.f32 %v744, %v625
      %v747 = vmax.f32 %v745, %v631
      %v748 = vmax.f32 %v746, %v635
      %v749 = vmax.f32 %v747, %v641
      %v750 = vmax.f32 %v748, %v645
      %v751 = vmax.f32 %v749, %v651
      %v752 = vmax.f32 %v750, %v655
      %v753 = vmax.f32 %v751, %v661
      %v754 = vmax.f32 %v752, %v665
      %v755 = vmax.f32 %v753, %v671
      %v756 = vmax.f32 %v754, %v675
      %v757 = vmax.f32 %v755, %v681
      %v758 = vmax.f32 %v756, %v685
      %v759 = vmax.f32 %v757, %v691
      %v760 = vmax.f32 %v758, %v695
      %v761 = vmax.f32 %v759, %v701
      %v762 = vmax.f32 %v760, %v705
      %v763 = vmax.f32 %v761, %v711
      %v764 = vmax.f32 %v762, %v715
      %v765 = vmax.f32 %v763, %v721
      %v766 = vmax.f32 %v764, %v725
      %v767 = vmax.f32 %v765, %v731
      %v768 = vmax.f32 %v766, %v735
      %v769 = vmax.f32 %v767, %v768
      %v770 = vrot.slane %v769, 4
      %v771 = vmax.f32 %v769, %v770
      %v772 = vrot.slane %v771, 2
      %v773 = vmax.f32 %v771, %v772
      %v774 = vrot.slane %v773, 1
      %v775 = vmax.f32 %v773, %v774
      %v776 = vmax.f32 %v583, %v593
      %v777 = vmax.f32 %v587, %v597
      %v778 = vmax.f32 %v776, %v603
      %v779 = vmax.f32 %v777, %v607
      %v780 = vmax.f32 %v778, %v613
      %v781 = vmax.f32 %v779, %v617
      %v782 = vmax.f32 %v780, %v623
      %v783 = vmax.f32 %v781, %v627
      %v784 = vmax.f32 %v782, %v633
      %v785 = vmax.f32 %v783, %v637
      %v786 = vmax.f32 %v784, %v643
      %v787 = vmax.f32 %v785, %v647
      %v788 = vmax.f32 %v786, %v653
      %v789 = vmax.f32 %v787, %v657
      %v790 = vmax.f32 %v788, %v663
      %v791 = vmax.f32 %v789, %v667
      %v792 = vmax.f32 %v790, %v673
      %v793 = vmax.f32 %v791, %v677
      %v794 = vmax.f32 %v792, %v683
      %v795 = vmax.f32 %v793, %v687
      %v796 = vmax.f32 %v794, %v693
      %v797 = vmax.f32 %v795, %v697
      %v798 = vmax.f32 %v796, %v703
      %v799 = vmax.f32 %v797, %v707
      %v800 = vmax.f32 %v798, %v713
      %v801 = vmax.f32 %v799, %v717
      %v802 = vmax.f32 %v800, %v723
      %v803 = vmax.f32 %v801, %v727
      %v804 = vmax.f32 %v802, %v733
      %v805 = vmax.f32 %v803, %v737
      %v806 = vmax.f32 %v804, %v805
      %v807 = vrot.slane %v806, 4
      %v808 = vmax.f32 %v806, %v807
      %v809 = vrot.slane %v808, 2
      %v810 = vmax.f32 %v808, %v809
      %v811 = vrot.slane %v810, 1
      %v812 = vmax.f32 %v810, %v811
      %v813 = vsub.f32 %v581, %v775
      %v814 = vsub.f32 %v583, %v812
      %v815 = vsub.f32 %v585, %v775
      %v816 = vsub.f32 %v587, %v812
      %v817 = vsub.f32 %v591, %v775
      %v818 = vsub.f32 %v593, %v812
      %v819 = vsub.f32 %v595, %v775
      %v820 = vsub.f32 %v597, %v812
      %v821 = vsub.f32 %v601, %v775
      %v822 = vsub.f32 %v603, %v812
      %v823 = vsub.f32 %v605, %v775
      %v824 = vsub.f32 %v607, %v812
      %v825 = vsub.f32 %v611, %v775
      %v826 = vsub.f32 %v613, %v812
      %v827 = vsub.f32 %v615, %v775
      %v828 = vsub.f32 %v617, %v812
      %v829 = vsub.f32 %v621, %v775
      %v830 = vsub.f32 %v623, %v812
      %v831 = vsub.f32 %v625, %v775
      %v832 = vsub.f32 %v627, %v812
      %v833 = vsub.f32 %v631, %v775
      %v834 = vsub.f32 %v633, %v812
      %v835 = vsub.f32 %v635, %v775
      %v836 = vsub.f32 %v637, %v812
      %v837 = vsub.f32 %v641, %v775
      %v838 = vsub.f32 %v643, %v812
      %v839 = vsub.f32 %v645, %v775
      %v840 = vsub.f32 %v647, %v812
      %v841 = vsub.f32 %v651, %v775
      %v842 = vsub.f32 %v653, %v812
      %v843 = vsub.f32 %v655, %v775
      %v844 = vsub.f32 %v657, %v812
      %v845 = vsub.f32 %v661, %v775
      %v846 = vsub.f32 %v663, %v812
      %v847 = vsub.f32 %v665, %v775
      %v848 = vsub.f32 %v667, %v812
      %v849 = vsub.f32 %v671, %v775
      %v850 = vsub.f32 %v673, %v812
      %v851 = vsub.f32 %v675, %v775
      %v852 = vsub.f32 %v677, %v812
      %v853 = vsub.f32 %v681, %v775
      %v854 = vsub.f32 %v683, %v812
      %v855 = vsub.f32 %v685, %v775
      %v856 = vsub.f32 %v687, %v812
      %v857 = vsub.f32 %v691, %v775
      %v858 = vsub.f32 %v693, %v812
      %v859 = vsub.f32 %v695, %v775
      %v860 = vsub.f32 %v697, %v812
      %v861 = vsub.f32 %v701, %v775
      %v862 = vsub.f32 %v703, %v812
      %v863 = vsub.f32 %v705, %v775
      %v864 = vsub.f32 %v707, %v812
      %v865 = vsub.f32 %v711, %v775
      %v866 = vsub.f32 %v713, %v812
      %v867 = vsub.f32 %v715, %v775
      %v868 = vsub.f32 %v717, %v812
      %v869 = vsub.f32 %v721, %v775
      %v870 = vsub.f32 %v723, %v812
      %v871 = vsub.f32 %v725, %v775
      %v872 = vsub.f32 %v727, %v812
      %v873 = vsub.f32 %v731, %v775
      %v874 = vsub.f32 %v733, %v812
      %v875 = vsub.f32 %v735, %v775
      %v876 = vsub.f32 %v737, %v812
      %v877 = vmul.f32 %v813, 1.442695
      %v878 = vpow.pop %v877
      %v879 = vmul.f32 %v814, 1.442695
      %v880 = vpow.pop %v879
      %v881 = vmul.f32 %v815, 1.442695
      %v882 = vpow.pop %v881
      %v883 = vmul.f32 %v816, 1.442695
      %v884 = vpow.pop %v883
      %v885 = vmul.f32 %v817, 1.442695
      %v886 = vpow.pop %v885
      %v887 = vmul.f32 %v818, 1.442695
      %v888 = vpow.pop %v887
      %v889 = vmul.f32 %v819, 1.442695
      %v890 = vpow.pop %v889
      %v891 = vmul.f32 %v820, 1.442695
      %v892 = vpow.pop %v891
      %v893 = vmul.f32 %v821, 1.442695
      %v894 = vpow.pop %v893
      %v895 = vmul.f32 %v822, 1.442695
      %v896 = vpow.pop %v895
      %v897 = vmul.f32 %v823, 1.442695
      %v898 = vpow.pop %v897
      %v899 = vmul.f32 %v824, 1.442695
      %v900 = vpow.pop %v899
      %v901 = vmul.f32 %v825, 1.442695
      %v902 = vpow.pop %v901
      %v903 = vmul.f32 %v826, 1.442695
      %v904 = vpow.pop %v903
      %v905 = vmul.f32 %v827, 1.442695
      %v906 = vpow.pop %v905
      %v907 = vmul.f32 %v828, 1.442695
      %v908 = vpow.pop %v907
      %v909 = vmul.f32 %v829, 1.442695
      %v910 = vpow.pop %v909
      %v911 = vmul.f32 %v830, 1.442695
      %v912 = vpow.pop %v911
      %v913 = vmul.f32 %v831, 1.442695
      %v914 = vpow.pop %v913
      %v915 = vmul.f32 %v832, 1.442695
      %v916 = vpow.pop %v915
      %v917 = vmul.f32 %v833, 1.442695
      %v918 = vpow.pop %v917
      %v919 = vmul.f32 %v834, 1.442695
      %v920 = vpow.pop %v919
      %v921 = vmul.f32 %v835, 1.442695
      %v922 = vpow.pop %v921
      %v923 = vmul.f32 %v836, 1.442695
      %v924 = vpow.pop %v923
      %v925 = vmul.f32 %v837, 1.442695
      %v926 = vpow.pop %v925
      %v927 = vmul.f32 %v838, 1.442695
      %v928 = vpow.pop %v927
      %v929 = vmul.f32 %v839, 1.442695
      %v930 = vpow.pop %v929
      %v931 = vmul.f32 %v840, 1.442695
      %v932 = vpow.pop %v931
      %v933 = vmul.f32 %v841, 1.442695
      %v934 = vpow.pop %v933
      %v935 = vmul.f32 %v842, 1.442695
      %v936 = vpow.pop %v935
      %v937 = vmul.f32 %v843, 1.442695
      %v938 = vpow.pop %v937
      %v939 = vmul.f32 %v844, 1.442695
      %v940 = vpow.pop %v939
      %v941 = vmul.f32 %v845, 1.442695
      %v942 = vpow.pop %v941
      %v943 = vmul.f32 %v846, 1.442695
      %v944 = vpow.pop %v943
      %v945 = vmul.f32 %v847, 1.442695
      %v946 = vpow.pop %v945
      %v947 = vmul.f32 %v848, 1.442695
      %v948 = vpow.pop %v947
      %v949 = vmul.f32 %v849, 1.442695
      %v950 = vpow.pop %v949
      %v951 = vmul.f32 %v850, 1.442695
      %v952 = vpow.pop %v951
      %v953 = vmul.f32 %v851, 1.442695
      %v954 = vpow.pop %v953
      %v955 = vmul.f32 %v852, 1.442695
      %v956 = vpow.pop %v955
      %v957 = vmul.f32 %v853, 1.442695
      %v958 = vpow.pop %v957
      %v959 = vmul.f32 %v854, 1.442695
      %v960 = vpow.pop %v959
      %v961 = vmul.f32 %v855, 1.442695
      %v962 = vpow.pop %v961
      %v963 = vmul.f32 %v856, 1.442695
      %v964 = vpow.pop %v963
      %v965 = vmul.f32 %v857, 1.442695
      %v966 = vpow.pop %v965
      %v967 = vmul.f32 %v858, 1.442695
      %v968 = vpow.pop %v967
      %v969 = vmul.f32 %v859, 1.442695
      %v970 = vpow.pop %v969
      %v971 = vmul.f32 %v860, 1.442695
      %v972 = vpow.pop %v971
      %v973 = vmul.f32 %v861, 1.442695
      %v974 = vpow.pop %v973
      %v975 = vmul.f32 %v862, 1.442695
      %v976 = vpow.pop %v975
      %v977 = vmul.f32 %v863, 1.442695
      %v978 = vpow.pop %v977
      %v979 = vmul.f32 %v864, 1.442695
      %v980 = vpow.pop %v979
      %v981 = vmul.f32 %v865, 1.442695
      %v982 = vpow.pop %v981
      %v983 = vmul.f32 %v866, 1.442695
      %v984 = vpow.pop %v983
      %v985 = vmul.f32 %v867, 1.442695
      %v986 = vpow.pop %v985
      %v987 = vmul.f32 %v868, 1.442695
      %v988 = vpow.pop %v987
      %v989 = vmul.f32 %v869, 1.442695
      %v990 = vpow.pop %v989
      %v991 = vmul.f32 %v870, 1.442695
      %v992 = vpow.pop %v991
      %v993 = vmul.f32 %v871, 1.442695
      %v994 = vpow.pop %v993
      %v995 = vmul.f32 %v872, 1.442695
      %v996 = vpow.pop %v995
      %v997 = vmul.f32 %v873, 1.442695
      %v998 = vpow.pop %v997
      %v999 = vmul.f32 %v874, 1.442695
      %v1000 = vpow.pop %v999
      %v1001 = vmul.f32 %v875, 1.442695
      %v1002 = vpow.pop %v1001
      %v1003 = vmul.f32 %v876, 1.442695
      %v1004 = vpow.pop %v1003
      %v1005 = vadd.f32 %v878, %v882
      %v1006 = vadd.f32 %v1005, %v886
      %v1007 = vadd.f32 %v1006, %v890
      %v1008 = vadd.f32 %v1007, %v894
      %v1009 = vadd.f32 %v1008, %v898
      %v1010 = vadd.f32 %v1009, %v902
      %v1011 = vadd.f32 %v1010, %v906
      %v1012 = vadd.f32 %v1011, %v910
      %v1013 = vadd.f32 %v1012, %v914
      %v1014 = vadd.f32 %v1013, %v918
      %v1015 = vadd.f32 %v1014, %v922
      %v1016 = vadd.f32 %v1015, %v926
      %v1017 = vadd.f32 %v1016, %v930
      %v1018 = vadd.f32 %v1017, %v934
      %v1019 = vadd.f32 %v1018, %v938
      %v1020 = vadd.f32 %v1019, %v942
      %v1021 = vadd.f32 %v1020, %v946
      %v1022 = vadd.f32 %v1021, %v950
      %v1023 = vadd.f32 %v1022, %v954
      %v1024 = vadd.f32 %v1023, %v958
      %v1025 = vadd.f32 %v1024, %v962
      %v1026 = vadd.f32 %v1025, %v966
      %v1027 = vadd.f32 %v1026, %v970
      %v1028 = vadd.f32 %v1027, %v974
      %v1029 = vadd.f32 %v1028, %v978
      %v1030 = vadd.f32 %v1029, %v982
      %v1031 = vadd.f32 %v1030, %v986
      %v1032 = vadd.f32 %v1031, %v990
      %v1033 = vadd.f32 %v1032, %v994
      %v1034 = vadd.f32 %v1033, %v998
      %v1035 = vadd.f32 %v1034, %v1002
      %v1036 = vrot.slane %v1035, 4
      %v1037 = vadd.f32 %v1035, %v1036
      %v1038 = vrot.slane %v1037, 2
      %v1039 = vadd.f32 %v1037, %v1038
      %v1040 = vrot.slane %v1039, 1
      %v1041 = vadd.f32 %v1039, %v1040
      %v1042 = vadd.f32 %v880, %v884
      %v1043 = vadd.f32 %v1042, %v888
      %v1044 = vadd.f32 %v1043, %v892
      %v1045 = vadd.f32 %v1044, %v896
      %v1046 = vadd.f32 %v1045, %v900
      %v1047 = vadd.f32 %v1046, %v904
      %v1048 = vadd.f32 %v1047, %v908
      %v1049 = vadd.f32 %v1048, %v912
      %v1050 = vadd.f32 %v1049, %v916
      %v1051 = vadd.f32 %v1050, %v920
      %v1052 = vadd.f32 %v1051, %v924
      %v1053 = vadd.f32 %v1052, %v928
      %v1054 = vadd.f32 %v1053, %v932
      %v1055 = vadd.f32 %v1054, %v936
      %v1056 = vadd.f32 %v1055, %v940
      %v1057 = vadd.f32 %v1056, %v944
      %v1058 = vadd.f32 %v1057, %v948
      %v1059 = vadd.f32 %v1058, %v952
      %v1060 = vadd.f32 %v1059, %v956
      %v1061 = vadd.f32 %v1060, %v960
      %v1062 = vadd.f32 %v1061, %v964
      %v1063 = vadd.f32 %v1062, %v968
      %v1064 = vadd.f32 %v1063, %v972
      %v1065 = vadd.f32 %v1064, %v976
      %v1066 = vadd.f32 %v1065, %v980
      %v1067 = vadd.f32 %v1066, %v984
      %v1068 = vadd.f32 %v1067, %v988
      %v1069 = vadd.f32 %v1068, %v992
      %v1070 = vadd.f32 %v1069, %v996
      %v1071 = vadd.f32 %v1070, %v1000
      %v1072 = vadd.f32 %v1071, %v1004
      %v1073 = vrot.slane %v1072, 4
      %v1074 = vadd.f32 %v1072, %v1073
      %v1075 = vrot.slane %v1074, 2
      %v1076 = vadd.f32 %v1074, %v1075
      %v1077 = vrot.slane %v1076, 1
      %v1078 = vadd.f32 %v1076, %v1077
      %v1079 = vrcp.pop %v1041
      %v1080 = vrcp.pop %v1078
      %v1081 = vmul.bf16 %v453, %v489
      %v1082 = vmul.bf16 %v454, %v489
      %v1083 = vpack.c.bf16 %v882, %v878
      %v1084 = vpack.c.bf16 %v884, %v880
      %v1085 = vpack.c.bf16 %v890, %v886
      %v1086 = vpack.c.bf16 %v892, %v888
      %v1087 = vpack.c.bf16 %v898, %v894
      %v1088 = vpack.c.bf16 %v900, %v896
      %v1089 = vpack.c.bf16 %v906, %v902
      %v1090 = vpack.c.bf16 %v908, %v904
      %v1091 = vpack.c.bf16 %v914, %v910
      %v1092 = vpack.c.bf16 %v916, %v912
      %v1093 = vpack.c.bf16 %v922, %v918
      %v1094 = vpack.c.bf16 %v924, %v920
      %v1095 = vpack.c.bf16 %v930, %v926
      %v1096 = vpack.c.bf16 %v932, %v928
      %v1097 = vpack.c.bf16 %v938, %v934
      %v1098 = vpack.c.bf16 %v940, %v936
      %v1099 = vpack.c.bf16 %v946, %v942
      %v1100 = vpack.c.bf16 %v948, %v944
      %v1101 = vpack.c.bf16 %v954, %v950
      %v1102 = vpack.c.bf16 %v956, %v952
      %v1103 = vpack.c.bf16 %v962, %v958
      %v1104 = vpack.c.bf16 %v964, %v960
      %v1105 = vpack.c.bf16 %v970, %v966
      %v1106 = vpack.c.bf16 %v972, %v968
      %v1107 = vpack.c.bf16 %v978, %v974
      %v1108 = vpack.c.bf16 %v980, %v976
      %v1109 = vpack.c.bf16 %v986, %v982
      %v1110 = vpack.c.bf16 %v988, %v984
      %v1111 = vpack.c.bf16 %v994, %v990
      %v1112 = vpack.c.bf16 %v996, %v992
      %v1113 = vpack.c.bf16 %v1002, %v998
      %v1114 = vpack.c.bf16 %v1004, %v1000
      %1115 = vmatprep.subr.bf16.mxu0 %v1084
      %1116 = vmatpush1.bf16.msra.mxu0 %v1083
      %1117 = vmatprep.subr.bf16.mxu0 %v1086
      %1118 = vmatpush1.bf16.msra.mxu0 %v1085
      %1119 = vmatprep.subr.bf16.mxu0 %v1088
      %1120 = vmatpush1.bf16.msra.mxu0 %v1087
      %1121 = vmatprep.subr.bf16.mxu0 %v1090
      %1122 = vmatpush1.bf16.msra.mxu0 %v1089
      %1123 = vmatprep.subr.bf16.mxu0 %v1092
      %1124 = vmatpush1.bf16.msra.mxu0 %v1091
      %1125 = vmatprep.subr.bf16.mxu0 %v1094
      %1126 = vmatpush1.bf16.msra.mxu0 %v1093
      %1127 = vmatprep.subr.bf16.mxu0 %v1096
      %1128 = vmatpush1.bf16.msra.mxu0 %v1095
      %1129 = vmatprep.subr.bf16.mxu0 %v1098
      %1130 = vmatpush1.bf16.msra.mxu0 %v1097
      %1131 = vmatprep.subr.bf16.mxu0 %v1100
      %1132 = vmatpush1.bf16.msra.mxu0 %v1099
      %1133 = vmatprep.subr.bf16.mxu0 %v1102
      %1134 = vmatpush1.bf16.msra.mxu0 %v1101
      %1135 = vmatprep.subr.bf16.mxu0 %v1104
      %1136 = vmatpush1.bf16.msra.mxu0 %v1103
      %1137 = vmatprep.subr.bf16.mxu0 %v1106
      %1138 = vmatpush1.bf16.msra.mxu0 %v1105
      %1139 = vmatprep.subr.bf16.mxu0 %v1108
      %1140 = vmatpush1.bf16.msra.mxu0 %v1107
      %1141 = vmatprep.subr.bf16.mxu0 %v1110
      %1142 = vmatpush1.bf16.msra.mxu0 %v1109
      %1143 = vmatprep.subr.bf16.mxu0 %v1112
      %1144 = vmatpush1.bf16.msra.mxu0 %v1111
      %1145 = vmatprep.subr.bf16.mxu0 %v1114
      %1146 = vmatpush1.bf16.msra.mxu0 %v1113
      %1147 = vmatprep.mubr.bf16.mxu0 %v1082
      %1148 = vmatmul.mubr.bf16.gmra.mrb[0].mxu0 %v1081
      %v1149 = vpop.f32.mrb[0].mxu0
      %v1150 = vadd.f32 0.0, %v1149
      %v1151 = vpop.f32.mrb[0].mxu0
      %v1152 = vadd.f32 0.0, %v1151
      %v1153 = vpop.f32.mrb[0].mxu0
      %v1154 = vadd.f32 0.0, %v1153
      %v1155 = vpop.f32.mrb[0].mxu0
      %v1156 = vadd.f32 0.0, %v1155
      %1157 = vdwg.mxu0
      %v1158 = vmul.f32 %v1150, %v1079
      %v1159 = vmul.f32 %v1152, %v1080
      %v1160 = vmul.f32 %v1154, %v1079
      %v1161 = vmul.f32 %v1156, %v1080
      %v1162 = vadd.f32 %v1158, 0.0
      %v1163 = vadd.f32 %v1159, 0.0
      %v1164 = vadd.f32 %v1160, 0.0
      %v1165 = vadd.f32 %v1161, 0.0
      %vm1166 = vcmp.ge.s32.totalorder %v364, 2
      %vm1167 = vcmp.ge.s32.totalorder %v455, 2
      %vm1168 = vcmp.ge.s32.totalorder %v456, 2
      %vm1169 = vcmp.lt.s32.totalorder %v364, 4
      %vm1170 = vcmp.lt.s32.totalorder %v455, 4
      %vm1171 = vcmp.lt.s32.totalorder %v456, 4
      %vm1172 = vmand %vm1166, %vm1169
      %vm1173 = vmand %vm1167, %vm1170
      %vm1174 = vmand %vm1168, %vm1171
      %vm1175 = vmor %vm1172, %vm471
      %vm1176 = vmor %vm1173, %vm472
      %vm1177 = vmor %vm1174, %vm473
      %v1178 = vsel %vm1175, 1, 0
      %v1179 = vsel %vm1176, 1, 0
      %v1180 = vsel %vm1177, 1, 0
      %v1181 = vcvt.s32.f32 %v1178
      %v1182 = vcvt.s32.f32 %v1179
      %v1183 = vcvt.s32.f32 %v1180
      %v1184 = vpack.c.bf16 %v1182, %v1181
      %v1185 = vpack.c.bf16 %v1183, %v1183
      %v1186 = vsel %vm1172, 1, 0
      %v1187 = vsel %vm1173, 1, 0
      %v1188 = vcvt.s32.f32 %v1186
      %v1189 = vcvt.s32.f32 %v1187
      %v1190 = vpack.c.bf16 %v1189, %v1188
      %v1191 = vmul.bf16 %v370, %v1184
      %v1192 = vmul.bf16 %v371, %v1184
      %v1193 = vmul.bf16 %v372, %v1185
      %v1195 = vsel %vm542, %v1193, 0
      %1197 = vmatprep.subr.bf16.mxu0 %v1192
      %1198 = vmatpush1.bf16.msra.mxu0 %v1191
      %1199 = vmatprep.subr.bf16.mxu0 %v1195
      %1200 = vmatpush1.bf16.msra.mxu0 %v1195
      %1201 = vmatprep.subr.bf16.mxu0 0
      %1202 = vmatpush1.bf16.msra.mxu0 0
      %1203 = vmatprep.subr.bf16.mxu0 0
      %1204 = vmatpush1.bf16.msra.mxu0 0
      %1205 = vmatprep.subr.bf16.mxu0 0
      %1206 = vmatpush1.bf16.msra.mxu0 0
      %1207 = vmatprep.subr.bf16.mxu0 0
      %1208 = vmatpush1.bf16.msra.mxu0 0
      %1209 = vmatprep.subr.bf16.mxu0 0
      %1210 = vmatpush1.bf16.msra.mxu0 0
      %1211 = vmatprep.subr.bf16.mxu0 0
      %1212 = vmatpush1.bf16.msra.mxu0 0
      %1213 = vmatprep.subr.bf16.mxu0 0
      %1214 = vmatpush1.bf16.msra.mxu0 0
      %1215 = vmatprep.subr.bf16.mxu0 0
      %1216 = vmatpush1.bf16.msra.mxu0 0
      %1217 = vmatprep.subr.bf16.mxu0 0
      %1218 = vmatpush1.bf16.msra.mxu0 0
      %1219 = vmatprep.subr.bf16.mxu0 0
      %1220 = vmatpush1.bf16.msra.mxu0 0
      %1221 = vmatprep.subr.bf16.mxu0 0
      %1222 = vmatpush1.bf16.msra.mxu0 0
      %1223 = vmatprep.subr.bf16.mxu0 0
      %1224 = vmatpush1.bf16.msra.mxu0 0
      %1225 = vmatprep.subr.bf16.mxu0 0
      %1226 = vmatpush1.bf16.msra.mxu0 0
      %1227 = vmatprep.subr.bf16.mxu0 0
      %1228 = vmatpush1.bf16.msra.mxu0 0
      %1229 = vmatprep.mubr.bf16.mxu0 0
      %1230 = vmatmul.mubr.bf16.gmra.mrb[0].mxu0 %v495
      %v1231 = vpop.f32.mrb[0].mxu0
      %v1232 = vadd.f32 0.0, %v1231
      %v1233 = vpop.f32.mrb[0].mxu0
      %v1234 = vadd.f32 0.0, %v1233
      %v1235 = vpop.f32.mrb[0].mxu0
      %v1236 = vadd.f32 0.0, %v1235
      %v1237 = vpop.f32.mrb[0].mxu0
      %v1238 = vadd.f32 0.0, %v1237
      %1239 = vmatprep.mubr.bf16.mxu0 0
      %1240 = vmatmul.mubr.bf16.gmra.mrb[0].mxu0 %v498
      %v1241 = vpop.f32.mrb[0].mxu0
      %v1242 = vadd.f32 0.0, %v1241
      %v1243 = vpop.f32.mrb[0].mxu0
      %v1244 = vadd.f32 0.0, %v1243
      %v1245 = vpop.f32.mrb[0].mxu0
      %v1246 = vadd.f32 0.0, %v1245
      %v1247 = vpop.f32.mrb[0].mxu0
      %v1248 = vadd.f32 0.0, %v1247
      %1249 = vmatprep.mubr.bf16.mxu0 0
      %1250 = vmatmul.mubr.bf16.gmra.mrb[0].mxu0 %v501
      %v1251 = vpop.f32.mrb[0].mxu0
      %v1252 = vadd.f32 0.0, %v1251
      %v1253 = vpop.f32.mrb[0].mxu0
      %v1254 = vadd.f32 0.0, %v1253
      %v1255 = vpop.f32.mrb[0].mxu0
      %v1256 = vadd.f32 0.0, %v1255
      %v1257 = vpop.f32.mrb[0].mxu0
      %v1258 = vadd.f32 0.0, %v1257
      %1259 = vmatprep.mubr.bf16.mxu0 0
      %1260 = vmatmul.mubr.bf16.gmra.mrb[0].mxu0 %v504
      %v1261 = vpop.f32.mrb[0].mxu0
      %v1262 = vadd.f32 0.0, %v1261
      %v1263 = vpop.f32.mrb[0].mxu0
      %v1264 = vadd.f32 0.0, %v1263
      %v1265 = vpop.f32.mrb[0].mxu0
      %v1266 = vadd.f32 0.0, %v1265
      %v1267 = vpop.f32.mrb[0].mxu0
      %v1268 = vadd.f32 0.0, %v1267
      %1269 = vmatprep.mubr.bf16.mxu0 0
      %1270 = vmatmul.mubr.bf16.gmra.mrb[0].mxu0 %v507
      %v1271 = vpop.f32.mrb[0].mxu0
      %v1272 = vadd.f32 0.0, %v1271
      %v1273 = vpop.f32.mrb[0].mxu0
      %v1274 = vadd.f32 0.0, %v1273
      %v1275 = vpop.f32.mrb[0].mxu0
      %v1276 = vadd.f32 0.0, %v1275
      %v1277 = vpop.f32.mrb[0].mxu0
      %v1278 = vadd.f32 0.0, %v1277
      %1279 = vmatprep.mubr.bf16.mxu0 0
      %1280 = vmatmul.mubr.bf16.gmra.mrb[0].mxu0 %v510
      %v1281 = vpop.f32.mrb[0].mxu0
      %v1282 = vadd.f32 0.0, %v1281
      %v1283 = vpop.f32.mrb[0].mxu0
      %v1284 = vadd.f32 0.0, %v1283
      %v1285 = vpop.f32.mrb[0].mxu0
      %v1286 = vadd.f32 0.0, %v1285
      %v1287 = vpop.f32.mrb[0].mxu0
      %v1288 = vadd.f32 0.0, %v1287
      %1289 = vmatprep.mubr.bf16.mxu0 0
      %1290 = vmatmul.mubr.bf16.gmra.mrb[0].mxu0 %v513
      %v1291 = vpop.f32.mrb[0].mxu0
      %v1292 = vadd.f32 0.0, %v1291
      %v1293 = vpop.f32.mrb[0].mxu0
      %v1294 = vadd.f32 0.0, %v1293
      %v1295 = vpop.f32.mrb[0].mxu0
      %v1296 = vadd.f32 0.0, %v1295
      %v1297 = vpop.f32.mrb[0].mxu0
      %v1298 = vadd.f32 0.0, %v1297
      %1299 = vmatprep.mubr.bf16.mxu0 0
      %1300 = vmatmul.mubr.bf16.gmra.mrb[0].mxu0 %v516
      %v1301 = vpop.f32.mrb[0].mxu0
      %v1302 = vadd.f32 0.0, %v1301
      %v1303 = vpop.f32.mrb[0].mxu0
      %v1304 = vadd.f32 0.0, %v1303
      %v1305 = vpop.f32.mrb[0].mxu0
      %v1306 = vadd.f32 0.0, %v1305
      %v1307 = vpop.f32.mrb[0].mxu0
      %v1308 = vadd.f32 0.0, %v1307
      %1309 = vmatprep.mubr.bf16.mxu0 0
      %1310 = vmatmul.mubr.bf16.gmra.mrb[0].mxu0 %v519
      %v1311 = vpop.f32.mrb[0].mxu0
      %v1312 = vadd.f32 0.0, %v1311
      %v1313 = vpop.f32.mrb[0].mxu0
      %v1314 = vadd.f32 0.0, %v1313
      %v1315 = vpop.f32.mrb[0].mxu0
      %v1316 = vadd.f32 0.0, %v1315
      %v1317 = vpop.f32.mrb[0].mxu0
      %v1318 = vadd.f32 0.0, %v1317
      %1319 = vmatprep.mubr.bf16.mxu0 0
      %1320 = vmatmul.mubr.bf16.gmra.mrb[0].mxu0 %v522
      %v1321 = vpop.f32.mrb[0].mxu0
      %v1322 = vadd.f32 0.0, %v1321
      %v1323 = vpop.f32.mrb[0].mxu0
      %v1324 = vadd.f32 0.0, %v1323
      %v1325 = vpop.f32.mrb[0].mxu0
      %v1326 = vadd.f32 0.0, %v1325
      %v1327 = vpop.f32.mrb[0].mxu0
      %v1328 = vadd.f32 0.0, %v1327
      %1329 = vmatprep.mubr.bf16.mxu0 0
      %1330 = vmatmul.mubr.bf16.gmra.mrb[0].mxu0 %v525
      %v1331 = vpop.f32.mrb[0].mxu0
      %v1332 = vadd.f32 0.0, %v1331
      %v1333 = vpop.f32.mrb[0].mxu0
      %v1334 = vadd.f32 0.0, %v1333
      %v1335 = vpop.f32.mrb[0].mxu0
      %v1336 = vadd.f32 0.0, %v1335
      %v1337 = vpop.f32.mrb[0].mxu0
      %v1338 = vadd.f32 0.0, %v1337
      %1339 = vmatprep.mubr.bf16.mxu0 0
      %1340 = vmatmul.mubr.bf16.gmra.mrb[0].mxu0 %v528
      %v1341 = vpop.f32.mrb[0].mxu0
      %v1342 = vadd.f32 0.0, %v1341
      %v1343 = vpop.f32.mrb[0].mxu0
      %v1344 = vadd.f32 0.0, %v1343
      %v1345 = vpop.f32.mrb[0].mxu0
      %v1346 = vadd.f32 0.0, %v1345
      %v1347 = vpop.f32.mrb[0].mxu0
      %v1348 = vadd.f32 0.0, %v1347
      %1349 = vmatprep.mubr.bf16.mxu0 0
      %1350 = vmatmul.mubr.bf16.gmra.mrb[0].mxu0 %v531
      %v1351 = vpop.f32.mrb[0].mxu0
      %v1352 = vadd.f32 0.0, %v1351
      %v1353 = vpop.f32.mrb[0].mxu0
      %v1354 = vadd.f32 0.0, %v1353
      %v1355 = vpop.f32.mrb[0].mxu0
      %v1356 = vadd.f32 0.0, %v1355
      %v1357 = vpop.f32.mrb[0].mxu0
      %v1358 = vadd.f32 0.0, %v1357
      %1359 = vmatprep.mubr.bf16.mxu0 0
      %1360 = vmatmul.mubr.bf16.gmra.mrb[0].mxu0 %v534
      %v1361 = vpop.f32.mrb[0].mxu0
      %v1362 = vadd.f32 0.0, %v1361
      %v1363 = vpop.f32.mrb[0].mxu0
      %v1364 = vadd.f32 0.0, %v1363
      %v1365 = vpop.f32.mrb[0].mxu0
      %v1366 = vadd.f32 0.0, %v1365
      %v1367 = vpop.f32.mrb[0].mxu0
      %v1368 = vadd.f32 0.0, %v1367
      %1369 = vmatprep.mubr.bf16.mxu0 0
      %1370 = vmatmul.mubr.bf16.gmra.mrb[0].mxu0 %v537
      %v1371 = vpop.f32.mrb[0].mxu0
      %v1372 = vadd.f32 0.0, %v1371
      %v1373 = vpop.f32.mrb[0].mxu0
      %v1374 = vadd.f32 0.0, %v1373
      %v1375 = vpop.f32.mrb[0].mxu0
      %v1376 = vadd.f32 0.0, %v1375
      %v1377 = vpop.f32.mrb[0].mxu0
      %v1378 = vadd.f32 0.0, %v1377
      %1379 = vmatprep.mubr.bf16.mxu0 0
      %1380 = vmatmul.mubr.bf16.gmra.mrb[0].mxu0 %v540
      %v1381 = vpop.f32.mrb[0].mxu0
      %v1382 = vadd.f32 0.0, %v1381
      %v1383 = vpop.f32.mrb[0].mxu0
      %v1384 = vadd.f32 0.0, %v1383
      %v1385 = vpop.f32.mrb[0].mxu0
      %v1386 = vadd.f32 0.0, %v1385
      %v1387 = vpop.f32.mrb[0].mxu0
      %v1388 = vadd.f32 0.0, %v1387
      %1389 = vdwg.mxu0
      %v1390 = vmax.f32 %v1232, %v1242
      %v1391 = vmax.f32 %v1236, %v1246
      %v1392 = vmax.f32 %v1390, %v1252
      %v1393 = vmax.f32 %v1391, %v1256
      %v1394 = vmax.f32 %v1392, %v1262
      %v1395 = vmax.f32 %v1393, %v1266
      %v1396 = vmax.f32 %v1394, %v1272
      %v1397 = vmax.f32 %v1395, %v1276
      %v1398 = vmax.f32 %v1396, %v1282
      %v1399 = vmax.f32 %v1397, %v1286
      %v1400 = vmax.f32 %v1398, %v1292
      %v1401 = vmax.f32 %v1399, %v1296
      %v1402 = vmax.f32 %v1400, %v1302
      %v1403 = vmax.f32 %v1401, %v1306
      %v1404 = vmax.f32 %v1402, %v1312
      %v1405 = vmax.f32 %v1403, %v1316
      %v1406 = vmax.f32 %v1404, %v1322
      %v1407 = vmax.f32 %v1405, %v1326
      %v1408 = vmax.f32 %v1406, %v1332
      %v1409 = vmax.f32 %v1407, %v1336
      %v1410 = vmax.f32 %v1408, %v1342
      %v1411 = vmax.f32 %v1409, %v1346
      %v1412 = vmax.f32 %v1410, %v1352
      %v1413 = vmax.f32 %v1411, %v1356
      %v1414 = vmax.f32 %v1412, %v1362
      %v1415 = vmax.f32 %v1413, %v1366
      %v1416 = vmax.f32 %v1414, %v1372
      %v1417 = vmax.f32 %v1415, %v1376
      %v1418 = vmax.f32 %v1416, %v1382
      %v1419 = vmax.f32 %v1417, %v1386
      %v1420 = vmax.f32 %v1418, %v1419
      %v1421 = vrot.slane %v1420, 4
      %v1422 = vmax.f32 %v1420, %v1421
      %v1423 = vrot.slane %v1422, 2
      %v1424 = vmax.f32 %v1422, %v1423
      %v1425 = vrot.slane %v1424, 1
      %v1426 = vmax.f32 %v1424, %v1425
      %v1427 = vmax.f32 %v1234, %v1244
      %v1428 = vmax.f32 %v1238, %v1248
      %v1429 = vmax.f32 %v1427, %v1254
      %v1430 = vmax.f32 %v1428, %v1258
      %v1431 = vmax.f32 %v1429, %v1264
      %v1432 = vmax.f32 %v1430, %v1268
      %v1433 = vmax.f32 %v1431, %v1274
      %v1434 = vmax.f32 %v1432, %v1278
      %v1435 = vmax.f32 %v1433, %v1284
      %v1436 = vmax.f32 %v1434, %v1288
      %v1437 = vmax.f32 %v1435, %v1294
      %v1438 = vmax.f32 %v1436, %v1298
      %v1439 = vmax.f32 %v1437, %v1304
      %v1440 = vmax.f32 %v1438, %v1308
      %v1441 = vmax.f32 %v1439, %v1314
      %v1442 = vmax.f32 %v1440, %v1318
      %v1443 = vmax.f32 %v1441, %v1324
      %v1444 = vmax.f32 %v1442, %v1328
      %v1445 = vmax.f32 %v1443, %v1334
      %v1446 = vmax.f32 %v1444, %v1338
      %v1447 = vmax.f32 %v1445, %v1344
      %v1448 = vmax.f32 %v1446, %v1348
      %v1449 = vmax.f32 %v1447, %v1354
      %v1450 = vmax.f32 %v1448, %v1358
      %v1451 = vmax.f32 %v1449, %v1364
      %v1452 = vmax.f32 %v1450, %v1368
      %v1453 = vmax.f32 %v1451, %v1374
      %v1454 = vmax.f32 %v1452, %v1378
      %v1455 = vmax.f32 %v1453, %v1384
      %v1456 = vmax.f32 %v1454, %v1388
      %v1457 = vmax.f32 %v1455, %v1456
      %v1458 = vrot.slane %v1457, 4
      %v1459 = vmax.f32 %v1457, %v1458
      %v1460 = vrot.slane %v1459, 2
      %v1461 = vmax.f32 %v1459, %v1460
      %v1462 = vrot.slane %v1461, 1
      %v1463 = vmax.f32 %v1461, %v1462
      %v1464 = vsub.f32 %v1232, %v1426
      %v1465 = vsub.f32 %v1234, %v1463
      %v1466 = vsub.f32 %v1236, %v1426
      %v1467 = vsub.f32 %v1238, %v1463
      %v1468 = vsub.f32 %v1242, %v1426
      %v1469 = vsub.f32 %v1244, %v1463
      %v1470 = vsub.f32 %v1246, %v1426
      %v1471 = vsub.f32 %v1248, %v1463
      %v1472 = vsub.f32 %v1252, %v1426
      %v1473 = vsub.f32 %v1254, %v1463
      %v1474 = vsub.f32 %v1256, %v1426
      %v1475 = vsub.f32 %v1258, %v1463
      %v1476 = vsub.f32 %v1262, %v1426
      %v1477 = vsub.f32 %v1264, %v1463
      %v1478 = vsub.f32 %v1266, %v1426
      %v1479 = vsub.f32 %v1268, %v1463
      %v1480 = vsub.f32 %v1272, %v1426
      %v1481 = vsub.f32 %v1274, %v1463
      %v1482 = vsub.f32 %v1276, %v1426
      %v1483 = vsub.f32 %v1278, %v1463
      %v1484 = vsub.f32 %v1282, %v1426
      %v1485 = vsub.f32 %v1284, %v1463
      %v1486 = vsub.f32 %v1286, %v1426
      %v1487 = vsub.f32 %v1288, %v1463
      %v1488 = vsub.f32 %v1292, %v1426
      %v1489 = vsub.f32 %v1294, %v1463
      %v1490 = vsub.f32 %v1296, %v1426
      %v1491 = vsub.f32 %v1298, %v1463
      %v1492 = vsub.f32 %v1302, %v1426
      %v1493 = vsub.f32 %v1304, %v1463
      %v1494 = vsub.f32 %v1306, %v1426
      %v1495 = vsub.f32 %v1308, %v1463
      %v1496 = vsub.f32 %v1312, %v1426
      %v1497 = vsub.f32 %v1314, %v1463
      %v1498 = vsub.f32 %v1316, %v1426
      %v1499 = vsub.f32 %v1318, %v1463
      %v1500 = vsub.f32 %v1322, %v1426
      %v1501 = vsub.f32 %v1324, %v1463
      %v1502 = vsub.f32 %v1326, %v1426
      %v1503 = vsub.f32 %v1328, %v1463
      %v1504 = vsub.f32 %v1332, %v1426
      %v1505 = vsub.f32 %v1334, %v1463
      %v1506 = vsub.f32 %v1336, %v1426
      %v1507 = vsub.f32 %v1338, %v1463
      %v1508 = vsub.f32 %v1342, %v1426
      %v1509 = vsub.f32 %v1344, %v1463
      %v1510 = vsub.f32 %v1346, %v1426
      %v1511 = vsub.f32 %v1348, %v1463
      %v1512 = vsub.f32 %v1352, %v1426
      %v1513 = vsub.f32 %v1354, %v1463
      %v1514 = vsub.f32 %v1356, %v1426
      %v1515 = vsub.f32 %v1358, %v1463
      %v1516 = vsub.f32 %v1362, %v1426
      %v1517 = vsub.f32 %v1364, %v1463
      %v1518 = vsub.f32 %v1366, %v1426
      %v1519 = vsub.f32 %v1368, %v1463
      %v1520 = vsub.f32 %v1372, %v1426
      %v1521 = vsub.f32 %v1374, %v1463
      %v1522 = vsub.f32 %v1376, %v1426
      %v1523 = vsub.f32 %v1378, %v1463
      %v1524 = vsub.f32 %v1382, %v1426
      %v1525 = vsub.f32 %v1384, %v1463
      %v1526 = vsub.f32 %v1386, %v1426
      %v1527 = vsub.f32 %v1388, %v1463
      %v1528 = vmul.f32 %v1464, 1.442695
      %v1529 = vpow.pop %v1528
      %v1530 = vmul.f32 %v1465, 1.442695
      %v1531 = vpow.pop %v1530
      %v1532 = vmul.f32 %v1466, 1.442695
      %v1533 = vpow.pop %v1532
      %v1534 = vmul.f32 %v1467, 1.442695
      %v1535 = vpow.pop %v1534
      %v1536 = vmul.f32 %v1468, 1.442695
      %v1537 = vpow.pop %v1536
      %v1538 = vmul.f32 %v1469, 1.442695
      %v1539 = vpow.pop %v1538
      %v1540 = vmul.f32 %v1470, 1.442695
      %v1541 = vpow.pop %v1540
      %v1542 = vmul.f32 %v1471, 1.442695
      %v1543 = vpow.pop %v1542
      %v1544 = vmul.f32 %v1472, 1.442695
      %v1545 = vpow.pop %v1544
      %v1546 = vmul.f32 %v1473, 1.442695
      %v1547 = vpow.pop %v1546
      %v1548 = vmul.f32 %v1474, 1.442695
      %v1549 = vpow.pop %v1548
      %v1550 = vmul.f32 %v1475, 1.442695
      %v1551 = vpow.pop %v1550
      %v1552 = vmul.f32 %v1476, 1.442695
      %v1553 = vpow.pop %v1552
      %v1554 = vmul.f32 %v1477, 1.442695
      %v1555 = vpow.pop %v1554
      %v1556 = vmul.f32 %v1478, 1.442695
      %v1557 = vpow.pop %v1556
      %v1558 = vmul.f32 %v1479, 1.442695
      %v1559 = vpow.pop %v1558
      %v1560 = vmul.f32 %v1480, 1.442695
      %v1561 = vpow.pop %v1560
      %v1562 = vmul.f32 %v1481, 1.442695
      %v1563 = vpow.pop %v1562
      %v1564 = vmul.f32 %v1482, 1.442695
      %v1565 = vpow.pop %v1564
      %v1566 = vmul.f32 %v1483, 1.442695
      %v1567 = vpow.pop %v1566
      %v1568 = vmul.f32 %v1484, 1.442695
      %v1569 = vpow.pop %v1568
      %v1570 = vmul.f32 %v1485, 1.442695
      %v1571 = vpow.pop %v1570
      %v1572 = vmul.f32 %v1486, 1.442695
      %v1573 = vpow.pop %v1572
      %v1574 = vmul.f32 %v1487, 1.442695
      %v1575 = vpow.pop %v1574
      %v1576 = vmul.f32 %v1488, 1.442695
      %v1577 = vpow.pop %v1576
      %v1578 = vmul.f32 %v1489, 1.442695
      %v1579 = vpow.pop %v1578
      %v1580 = vmul.f32 %v1490, 1.442695
      %v1581 = vpow.pop %v1580
      %v1582 = vmul.f32 %v1491, 1.442695
      %v1583 = vpow.pop %v1582
      %v1584 = vmul.f32 %v1492, 1.442695
      %v1585 = vpow.pop %v1584
      %v1586 = vmul.f32 %v1493, 1.442695
      %v1587 = vpow.pop %v1586
      %v1588 = vmul.f32 %v1494, 1.442695
      %v1589 = vpow.pop %v1588
      %v1590 = vmul.f32 %v1495, 1.442695
      %v1591 = vpow.pop %v1590
      %v1592 = vmul.f32 %v1496, 1.442695
      %v1593 = vpow.pop %v1592
      %v1594 = vmul.f32 %v1497, 1.442695
      %v1595 = vpow.pop %v1594
      %v1596 = vmul.f32 %v1498, 1.442695
      %v1597 = vpow.pop %v1596
      %v1598 = vmul.f32 %v1499, 1.442695
      %v1599 = vpow.pop %v1598
      %v1600 = vmul.f32 %v1500, 1.442695
      %v1601 = vpow.pop %v1600
      %v1602 = vmul.f32 %v1501, 1.442695
      %v1603 = vpow.pop %v1602
      %v1604 = vmul.f32 %v1502, 1.442695
      %v1605 = vpow.pop %v1604
      %v1606 = vmul.f32 %v1503, 1.442695
      %v1607 = vpow.pop %v1606
      %v1608 = vmul.f32 %v1504, 1.442695
      %v1609 = vpow.pop %v1608
      %v1610 = vmul.f32 %v1505, 1.442695
      %v1611 = vpow.pop %v1610
      %v1612 = vmul.f32 %v1506, 1.442695
      %v1613 = vpow.pop %v1612
      %v1614 = vmul.f32 %v1507, 1.442695
      %v1615 = vpow.pop %v1614
      %v1616 = vmul.f32 %v1508, 1.442695
      %v1617 = vpow.pop %v1616
      %v1618 = vmul.f32 %v1509, 1.442695
      %v1619 = vpow.pop %v1618
      %v1620 = vmul.f32 %v1510, 1.442695
      %v1621 = vpow.pop %v1620
      %v1622 = vmul.f32 %v1511, 1.442695
      %v1623 = vpow.pop %v1622
      %v1624 = vmul.f32 %v1512, 1.442695
      %v1625 = vpow.pop %v1624
      %v1626 = vmul.f32 %v1513, 1.442695
      %v1627 = vpow.pop %v1626
      %v1628 = vmul.f32 %v1514, 1.442695
      %v1629 = vpow.pop %v1628
      %v1630 = vmul.f32 %v1515, 1.442695
      %v1631 = vpow.pop %v1630
      %v1632 = vmul.f32 %v1516, 1.442695
      %v1633 = vpow.pop %v1632
      %v1634 = vmul.f32 %v1517, 1.442695
      %v1635 = vpow.pop %v1634
      %v1636 = vmul.f32 %v1518, 1.442695
      %v1637 = vpow.pop %v1636
      %v1638 = vmul.f32 %v1519, 1.442695
      %v1639 = vpow.pop %v1638
      %v1640 = vmul.f32 %v1520, 1.442695
      %v1641 = vpow.pop %v1640
      %v1642 = vmul.f32 %v1521, 1.442695
      %v1643 = vpow.pop %v1642
      %v1644 = vmul.f32 %v1522, 1.442695
      %v1645 = vpow.pop %v1644
      %v1646 = vmul.f32 %v1523, 1.442695
      %v1647 = vpow.pop %v1646
      %v1648 = vmul.f32 %v1524, 1.442695
      %v1649 = vpow.pop %v1648
      %v1650 = vmul.f32 %v1525, 1.442695
      %v1651 = vpow.pop %v1650
      %v1652 = vmul.f32 %v1526, 1.442695
      %v1653 = vpow.pop %v1652
      %v1654 = vmul.f32 %v1527, 1.442695
      %v1655 = vpow.pop %v1654
      %v1656 = vadd.f32 %v1529, %v1533
      %v1657 = vadd.f32 %v1656, %v1537
      %v1658 = vadd.f32 %v1657, %v1541
      %v1659 = vadd.f32 %v1658, %v1545
      %v1660 = vadd.f32 %v1659, %v1549
      %v1661 = vadd.f32 %v1660, %v1553
      %v1662 = vadd.f32 %v1661, %v1557
      %v1663 = vadd.f32 %v1662, %v1561
      %v1664 = vadd.f32 %v1663, %v1565
      %v1665 = vadd.f32 %v1664, %v1569
      %v1666 = vadd.f32 %v1665, %v1573
      %v1667 = vadd.f32 %v1666, %v1577
      %v1668 = vadd.f32 %v1667, %v1581
      %v1669 = vadd.f32 %v1668, %v1585
      %v1670 = vadd.f32 %v1669, %v1589
      %v1671 = vadd.f32 %v1670, %v1593
      %v1672 = vadd.f32 %v1671, %v1597
      %v1673 = vadd.f32 %v1672, %v1601
      %v1674 = vadd.f32 %v1673, %v1605
      %v1675 = vadd.f32 %v1674, %v1609
      %v1676 = vadd.f32 %v1675, %v1613
      %v1677 = vadd.f32 %v1676, %v1617
      %v1678 = vadd.f32 %v1677, %v1621
      %v1679 = vadd.f32 %v1678, %v1625
      %v1680 = vadd.f32 %v1679, %v1629
      %v1681 = vadd.f32 %v1680, %v1633
      %v1682 = vadd.f32 %v1681, %v1637
      %v1683 = vadd.f32 %v1682, %v1641
      %v1684 = vadd.f32 %v1683, %v1645
      %v1685 = vadd.f32 %v1684, %v1649
      %v1686 = vadd.f32 %v1685, %v1653
      %v1687 = vrot.slane %v1686, 4
      %v1688 = vadd.f32 %v1686, %v1687
      %v1689 = vrot.slane %v1688, 2
      %v1690 = vadd.f32 %v1688, %v1689
      %v1691 = vrot.slane %v1690, 1
      %v1692 = vadd.f32 %v1690, %v1691
      %v1693 = vadd.f32 %v1531, %v1535
      %v1694 = vadd.f32 %v1693, %v1539
      %v1695 = vadd.f32 %v1694, %v1543
      %v1696 = vadd.f32 %v1695, %v1547
      %v1697 = vadd.f32 %v1696, %v1551
      %v1698 = vadd.f32 %v1697, %v1555
      %v1699 = vadd.f32 %v1698, %v1559
      %v1700 = vadd.f32 %v1699, %v1563
      %v1701 = vadd.f32 %v1700, %v1567
      %v1702 = vadd.f32 %v1701, %v1571
      %v1703 = vadd.f32 %v1702, %v1575
      %v1704 = vadd.f32 %v1703, %v1579
      %v1705 = vadd.f32 %v1704, %v1583
      %v1706 = vadd.f32 %v1705, %v1587
      %v1707 = vadd.f32 %v1706, %v1591
      %v1708 = vadd.f32 %v1707, %v1595
      %v1709 = vadd.f32 %v1708, %v1599
      %v1710 = vadd.f32 %v1709, %v1603
      %v1711 = vadd.f32 %v1710, %v1607
      %v1712 = vadd.f32 %v1711, %v1611
      %v1713 = vadd.f32 %v1712, %v1615
      %v1714 = vadd.f32 %v1713, %v1619
      %v1715 = vadd.f32 %v1714, %v1623
      %v1716 = vadd.f32 %v1715, %v1627
      %v1717 = vadd.f32 %v1716, %v1631
      %v1718 = vadd.f32 %v1717, %v1635
      %v1719 = vadd.f32 %v1718, %v1639
      %v1720 = vadd.f32 %v1719, %v1643
      %v1721 = vadd.f32 %v1720, %v1647
      %v1722 = vadd.f32 %v1721, %v1651
      %v1723 = vadd.f32 %v1722, %v1655
      %v1724 = vrot.slane %v1723, 4
      %v1725 = vadd.f32 %v1723, %v1724
      %v1726 = vrot.slane %v1725, 2
      %v1727 = vadd.f32 %v1725, %v1726
      %v1728 = vrot.slane %v1727, 1
      %v1729 = vadd.f32 %v1727, %v1728
      %v1730 = vrcp.pop %v1692
      %v1731 = vrcp.pop %v1729
      %v1732 = vmul.bf16 %v453, %v1190
      %v1733 = vmul.bf16 %v454, %v1190
      %v1734 = vpack.c.bf16 %v1533, %v1529
      %v1735 = vpack.c.bf16 %v1535, %v1531
      %v1736 = vpack.c.bf16 %v1541, %v1537
      %v1737 = vpack.c.bf16 %v1543, %v1539
      %v1738 = vpack.c.bf16 %v1549, %v1545
      %v1739 = vpack.c.bf16 %v1551, %v1547
      %v1740 = vpack.c.bf16 %v1557, %v1553
      %v1741 = vpack.c.bf16 %v1559, %v1555
      %v1742 = vpack.c.bf16 %v1565, %v1561
      %v1743 = vpack.c.bf16 %v1567, %v1563
      %v1744 = vpack.c.bf16 %v1573, %v1569
      %v1745 = vpack.c.bf16 %v1575, %v1571
      %v1746 = vpack.c.bf16 %v1581, %v1577
      %v1747 = vpack.c.bf16 %v1583, %v1579
      %v1748 = vpack.c.bf16 %v1589, %v1585
      %v1749 = vpack.c.bf16 %v1591, %v1587
      %v1750 = vpack.c.bf16 %v1597, %v1593
      %v1751 = vpack.c.bf16 %v1599, %v1595
      %v1752 = vpack.c.bf16 %v1605, %v1601
      %v1753 = vpack.c.bf16 %v1607, %v1603
      %v1754 = vpack.c.bf16 %v1613, %v1609
      %v1755 = vpack.c.bf16 %v1615, %v1611
      %v1756 = vpack.c.bf16 %v1621, %v1617
      %v1757 = vpack.c.bf16 %v1623, %v1619
      %v1758 = vpack.c.bf16 %v1629, %v1625
      %v1759 = vpack.c.bf16 %v1631, %v1627
      %v1760 = vpack.c.bf16 %v1637, %v1633
      %v1761 = vpack.c.bf16 %v1639, %v1635
      %v1762 = vpack.c.bf16 %v1645, %v1641
      %v1763 = vpack.c.bf16 %v1647, %v1643
      %v1764 = vpack.c.bf16 %v1653, %v1649
      %v1765 = vpack.c.bf16 %v1655, %v1651
      %1766 = vmatprep.subr.bf16.mxu0 %v1735
      %1767 = vmatpush1.bf16.msra.mxu0 %v1734
      %1768 = vmatprep.subr.bf16.mxu0 %v1737
      %1769 = vmatpush1.bf16.msra.mxu0 %v1736
      %1770 = vmatprep.subr.bf16.mxu0 %v1739
      %1771 = vmatpush1.bf16.msra.mxu0 %v1738
      %1772 = vmatprep.subr.bf16.mxu0 %v1741
      %1773 = vmatpush1.bf16.msra.mxu0 %v1740
      %1774 = vmatprep.subr.bf16.mxu0 %v1743
      %1775 = vmatpush1.bf16.msra.mxu0 %v1742
      %1776 = vmatprep.subr.bf16.mxu0 %v1745
      %1777 = vmatpush1.bf16.msra.mxu0 %v1744
      %1778 = vmatprep.subr.bf16.mxu0 %v1747
      %1779 = vmatpush1.bf16.msra.mxu0 %v1746
      %1780 = vmatprep.subr.bf16.mxu0 %v1749
      %1781 = vmatpush1.bf16.msra.mxu0 %v1748
      %1782 = vmatprep.subr.bf16.mxu0 %v1751
      %1783 = vmatpush1.bf16.msra.mxu0 %v1750
      %1784 = vmatprep.subr.bf16.mxu0 %v1753
      %1785 = vmatpush1.bf16.msra.mxu0 %v1752
      %1786 = vmatprep.subr.bf16.mxu0 %v1755
      %1787 = vmatpush1.bf16.msra.mxu0 %v1754
      %1788 = vmatprep.subr.bf16.mxu0 %v1757
      %1789 = vmatpush1.bf16.msra.mxu0 %v1756
      %1790 = vmatprep.subr.bf16.mxu0 %v1759
      %1791 = vmatpush1.bf16.msra.mxu0 %v1758
      %1792 = vmatprep.subr.bf16.mxu0 %v1761
      %1793 = vmatpush1.bf16.msra.mxu0 %v1760
      %1794 = vmatprep.subr.bf16.mxu0 %v1763
      %1795 = vmatpush1.bf16.msra.mxu0 %v1762
      %1796 = vmatprep.subr.bf16.mxu0 %v1765
      %1797 = vmatpush1.bf16.msra.mxu0 %v1764
      %1798 = vmatprep.mubr.bf16.mxu0 %v1733
      %1799 = vmatmul.mubr.bf16.gmra.mrb[0].mxu0 %v1732
      %v1800 = vpop.f32.mrb[0].mxu0
      %v1801 = vadd.f32 0.0, %v1800
      %v1802 = vpop.f32.mrb[0].mxu0
      %v1803 = vadd.f32 0.0, %v1802
      %v1804 = vpop.f32.mrb[0].mxu0
      %v1805 = vadd.f32 0.0, %v1804
      %v1806 = vpop.f32.mrb[0].mxu0
      %v1807 = vadd.f32 0.0, %v1806
      %1808 = vdwg.mxu0
      %v1809 = vmul.f32 %v1801, %v1730
      %v1810 = vmul.f32 %v1803, %v1731
      %v1811 = vmul.f32 %v1805, %v1730
      %v1812 = vmul.f32 %v1807, %v1731
      %v1813 = vadd.f32 %v1162, %v1809
      %v1814 = vadd.f32 %v1163, %v1810
      %v1815 = vadd.f32 %v1164, %v1811
      %v1816 = vadd.f32 %v1165, %v1812
      %vm1817 = vcmp.ge.s32.totalorder %v364, 4
      %vm1818 = vcmp.ge.s32.totalorder %v455, 4
      %vm1819 = vcmp.ge.s32.totalorder %v456, 4
      %vm1820 = vcmp.lt.s32.totalorder %v364, 6
      %vm1821 = vcmp.lt.s32.totalorder %v455, 6
      %vm1822 = vcmp.lt.s32.totalorder %v456, 6
      %vm1823 = vmand %vm1817, %vm1820
      %vm1824 = vmand %vm1818, %vm1821
      %vm1825 = vmand %vm1819, %vm1822
      %vm1826 = vmor %vm1823, %vm471
      %vm1827 = vmor %vm1824, %vm472
      %vm1828 = vmor %vm1825, %vm473
      %v1829 = vsel %vm1826, 1, 0
      %v1830 = vsel %vm1827, 1, 0
      %v1831 = vsel %vm1828, 1, 0
      %v1832 = vcvt.s32.f32 %v1829
      %v1833 = vcvt.s32.f32 %v1830
      %v1834 = vcvt.s32.f32 %v1831
      %v1835 = vpack.c.bf16 %v1833, %v1832
      %v1836 = vpack.c.bf16 %v1834, %v1834
      %v1837 = vsel %vm1823, 1, 0
      %v1838 = vsel %vm1824, 1, 0
      %v1839 = vcvt.s32.f32 %v1837
      %v1840 = vcvt.s32.f32 %v1838
      %v1841 = vpack.c.bf16 %v1840, %v1839
      %v1842 = vmul.bf16 %v370, %v1835
      %v1843 = vmul.bf16 %v371, %v1835
      %v1844 = vmul.bf16 %v372, %v1836
      %v1846 = vsel %vm542, %v1844, 0
      %1848 = vmatprep.subr.bf16.mxu0 %v1843
      %1849 = vmatpush1.bf16.msra.mxu0 %v1842
      %1850 = vmatprep.subr.bf16.mxu0 %v1846
      %1851 = vmatpush1.bf16.msra.mxu0 %v1846
      %1852 = vmatprep.subr.bf16.mxu0 0
      %1853 = vmatpush1.bf16.msra.mxu0 0
      %1854 = vmatprep.subr.bf16.mxu0 0
      %1855 = vmatpush1.bf16.msra.mxu0 0
      %1856 = vmatprep.subr.bf16.mxu0 0
      %1857 = vmatpush1.bf16.msra.mxu0 0
      %1858 = vmatprep.subr.bf16.mxu0 0
      %1859 = vmatpush1.bf16.msra.mxu0 0
      %1860 = vmatprep.subr.bf16.mxu0 0
      %1861 = vmatpush1.bf16.msra.mxu0 0
      %1862 = vmatprep.subr.bf16.mxu0 0
      %1863 = vmatpush1.bf16.msra.mxu0 0
      %1864 = vmatprep.subr.bf16.mxu0 0
      %1865 = vmatpush1.bf16.msra.mxu0 0
      %1866 = vmatprep.subr.bf16.mxu0 0
      %1867 = vmatpush1.bf16.msra.mxu0 0
      %1868 = vmatprep.subr.bf16.mxu0 0
      %1869 = vmatpush1.bf16.msra.mxu0 0
      %1870 = vmatprep.subr.bf16.mxu0 0
      %1871 = vmatpush1.bf16.msra.mxu0 0
      %1872 = vmatprep.subr.bf16.mxu0 0
      %1873 = vmatpush1.bf16.msra.mxu0 0
      %1874 = vmatprep.subr.bf16.mxu0 0
      %1875 = vmatpush1.bf16.msra.mxu0 0
      %1876 = vmatprep.subr.bf16.mxu0 0
      %1877 = vmatpush1.bf16.msra.mxu0 0
      %1878 = vmatprep.subr.bf16.mxu0 0
      %1879 = vmatpush1.bf16.msra.mxu0 0
      %1880 = vmatprep.mubr.bf16.mxu0 0
      %1881 = vmatmul.mubr.bf16.gmra.mrb[0].mxu0 %v495
      %v1882 = vpop.f32.mrb[0].mxu0
      %v1883 = vadd.f32 0.0, %v1882
      %v1884 = vpop.f32.mrb[0].mxu0
      %v1885 = vadd.f32 0.0, %v1884
      %v1886 = vpop.f32.mrb[0].mxu0
      %v1887 = vadd.f32 0.0, %v1886
      %v1888 = vpop.f32.mrb[0].mxu0
      %v1889 = vadd.f32 0.0, %v1888
      %1890 = vmatprep.mubr.bf16.mxu0 0
      %1891 = vmatmul.mubr.bf16.gmra.mrb[0].mxu0 %v498
      %v1892 = vpop.f32.mrb[0].mxu0
      %v1893 = vadd.f32 0.0, %v1892
      %v1894 = vpop.f32.mrb[0].mxu0
      %v1895 = vadd.f32 0.0, %v1894
      %v1896 = vpop.f32.mrb[0].mxu0
      %v1897 = vadd.f32 0.0, %v1896
      %v1898 = vpop.f32.mrb[0].mxu0
      %v1899 = vadd.f32 0.0, %v1898
      %1900 = vmatprep.mubr.bf16.mxu0 0
      %1901 = vmatmul.mubr.bf16.gmra.mrb[0].mxu0 %v501
      %v1902 = vpop.f32.mrb[0].mxu0
      %v1903 = vadd.f32 0.0, %v1902
      %v1904 = vpop.f32.mrb[0].mxu0
      %v1905 = vadd.f32 0.0, %v1904
      %v1906 = vpop.f32.mrb[0].mxu0
      %v1907 = vadd.f32 0.0, %v1906
      %v1908 = vpop.f32.mrb[0].mxu0
      %v1909 = vadd.f32 0.0, %v1908
      %1910 = vmatprep.mubr.bf16.mxu0 0
      %1911 = vmatmul.mubr.bf16.gmra.mrb[0].mxu0 %v504
      %v1912 = vpop.f32.mrb[0].mxu0
      %v1913 = vadd.f32 0.0, %v1912
      %v1914 = vpop.f32.mrb[0].mxu0
      %v1915 = vadd.f32 0.0, %v1914
      %v1916 = vpop.f32.mrb[0].mxu0
      %v1917 = vadd.f32 0.0, %v1916
      %v1918 = vpop.f32.mrb[0].mxu0
      %v1919 = vadd.f32 0.0, %v1918
      %1920 = vmatprep.mubr.bf16.mxu0 0
      %1921 = vmatmul.mubr.bf16.gmra.mrb[0].mxu0 %v507
      %v1922 = vpop.f32.mrb[0].mxu0
      %v1923 = vadd.f32 0.0, %v1922
      %v1924 = vpop.f32.mrb[0].mxu0
      %v1925 = vadd.f32 0.0, %v1924
      %v1926 = vpop.f32.mrb[0].mxu0
      %v1927 = vadd.f32 0.0, %v1926
      %v1928 = vpop.f32.mrb[0].mxu0
      %v1929 = vadd.f32 0.0, %v1928
      %1930 = vmatprep.mubr.bf16.mxu0 0
      %1931 = vmatmul.mubr.bf16.gmra.mrb[0].mxu0 %v510
      %v1932 = vpop.f32.mrb[0].mxu0
      %v1933 = vadd.f32 0.0, %v1932
      %v1934 = vpop.f32.mrb[0].mxu0
      %v1935 = vadd.f32 0.0, %v1934
      %v1936 = vpop.f32.mrb[0].mxu0
      %v1937 = vadd.f32 0.0, %v1936
      %v1938 = vpop.f32.mrb[0].mxu0
      %v1939 = vadd.f32 0.0, %v1938
      %1940 = vmatprep.mubr.bf16.mxu0 0
      %1941 = vmatmul.mubr.bf16.gmra.mrb[0].mxu0 %v513
      %v1942 = vpop.f32.mrb[0].mxu0
      %v1943 = vadd.f32 0.0, %v1942
      %v1944 = vpop.f32.mrb[0].mxu0
      %v1945 = vadd.f32 0.0, %v1944
      %v1946 = vpop.f32.mrb[0].mxu0
      %v1947 = vadd.f32 0.0, %v1946
      %v1948 = vpop.f32.mrb[0].mxu0
      %v1949 = vadd.f32 0.0, %v1948
      %1950 = vmatprep.mubr.bf16.mxu0 0
      %1951 = vmatmul.mubr.bf16.gmra.mrb[0].mxu0 %v516
      %v1952 = vpop.f32.mrb[0].mxu0
      %v1953 = vadd.f32 0.0, %v1952
      %v1954 = vpop.f32.mrb[0].mxu0
      %v1955 = vadd.f32 0.0, %v1954
      %v1956 = vpop.f32.mrb[0].mxu0
      %v1957 = vadd.f32 0.0, %v1956
      %v1958 = vpop.f32.mrb[0].mxu0
      %v1959 = vadd.f32 0.0, %v1958
      %1960 = vmatprep.mubr.bf16.mxu0 0
      %1961 = vmatmul.mubr.bf16.gmra.mrb[0].mxu0 %v519
      %v1962 = vpop.f32.mrb[0].mxu0
      %v1963 = vadd.f32 0.0, %v1962
      %v1964 = vpop.f32.mrb[0].mxu0
      %v1965 = vadd.f32 0.0, %v1964
      %v1966 = vpop.f32.mrb[0].mxu0
      %v1967 = vadd.f32 0.0, %v1966
      %v1968 = vpop.f32.mrb[0].mxu0
      %v1969 = vadd.f32 0.0, %v1968
      %1970 = vmatprep.mubr.bf16.mxu0 0
      %1971 = vmatmul.mubr.bf16.gmra.mrb[0].mxu0 %v522
      %v1972 = vpop.f32.mrb[0].mxu0
      %v1973 = vadd.f32 0.0, %v1972
      %v1974 = vpop.f32.mrb[0].mxu0
      %v1975 = vadd.f32 0.0, %v1974
      %v1976 = vpop.f32.mrb[0].mxu0
      %v1977 = vadd.f32 0.0, %v1976
      %v1978 = vpop.f32.mrb[0].mxu0
      %v1979 = vadd.f32 0.0, %v1978
      %1980 = vmatprep.mubr.bf16.mxu0 0
      %1981 = vmatmul.mubr.bf16.gmra.mrb[0].mxu0 %v525
      %v1982 = vpop.f32.mrb[0].mxu0
      %v1983 = vadd.f32 0.0, %v1982
      %v1984 = vpop.f32.mrb[0].mxu0
      %v1985 = vadd.f32 0.0, %v1984
      %v1986 = vpop.f32.mrb[0].mxu0
      %v1987 = vadd.f32 0.0, %v1986
      %v1988 = vpop.f32.mrb[0].mxu0
      %v1989 = vadd.f32 0.0, %v1988
      %1990 = vmatprep.mubr.bf16.mxu0 0
      %1991 = vmatmul.mubr.bf16.gmra.mrb[0].mxu0 %v528
      %v1992 = vpop.f32.mrb[0].mxu0
      %v1993 = vadd.f32 0.0, %v1992
      %v1994 = vpop.f32.mrb[0].mxu0
      %v1995 = vadd.f32 0.0, %v1994
      %v1996 = vpop.f32.mrb[0].mxu0
      %v1997 = vadd.f32 0.0, %v1996
      %v1998 = vpop.f32.mrb[0].mxu0
      %v1999 = vadd.f32 0.0, %v1998
      %2000 = vmatprep.mubr.bf16.mxu0 0
      %2001 = vmatmul.mubr.bf16.gmra.mrb[0].mxu0 %v531
      %v2002 = vpop.f32.mrb[0].mxu0
      %v2003 = vadd.f32 0.0, %v2002
      %v2004 = vpop.f32.mrb[0].mxu0
      %v2005 = vadd.f32 0.0, %v2004
      %v2006 = vpop.f32.mrb[0].mxu0
      %v2007 = vadd.f32 0.0, %v2006
      %v2008 = vpop.f32.mrb[0].mxu0
      %v2009 = vadd.f32 0.0, %v2008
      %2010 = vmatprep.mubr.bf16.mxu0 0
      %2011 = vmatmul.mubr.bf16.gmra.mrb[0].mxu0 %v534
      %v2012 = vpop.f32.mrb[0].mxu0
      %v2013 = vadd.f32 0.0, %v2012
      %v2014 = vpop.f32.mrb[0].mxu0
      %v2015 = vadd.f32 0.0, %v2014
      %v2016 = vpop.f32.mrb[0].mxu0
      %v2017 = vadd.f32 0.0, %v2016
      %v2018 = vpop.f32.mrb[0].mxu0
      %v2019 = vadd.f32 0.0, %v2018
      %2020 = vmatprep.mubr.bf16.mxu0 0
      %2021 = vmatmul.mubr.bf16.gmra.mrb[0].mxu0 %v537
      %v2022 = vpop.f32.mrb[0].mxu0
      %v2023 = vadd.f32 0.0, %v2022
      %v2024 = vpop.f32.mrb[0].mxu0
      %v2025 = vadd.f32 0.0, %v2024
      %v2026 = vpop.f32.mrb[0].mxu0
      %v2027 = vadd.f32 0.0, %v2026
      %v2028 = vpop.f32.mrb[0].mxu0
      %v2029 = vadd.f32 0.0, %v2028
      %2030 = vmatprep.mubr.bf16.mxu0 0
      %2031 = vmatmul.mubr.bf16.gmra.mrb[0].mxu0 %v540
      %v2032 = vpop.f32.mrb[0].mxu0
      %v2033 = vadd.f32 0.0, %v2032
      %v2034 = vpop.f32.mrb[0].mxu0
      %v2035 = vadd.f32 0.0, %v2034
      %v2036 = vpop.f32.mrb[0].mxu0
      %v2037 = vadd.f32 0.0, %v2036
      %v2038 = vpop.f32.mrb[0].mxu0
      %v2039 = vadd.f32 0.0, %v2038
      %2040 = vdwg.mxu0
      %v2041 = vmax.f32 %v1883, %v1893
      %v2042 = vmax.f32 %v1887, %v1897
      %v2043 = vmax.f32 %v2041, %v1903
      %v2044 = vmax.f32 %v2042, %v1907
      %v2045 = vmax.f32 %v2043, %v1913
      %v2046 = vmax.f32 %v2044, %v1917
      %v2047 = vmax.f32 %v2045, %v1923
      %v2048 = vmax.f32 %v2046, %v1927
      %v2049 = vmax.f32 %v2047, %v1933
      %v2050 = vmax.f32 %v2048, %v1937
      %v2051 = vmax.f32 %v2049, %v1943
      %v2052 = vmax.f32 %v2050, %v1947
      %v2053 = vmax.f32 %v2051, %v1953
      %v2054 = vmax.f32 %v2052, %v1957
      %v2055 = vmax.f32 %v2053, %v1963
      %v2056 = vmax.f32 %v2054, %v1967
      %v2057 = vmax.f32 %v2055, %v1973
      %v2058 = vmax.f32 %v2056, %v1977
      %v2059 = vmax.f32 %v2057, %v1983
      %v2060 = vmax.f32 %v2058, %v1987
      %v2061 = vmax.f32 %v2059, %v1993
      %v2062 = vmax.f32 %v2060, %v1997
      %v2063 = vmax.f32 %v2061, %v2003
      %v2064 = vmax.f32 %v2062, %v2007
      %v2065 = vmax.f32 %v2063, %v2013
      %v2066 = vmax.f32 %v2064, %v2017
      %v2067 = vmax.f32 %v2065, %v2023
      %v2068 = vmax.f32 %v2066, %v2027
      %v2069 = vmax.f32 %v2067, %v2033
      %v2070 = vmax.f32 %v2068, %v2037
      %v2071 = vmax.f32 %v2069, %v2070
      %v2072 = vrot.slane %v2071, 4
      %v2073 = vmax.f32 %v2071, %v2072
      %v2074 = vrot.slane %v2073, 2
      %v2075 = vmax.f32 %v2073, %v2074
      %v2076 = vrot.slane %v2075, 1
      %v2077 = vmax.f32 %v2075, %v2076
      %v2078 = vmax.f32 %v1885, %v1895
      %v2079 = vmax.f32 %v1889, %v1899
      %v2080 = vmax.f32 %v2078, %v1905
      %v2081 = vmax.f32 %v2079, %v1909
      %v2082 = vmax.f32 %v2080, %v1915
      %v2083 = vmax.f32 %v2081, %v1919
      %v2084 = vmax.f32 %v2082, %v1925
      %v2085 = vmax.f32 %v2083, %v1929
      %v2086 = vmax.f32 %v2084, %v1935
      %v2087 = vmax.f32 %v2085, %v1939
      %v2088 = vmax.f32 %v2086, %v1945
      %v2089 = vmax.f32 %v2087, %v1949
      %v2090 = vmax.f32 %v2088, %v1955
      %v2091 = vmax.f32 %v2089, %v1959
      %v2092 = vmax.f32 %v2090, %v1965
      %v2093 = vmax.f32 %v2091, %v1969
      %v2094 = vmax.f32 %v2092, %v1975
      %v2095 = vmax.f32 %v2093, %v1979
      %v2096 = vmax.f32 %v2094, %v1985
      %v2097 = vmax.f32 %v2095, %v1989
      %v2098 = vmax.f32 %v2096, %v1995
      %v2099 = vmax.f32 %v2097, %v1999
      %v2100 = vmax.f32 %v2098, %v2005
      %v2101 = vmax.f32 %v2099, %v2009
      %v2102 = vmax.f32 %v2100, %v2015
      %v2103 = vmax.f32 %v2101, %v2019
      %v2104 = vmax.f32 %v2102, %v2025
      %v2105 = vmax.f32 %v2103, %v2029
      %v2106 = vmax.f32 %v2104, %v2035
      %v2107 = vmax.f32 %v2105, %v2039
      %v2108 = vmax.f32 %v2106, %v2107
      %v2109 = vrot.slane %v2108, 4
      %v2110 = vmax.f32 %v2108, %v2109
      %v2111 = vrot.slane %v2110, 2
      %v2112 = vmax.f32 %v2110, %v2111
      %v2113 = vrot.slane %v2112, 1
      %v2114 = vmax.f32 %v2112, %v2113
      %v2115 = vsub.f32 %v1883, %v2077
      %v2116 = vsub.f32 %v1885, %v2114
      %v2117 = vsub.f32 %v1887, %v2077
      %v2118 = vsub.f32 %v1889, %v2114
      %v2119 = vsub.f32 %v1893, %v2077
      %v2120 = vsub.f32 %v1895, %v2114
      %v2121 = vsub.f32 %v1897, %v2077
      %v2122 = vsub.f32 %v1899, %v2114
      %v2123 = vsub.f32 %v1903, %v2077
      %v2124 = vsub.f32 %v1905, %v2114
      %v2125 = vsub.f32 %v1907, %v2077
      %v2126 = vsub.f32 %v1909, %v2114
      %v2127 = vsub.f32 %v1913, %v2077
      %v2128 = vsub.f32 %v1915, %v2114
      %v2129 = vsub.f32 %v1917, %v2077
      %v2130 = vsub.f32 %v1919, %v2114
      %v2131 = vsub.f32 %v1923, %v2077
      %v2132 = vsub.f32 %v1925, %v2114
      %v2133 = vsub.f32 %v1927, %v2077
      %v2134 = vsub.f32 %v1929, %v2114
      %v2135 = vsub.f32 %v1933, %v2077
      %v2136 = vsub.f32 %v1935, %v2114
      %v2137 = vsub.f32 %v1937, %v2077
      %v2138 = vsub.f32 %v1939, %v2114
      %v2139 = vsub.f32 %v1943, %v2077
      %v2140 = vsub.f32 %v1945, %v2114
      %v2141 = vsub.f32 %v1947, %v2077
      %v2142 = vsub.f32 %v1949, %v2114
      %v2143 = vsub.f32 %v1953, %v2077
      %v2144 = vsub.f32 %v1955, %v2114
      %v2145 = vsub.f32 %v1957, %v2077
      %v2146 = vsub.f32 %v1959, %v2114
      %v2147 = vsub.f32 %v1963, %v2077
      %v2148 = vsub.f32 %v1965, %v2114
      %v2149 = vsub.f32 %v1967, %v2077
      %v2150 = vsub.f32 %v1969, %v2114
      %v2151 = vsub.f32 %v1973, %v2077
      %v2152 = vsub.f32 %v1975, %v2114
      %v2153 = vsub.f32 %v1977, %v2077
      %v2154 = vsub.f32 %v1979, %v2114
      %v2155 = vsub.f32 %v1983, %v2077
      %v2156 = vsub.f32 %v1985, %v2114
      %v2157 = vsub.f32 %v1987, %v2077
      %v2158 = vsub.f32 %v1989, %v2114
      %v2159 = vsub.f32 %v1993, %v2077
      %v2160 = vsub.f32 %v1995, %v2114
      %v2161 = vsub.f32 %v1997, %v2077
      %v2162 = vsub.f32 %v1999, %v2114
      %v2163 = vsub.f32 %v2003, %v2077
      %v2164 = vsub.f32 %v2005, %v2114
      %v2165 = vsub.f32 %v2007, %v2077
      %v2166 = vsub.f32 %v2009, %v2114
      %v2167 = vsub.f32 %v2013, %v2077
      %v2168 = vsub.f32 %v2015, %v2114
      %v2169 = vsub.f32 %v2017, %v2077
      %v2170 = vsub.f32 %v2019, %v2114
      %v2171 = vsub.f32 %v2023, %v2077
      %v2172 = vsub.f32 %v2025, %v2114
      %v2173 = vsub.f32 %v2027, %v2077
      %v2174 = vsub.f32 %v2029, %v2114
      %v2175 = vsub.f32 %v2033, %v2077
      %v2176 = vsub.f32 %v2035, %v2114
      %v2177 = vsub.f32 %v2037, %v2077
      %v2178 = vsub.f32 %v2039, %v2114
      %v2179 = vmul.f32 %v2115, 1.442695
      %v2180 = vpow.pop %v2179
      %v2181 = vmul.f32 %v2116, 1.442695
      %v2182 = vpow.pop %v2181
      %v2183 = vmul.f32 %v2117, 1.442695
      %v2184 = vpow.pop %v2183
      %v2185 = vmul.f32 %v2118, 1.442695
      %v2186 = vpow.pop %v2185
      %v2187 = vmul.f32 %v2119, 1.442695
      %v2188 = vpow.pop %v2187
      %v2189 = vmul.f32 %v2120, 1.442695
      %v2190 = vpow.pop %v2189
      %v2191 = vmul.f32 %v2121, 1.442695
      %v2192 = vpow.pop %v2191
      %v2193 = vmul.f32 %v2122, 1.442695
      %v2194 = vpow.pop %v2193
      %v2195 = vmul.f32 %v2123, 1.442695
      %v2196 = vpow.pop %v2195
      %v2197 = vmul.f32 %v2124, 1.442695
      %v2198 = vpow.pop %v2197
      %v2199 = vmul.f32 %v2125, 1.442695
      %v2200 = vpow.pop %v2199
      %v2201 = vmul.f32 %v2126, 1.442695
      %v2202 = vpow.pop %v2201
      %v2203 = vmul.f32 %v2127, 1.442695
      %v2204 = vpow.pop %v2203
      %v2205 = vmul.f32 %v2128, 1.442695
      %v2206 = vpow.pop %v2205
      %v2207 = vmul.f32 %v2129, 1.442695
      %v2208 = vpow.pop %v2207
      %v2209 = vmul.f32 %v2130, 1.442695
      %v2210 = vpow.pop %v2209
      %v2211 = vmul.f32 %v2131, 1.442695
      %v2212 = vpow.pop %v2211
      %v2213 = vmul.f32 %v2132, 1.442695
      %v2214 = vpow.pop %v2213
      %v2215 = vmul.f32 %v2133, 1.442695
      %v2216 = vpow.pop %v2215
      %v2217 = vmul.f32 %v2134, 1.442695
      %v2218 = vpow.pop %v2217
      %v2219 = vmul.f32 %v2135, 1.442695
      %v2220 = vpow.pop %v2219
      %v2221 = vmul.f32 %v2136, 1.442695
      %v2222 = vpow.pop %v2221
      %v2223 = vmul.f32 %v2137, 1.442695
      %v2224 = vpow.pop %v2223
      %v2225 = vmul.f32 %v2138, 1.442695
      %v2226 = vpow.pop %v2225
      %v2227 = vmul.f32 %v2139, 1.442695
      %v2228 = vpow.pop %v2227
      %v2229 = vmul.f32 %v2140, 1.442695
      %v2230 = vpow.pop %v2229
      %v2231 = vmul.f32 %v2141, 1.442695
      %v2232 = vpow.pop %v2231
      %v2233 = vmul.f32 %v2142, 1.442695
      %v2234 = vpow.pop %v2233
      %v2235 = vmul.f32 %v2143, 1.442695
      %v2236 = vpow.pop %v2235
      %v2237 = vmul.f32 %v2144, 1.442695
      %v2238 = vpow.pop %v2237
      %v2239 = vmul.f32 %v2145, 1.442695
      %v2240 = vpow.pop %v2239
      %v2241 = vmul.f32 %v2146, 1.442695
      %v2242 = vpow.pop %v2241
      %v2243 = vmul.f32 %v2147, 1.442695
      %v2244 = vpow.pop %v2243
      %v2245 = vmul.f32 %v2148, 1.442695
      %v2246 = vpow.pop %v2245
      %v2247 = vmul.f32 %v2149, 1.442695
      %v2248 = vpow.pop %v2247
      %v2249 = vmul.f32 %v2150, 1.442695
      %v2250 = vpow.pop %v2249
      %v2251 = vmul.f32 %v2151, 1.442695
      %v2252 = vpow.pop %v2251
      %v2253 = vmul.f32 %v2152, 1.442695
      %v2254 = vpow.pop %v2253
      %v2255 = vmul.f32 %v2153, 1.442695
      %v2256 = vpow.pop %v2255
      %v2257 = vmul.f32 %v2154, 1.442695
      %v2258 = vpow.pop %v2257
      %v2259 = vmul.f32 %v2155, 1.442695
      %v2260 = vpow.pop %v2259
      %v2261 = vmul.f32 %v2156, 1.442695
      %v2262 = vpow.pop %v2261
      %v2263 = vmul.f32 %v2157, 1.442695
      %v2264 = vpow.pop %v2263
      %v2265 = vmul.f32 %v2158, 1.442695
      %v2266 = vpow.pop %v2265
      %v2267 = vmul.f32 %v2159, 1.442695
      %v2268 = vpow.pop %v2267
      %v2269 = vmul.f32 %v2160, 1.442695
      %v2270 = vpow.pop %v2269
      %v2271 = vmul.f32 %v2161, 1.442695
      %v2272 = vpow.pop %v2271
      %v2273 = vmul.f32 %v2162, 1.442695
      %v2274 = vpow.pop %v2273
      %v2275 = vmul.f32 %v2163, 1.442695
      %v2276 = vpow.pop %v2275
      %v2277 = vmul.f32 %v2164, 1.442695
      %v2278 = vpow.pop %v2277
      %v2279 = vmul.f32 %v2165, 1.442695
      %v2280 = vpow.pop %v2279
      %v2281 = vmul.f32 %v2166, 1.442695
      %v2282 = vpow.pop %v2281
      %v2283 = vmul.f32 %v2167, 1.442695
      %v2284 = vpow.pop %v2283
      %v2285 = vmul.f32 %v2168, 1.442695
      %v2286 = vpow.pop %v2285
      %v2287 = vmul.f32 %v2169, 1.442695
      %v2288 = vpow.pop %v2287
      %v2289 = vmul.f32 %v2170, 1.442695
      %v2290 = vpow.pop %v2289
      %v2291 = vmul.f32 %v2171, 1.442695
      %v2292 = vpow.pop %v2291
      %v2293 = vmul.f32 %v2172, 1.442695
      %v2294 = vpow.pop %v2293
      %v2295 = vmul.f32 %v2173, 1.442695
      %v2296 = vpow.pop %v2295
      %v2297 = vmul.f32 %v2174, 1.442695
      %v2298 = vpow.pop %v2297
      %v2299 = vmul.f32 %v2175, 1.442695
      %v2300 = vpow.pop %v2299
      %v2301 = vmul.f32 %v2176, 1.442695
      %v2302 = vpow.pop %v2301
      %v2303 = vmul.f32 %v2177, 1.442695
      %v2304 = vpow.pop %v2303
      %v2305 = vmul.f32 %v2178, 1.442695
      %v2306 = vpow.pop %v2305
      %v2307 = vadd.f32 %v2180, %v2184
      %v2308 = vadd.f32 %v2307, %v2188
      %v2309 = vadd.f32 %v2308, %v2192
      %v2310 = vadd.f32 %v2309, %v2196
      %v2311 = vadd.f32 %v2310, %v2200
      %v2312 = vadd.f32 %v2311, %v2204
      %v2313 = vadd.f32 %v2312, %v2208
      %v2314 = vadd.f32 %v2313, %v2212
      %v2315 = vadd.f32 %v2314, %v2216
      %v2316 = vadd.f32 %v2315, %v2220
      %v2317 = vadd.f32 %v2316, %v2224
      %v2318 = vadd.f32 %v2317, %v2228
      %v2319 = vadd.f32 %v2318, %v2232
      %v2320 = vadd.f32 %v2319, %v2236
      %v2321 = vadd.f32 %v2320, %v2240
      %v2322 = vadd.f32 %v2321, %v2244
      %v2323 = vadd.f32 %v2322, %v2248
      %v2324 = vadd.f32 %v2323, %v2252
      %v2325 = vadd.f32 %v2324, %v2256
      %v2326 = vadd.f32 %v2325, %v2260
      %v2327 = vadd.f32 %v2326, %v2264
      %v2328 = vadd.f32 %v2327, %v2268
      %v2329 = vadd.f32 %v2328, %v2272
      %v2330 = vadd.f32 %v2329, %v2276
      %v2331 = vadd.f32 %v2330, %v2280
      %v2332 = vadd.f32 %v2331, %v2284
      %v2333 = vadd.f32 %v2332, %v2288
      %v2334 = vadd.f32 %v2333, %v2292
      %v2335 = vadd.f32 %v2334, %v2296
      %v2336 = vadd.f32 %v2335, %v2300
      %v2337 = vadd.f32 %v2336, %v2304
      %v2338 = vrot.slane %v2337, 4
      %v2339 = vadd.f32 %v2337, %v2338
      %v2340 = vrot.slane %v2339, 2
      %v2341 = vadd.f32 %v2339, %v2340
      %v2342 = vrot.slane %v2341, 1
      %v2343 = vadd.f32 %v2341, %v2342
      %v2344 = vadd.f32 %v2182, %v2186
      %v2345 = vadd.f32 %v2344, %v2190
      %v2346 = vadd.f32 %v2345, %v2194
      %v2347 = vadd.f32 %v2346, %v2198
      %v2348 = vadd.f32 %v2347, %v2202
      %v2349 = vadd.f32 %v2348, %v2206
      %v2350 = vadd.f32 %v2349, %v2210
      %v2351 = vadd.f32 %v2350, %v2214
      %v2352 = vadd.f32 %v2351, %v2218
      %v2353 = vadd.f32 %v2352, %v2222
      %v2354 = vadd.f32 %v2353, %v2226
      %v2355 = vadd.f32 %v2354, %v2230
      %v2356 = vadd.f32 %v2355, %v2234
      %v2357 = vadd.f32 %v2356, %v2238
      %v2358 = vadd.f32 %v2357, %v2242
      %v2359 = vadd.f32 %v2358, %v2246
      %v2360 = vadd.f32 %v2359, %v2250
      %v2361 = vadd.f32 %v2360, %v2254
      %v2362 = vadd.f32 %v2361, %v2258
      %v2363 = vadd.f32 %v2362, %v2262
      %v2364 = vadd.f32 %v2363, %v2266
      %v2365 = vadd.f32 %v2364, %v2270
      %v2366 = vadd.f32 %v2365, %v2274
      %v2367 = vadd.f32 %v2366, %v2278
      %v2368 = vadd.f32 %v2367, %v2282
      %v2369 = vadd.f32 %v2368, %v2286
      %v2370 = vadd.f32 %v2369, %v2290
      %v2371 = vadd.f32 %v2370, %v2294
      %v2372 = vadd.f32 %v2371, %v2298
      %v2373 = vadd.f32 %v2372, %v2302
      %v2374 = vadd.f32 %v2373, %v2306
      %v2375 = vrot.slane %v2374, 4
      %v2376 = vadd.f32 %v2374, %v2375
      %v2377 = vrot.slane %v2376, 2
      %v2378 = vadd.f32 %v2376, %v2377
      %v2379 = vrot.slane %v2378, 1
      %v2380 = vadd.f32 %v2378, %v2379
      %v2381 = vrcp.pop %v2343
      %v2382 = vrcp.pop %v2380
      %v2383 = vmul.bf16 %v453, %v1841
      %v2384 = vmul.bf16 %v454, %v1841
      %v2385 = vpack.c.bf16 %v2184, %v2180
      %v2386 = vpack.c.bf16 %v2186, %v2182
      %v2387 = vpack.c.bf16 %v2192, %v2188
      %v2388 = vpack.c.bf16 %v2194, %v2190
      %v2389 = vpack.c.bf16 %v2200, %v2196
      %v2390 = vpack.c.bf16 %v2202, %v2198
      %v2391 = vpack.c.bf16 %v2208, %v2204
      %v2392 = vpack.c.bf16 %v2210, %v2206
      %v2393 = vpack.c.bf16 %v2216, %v2212
      %v2394 = vpack.c.bf16 %v2218, %v2214
      %v2395 = vpack.c.bf16 %v2224, %v2220
      %v2396 = vpack.c.bf16 %v2226, %v2222
      %v2397 = vpack.c.bf16 %v2232, %v2228
      %v2398 = vpack.c.bf16 %v2234, %v2230
      %v2399 = vpack.c.bf16 %v2240, %v2236
      %v2400 = vpack.c.bf16 %v2242, %v2238
      %v2401 = vpack.c.bf16 %v2248, %v2244
      %v2402 = vpack.c.bf16 %v2250, %v2246
      %v2403 = vpack.c.bf16 %v2256, %v2252
      %v2404 = vpack.c.bf16 %v2258, %v2254
      %v2405 = vpack.c.bf16 %v2264, %v2260
      %v2406 = vpack.c.bf16 %v2266, %v2262
      %v2407 = vpack.c.bf16 %v2272, %v2268
      %v2408 = vpack.c.bf16 %v2274, %v2270
      %v2409 = vpack.c.bf16 %v2280, %v2276
      %v2410 = vpack.c.bf16 %v2282, %v2278
      %v2411 = vpack.c.bf16 %v2288, %v2284
      %v2412 = vpack.c.bf16 %v2290, %v2286
      %v2413 = vpack.c.bf16 %v2296, %v2292
      %v2414 = vpack.c.bf16 %v2298, %v2294
      %v2415 = vpack.c.bf16 %v2304, %v2300
      %v2416 = vpack.c.bf16 %v2306, %v2302
      %2417 = vmatprep.subr.bf16.mxu0 %v2386
      %2418 = vmatpush1.bf16.msra.mxu0 %v2385
      %2419 = vmatprep.subr.bf16.mxu0 %v2388
      %2420 = vmatpush1.bf16.msra.mxu0 %v2387
      %2421 = vmatprep.subr.bf16.mxu0 %v2390
      %2422 = vmatpush1.bf16.msra.mxu0 %v2389
      %2423 = vmatprep.subr.bf16.mxu0 %v2392
      %2424 = vmatpush1.bf16.msra.mxu0 %v2391
      %2425 = vmatprep.subr.bf16.mxu0 %v2394
      %2426 = vmatpush1.bf16.msra.mxu0 %v2393
      %2427 = vmatprep.subr.bf16.mxu0 %v2396
      %2428 = vmatpush1.bf16.msra.mxu0 %v2395
      %2429 = vmatprep.subr.bf16.mxu0 %v2398
      %2430 = vmatpush1.bf16.msra.mxu0 %v2397
      %2431 = vmatprep.subr.bf16.mxu0 %v2400
      %2432 = vmatpush1.bf16.msra.mxu0 %v2399
      %2433 = vmatprep.subr.bf16.mxu0 %v2402
      %2434 = vmatpush1.bf16.msra.mxu0 %v2401
      %2435 = vmatprep.subr.bf16.mxu0 %v2404
      %2436 = vmatpush1.bf16.msra.mxu0 %v2403
      %2437 = vmatprep.subr.bf16.mxu0 %v2406
      %2438 = vmatpush1.bf16.msra.mxu0 %v2405
      %2439 = vmatprep.subr.bf16.mxu0 %v2408
      %2440 = vmatpush1.bf16.msra.mxu0 %v2407
      %2441 = vmatprep.subr.bf16.mxu0 %v2410
      %2442 = vmatpush1.bf16.msra.mxu0 %v2409
      %2443 = vmatprep.subr.bf16.mxu0 %v2412
      %2444 = vmatpush1.bf16.msra.mxu0 %v2411
      %2445 = vmatprep.subr.bf16.mxu0 %v2414
      %2446 = vmatpush1.bf16.msra.mxu0 %v2413
      %2447 = vmatprep.subr.bf16.mxu0 %v2416
      %2448 = vmatpush1.bf16.msra.mxu0 %v2415
      %2449 = vmatprep.mubr.bf16.mxu0 %v2384
      %2450 = vmatmul.mubr.bf16.gmra.mrb[0].mxu0 %v2383
      %v2451 = vpop.f32.mrb[0].mxu0
      %v2452 = vadd.f32 0.0, %v2451
      %v2453 = vpop.f32.mrb[0].mxu0
      %v2454 = vadd.f32 0.0, %v2453
      %v2455 = vpop.f32.mrb[0].mxu0
      %v2456 = vadd.f32 0.0, %v2455
      %v2457 = vpop.f32.mrb[0].mxu0
      %v2458 = vadd.f32 0.0, %v2457
      %2459 = vdwg.mxu0
      %v2460 = vmul.f32 %v2452, %v2381
      %v2461 = vmul.f32 %v2454, %v2382
      %v2462 = vmul.f32 %v2456, %v2381
      %v2463 = vmul.f32 %v2458, %v2382
      %v2464 = vadd.f32 %v1813, %v2460
      %v2465 = vadd.f32 %v1814, %v2461
      %v2466 = vadd.f32 %v1815, %v2462
      %v2467 = vadd.f32 %v1816, %v2463
      %vm2468 = vcmp.ge.s32.totalorder %v364, 6
      %vm2469 = vcmp.ge.s32.totalorder %v455, 6
      %vm2470 = vcmp.ge.s32.totalorder %v456, 6
      %vm2471 = vcmp.lt.s32.totalorder %v364, 8
      %vm2472 = vcmp.lt.s32.totalorder %v455, 8
      %vm2473 = vcmp.lt.s32.totalorder %v456, 8
      %vm2474 = vmand %vm2468, %vm2471
      %vm2475 = vmand %vm2469, %vm2472
      %vm2476 = vmand %vm2470, %vm2473
      %vm2477 = vmor %vm2474, %vm471
      %vm2478 = vmor %vm2475, %vm472
      %vm2479 = vmor %vm2476, %vm473
      %v2480 = vsel %vm2477, 1, 0
      %v2481 = vsel %vm2478, 1, 0
      %v2482 = vsel %vm2479, 1, 0
      %v2483 = vcvt.s32.f32 %v2480
      %v2484 = vcvt.s32.f32 %v2481
      %v2485 = vcvt.s32.f32 %v2482
      %v2486 = vpack.c.bf16 %v2484, %v2483
      %v2487 = vpack.c.bf16 %v2485, %v2485
      %v2488 = vsel %vm2474, 1, 0
      %v2489 = vsel %vm2475, 1, 0
      %v2490 = vcvt.s32.f32 %v2488
      %v2491 = vcvt.s32.f32 %v2489
      %v2492 = vpack.c.bf16 %v2491, %v2490
      %v2493 = vmul.bf16 %v370, %v2486
      %v2494 = vmul.bf16 %v371, %v2486
      %v2495 = vmul.bf16 %v372, %v2487
      %v2497 = vsel %vm542, %v2495, 0
      %2499 = vmatprep.subr.bf16.mxu0 %v2494
      %2500 = vmatpush1.bf16.msra.mxu0 %v2493
      %2501 = vmatprep.subr.bf16.mxu0 %v2497
      %2502 = vmatpush1.bf16.msra.mxu0 %v2497
      %2503 = vmatprep.subr.bf16.mxu0 0
      %2504 = vmatpush1.bf16.msra.mxu0 0
      %2505 = vmatprep.subr.bf16.mxu0 0
      %2506 = vmatpush1.bf16.msra.mxu0 0
      %2507 = vmatprep.subr.bf16.mxu0 0
      %2508 = vmatpush1.bf16.msra.mxu0 0
      %2509 = vmatprep.subr.bf16.mxu0 0
      %2510 = vmatpush1.bf16.msra.mxu0 0
      %2511 = vmatprep.subr.bf16.mxu0 0
      %2512 = vmatpush1.bf16.msra.mxu0 0
      %2513 = vmatprep.subr.bf16.mxu0 0
      %2514 = vmatpush1.bf16.msra.mxu0 0
      %2515 = vmatprep.subr.bf16.mxu0 0
      %2516 = vmatpush1.bf16.msra.mxu0 0
      %2517 = vmatprep.subr.bf16.mxu0 0
      %2518 = vmatpush1.bf16.msra.mxu0 0
      %2519 = vmatprep.subr.bf16.mxu0 0
      %2520 = vmatpush1.bf16.msra.mxu0 0
      %2521 = vmatprep.subr.bf16.mxu0 0
      %2522 = vmatpush1.bf16.msra.mxu0 0
      %2523 = vmatprep.subr.bf16.mxu0 0
      %2524 = vmatpush1.bf16.msra.mxu0 0
      %2525 = vmatprep.subr.bf16.mxu0 0
      %2526 = vmatpush1.bf16.msra.mxu0 0
      %2527 = vmatprep.subr.bf16.mxu0 0
      %2528 = vmatpush1.bf16.msra.mxu0 0
      %2529 = vmatprep.subr.bf16.mxu0 0
      %2530 = vmatpush1.bf16.msra.mxu0 0
      %2531 = vmatprep.mubr.bf16.mxu0 0
      %2532 = vmatmul.mubr.bf16.gmra.mrb[0].mxu0 %v495
      %v2533 = vpop.f32.mrb[0].mxu0
      %v2534 = vadd.f32 0.0, %v2533
      %v2535 = vpop.f32.mrb[0].mxu0
      %v2536 = vadd.f32 0.0, %v2535
      %v2537 = vpop.f32.mrb[0].mxu0
      %v2538 = vadd.f32 0.0, %v2537
      %v2539 = vpop.f32.mrb[0].mxu0
      %v2540 = vadd.f32 0.0, %v2539
      %2541 = vmatprep.mubr.bf16.mxu0 0
      %2542 = vmatmul.mubr.bf16.gmra.mrb[0].mxu0 %v498
      %v2543 = vpop.f32.mrb[0].mxu0
      %v2544 = vadd.f32 0.0, %v2543
      %v2545 = vpop.f32.mrb[0].mxu0
      %v2546 = vadd.f32 0.0, %v2545
      %v2547 = vpop.f32.mrb[0].mxu0
      %v2548 = vadd.f32 0.0, %v2547
      %v2549 = vpop.f32.mrb[0].mxu0
      %v2550 = vadd.f32 0.0, %v2549
      %2551 = vmatprep.mubr.bf16.mxu0 0
      %2552 = vmatmul.mubr.bf16.gmra.mrb[0].mxu0 %v501
      %v2553 = vpop.f32.mrb[0].mxu0
      %v2554 = vadd.f32 0.0, %v2553
      %v2555 = vpop.f32.mrb[0].mxu0
      %v2556 = vadd.f32 0.0, %v2555
      %v2557 = vpop.f32.mrb[0].mxu0
      %v2558 = vadd.f32 0.0, %v2557
      %v2559 = vpop.f32.mrb[0].mxu0
      %v2560 = vadd.f32 0.0, %v2559
      %2561 = vmatprep.mubr.bf16.mxu0 0
      %2562 = vmatmul.mubr.bf16.gmra.mrb[0].mxu0 %v504
      %v2563 = vpop.f32.mrb[0].mxu0
      %v2564 = vadd.f32 0.0, %v2563
      %v2565 = vpop.f32.mrb[0].mxu0
      %v2566 = vadd.f32 0.0, %v2565
      %v2567 = vpop.f32.mrb[0].mxu0
      %v2568 = vadd.f32 0.0, %v2567
      %v2569 = vpop.f32.mrb[0].mxu0
      %v2570 = vadd.f32 0.0, %v2569
      %2571 = vmatprep.mubr.bf16.mxu0 0
      %2572 = vmatmul.mubr.bf16.gmra.mrb[0].mxu0 %v507
      %v2573 = vpop.f32.mrb[0].mxu0
      %v2574 = vadd.f32 0.0, %v2573
      %v2575 = vpop.f32.mrb[0].mxu0
      %v2576 = vadd.f32 0.0, %v2575
      %v2577 = vpop.f32.mrb[0].mxu0
      %v2578 = vadd.f32 0.0, %v2577
      %v2579 = vpop.f32.mrb[0].mxu0
      %v2580 = vadd.f32 0.0, %v2579
      %2581 = vmatprep.mubr.bf16.mxu0 0
      %2582 = vmatmul.mubr.bf16.gmra.mrb[0].mxu0 %v510
      %v2583 = vpop.f32.mrb[0].mxu0
      %v2584 = vadd.f32 0.0, %v2583
      %v2585 = vpop.f32.mrb[0].mxu0
      %v2586 = vadd.f32 0.0, %v2585
      %v2587 = vpop.f32.mrb[0].mxu0
      %v2588 = vadd.f32 0.0, %v2587
      %v2589 = vpop.f32.mrb[0].mxu0
      %v2590 = vadd.f32 0.0, %v2589
      %2591 = vmatprep.mubr.bf16.mxu0 0
      %2592 = vmatmul.mubr.bf16.gmra.mrb[0].mxu0 %v513
      %v2593 = vpop.f32.mrb[0].mxu0
      %v2594 = vadd.f32 0.0, %v2593
      %v2595 = vpop.f32.mrb[0].mxu0
      %v2596 = vadd.f32 0.0, %v2595
      %v2597 = vpop.f32.mrb[0].mxu0
      %v2598 = vadd.f32 0.0, %v2597
      %v2599 = vpop.f32.mrb[0].mxu0
      %v2600 = vadd.f32 0.0, %v2599
      %2601 = vmatprep.mubr.bf16.mxu0 0
      %2602 = vmatmul.mubr.bf16.gmra.mrb[0].mxu0 %v516
      %v2603 = vpop.f32.mrb[0].mxu0
      %v2604 = vadd.f32 0.0, %v2603
      %v2605 = vpop.f32.mrb[0].mxu0
      %v2606 = vadd.f32 0.0, %v2605
      %v2607 = vpop.f32.mrb[0].mxu0
      %v2608 = vadd.f32 0.0, %v2607
      %v2609 = vpop.f32.mrb[0].mxu0
      %v2610 = vadd.f32 0.0, %v2609
      %2611 = vmatprep.mubr.bf16.mxu0 0
      %2612 = vmatmul.mubr.bf16.gmra.mrb[0].mxu0 %v519
      %v2613 = vpop.f32.mrb[0].mxu0
      %v2614 = vadd.f32 0.0, %v2613
      %v2615 = vpop.f32.mrb[0].mxu0
      %v2616 = vadd.f32 0.0, %v2615
      %v2617 = vpop.f32.mrb[0].mxu0
      %v2618 = vadd.f32 0.0, %v2617
      %v2619 = vpop.f32.mrb[0].mxu0
      %v2620 = vadd.f32 0.0, %v2619
      %2621 = vmatprep.mubr.bf16.mxu0 0
      %2622 = vmatmul.mubr.bf16.gmra.mrb[0].mxu0 %v522
      %v2623 = vpop.f32.mrb[0].mxu0
      %v2624 = vadd.f32 0.0, %v2623
      %v2625 = vpop.f32.mrb[0].mxu0
      %v2626 = vadd.f32 0.0, %v2625
      %v2627 = vpop.f32.mrb[0].mxu0
      %v2628 = vadd.f32 0.0, %v2627
      %v2629 = vpop.f32.mrb[0].mxu0
      %v2630 = vadd.f32 0.0, %v2629
      %2631 = vmatprep.mubr.bf16.mxu0 0
      %2632 = vmatmul.mubr.bf16.gmra.mrb[0].mxu0 %v525
      %v2633 = vpop.f32.mrb[0].mxu0
      %v2634 = vadd.f32 0.0, %v2633
      %v2635 = vpop.f32.mrb[0].mxu0
      %v2636 = vadd.f32 0.0, %v2635
      %v2637 = vpop.f32.mrb[0].mxu0
      %v2638 = vadd.f32 0.0, %v2637
      %v2639 = vpop.f32.mrb[0].mxu0
      %v2640 = vadd.f32 0.0, %v2639
      %2641 = vmatprep.mubr.bf16.mxu0 0
      %2642 = vmatmul.mubr.bf16.gmra.mrb[0].mxu0 %v528
      %v2643 = vpop.f32.mrb[0].mxu0
      %v2644 = vadd.f32 0.0, %v2643
      %v2645 = vpop.f32.mrb[0].mxu0
      %v2646 = vadd.f32 0.0, %v2645
      %v2647 = vpop.f32.mrb[0].mxu0
      %v2648 = vadd.f32 0.0, %v2647
      %v2649 = vpop.f32.mrb[0].mxu0
      %v2650 = vadd.f32 0.0, %v2649
      %2651 = vmatprep.mubr.bf16.mxu0 0
      %2652 = vmatmul.mubr.bf16.gmra.mrb[0].mxu0 %v531
      %v2653 = vpop.f32.mrb[0].mxu0
      %v2654 = vadd.f32 0.0, %v2653
      %v2655 = vpop.f32.mrb[0].mxu0
      %v2656 = vadd.f32 0.0, %v2655
      %v2657 = vpop.f32.mrb[0].mxu0
      %v2658 = vadd.f32 0.0, %v2657
      %v2659 = vpop.f32.mrb[0].mxu0
      %v2660 = vadd.f32 0.0, %v2659
      %2661 = vmatprep.mubr.bf16.mxu0 0
      %2662 = vmatmul.mubr.bf16.gmra.mrb[0].mxu0 %v534
      %v2663 = vpop.f32.mrb[0].mxu0
      %v2664 = vadd.f32 0.0, %v2663
      %v2665 = vpop.f32.mrb[0].mxu0
      %v2666 = vadd.f32 0.0, %v2665
      %v2667 = vpop.f32.mrb[0].mxu0
      %v2668 = vadd.f32 0.0, %v2667
      %v2669 = vpop.f32.mrb[0].mxu0
      %v2670 = vadd.f32 0.0, %v2669
      %2671 = vmatprep.mubr.bf16.mxu0 0
      %2672 = vmatmul.mubr.bf16.gmra.mrb[0].mxu0 %v537
      %v2673 = vpop.f32.mrb[0].mxu0
      %v2674 = vadd.f32 0.0, %v2673
      %v2675 = vpop.f32.mrb[0].mxu0
      %v2676 = vadd.f32 0.0, %v2675
      %v2677 = vpop.f32.mrb[0].mxu0
      %v2678 = vadd.f32 0.0, %v2677
      %v2679 = vpop.f32.mrb[0].mxu0
      %v2680 = vadd.f32 0.0, %v2679
      %2681 = vmatprep.mubr.bf16.mxu0 0
      %2682 = vmatmul.mubr.bf16.gmra.mrb[0].mxu0 %v540
      %v2683 = vpop.f32.mrb[0].mxu0
      %v2684 = vadd.f32 0.0, %v2683
      %v2685 = vpop.f32.mrb[0].mxu0
      %v2686 = vadd.f32 0.0, %v2685
      %v2687 = vpop.f32.mrb[0].mxu0
      %v2688 = vadd.f32 0.0, %v2687
      %v2689 = vpop.f32.mrb[0].mxu0
      %v2690 = vadd.f32 0.0, %v2689
      %2691 = vdwg.mxu0
      %v2692 = vmax.f32 %v2534, %v2544
      %v2693 = vmax.f32 %v2538, %v2548
      %v2694 = vmax.f32 %v2692, %v2554
      %v2695 = vmax.f32 %v2693, %v2558
      %v2696 = vmax.f32 %v2694, %v2564
      %v2697 = vmax.f32 %v2695, %v2568
      %v2698 = vmax.f32 %v2696, %v2574
      %v2699 = vmax.f32 %v2697, %v2578
      %v2700 = vmax.f32 %v2698, %v2584
      %v2701 = vmax.f32 %v2699, %v2588
      %v2702 = vmax.f32 %v2700, %v2594
      %v2703 = vmax.f32 %v2701, %v2598
      %v2704 = vmax.f32 %v2702, %v2604
      %v2705 = vmax.f32 %v2703, %v2608
      %v2706 = vmax.f32 %v2704, %v2614
      %v2707 = vmax.f32 %v2705, %v2618
      %v2708 = vmax.f32 %v2706, %v2624
      %v2709 = vmax.f32 %v2707, %v2628
      %v2710 = vmax.f32 %v2708, %v2634
      %v2711 = vmax.f32 %v2709, %v2638
      %v2712 = vmax.f32 %v2710, %v2644
      %v2713 = vmax.f32 %v2711, %v2648
      %v2714 = vmax.f32 %v2712, %v2654
      %v2715 = vmax.f32 %v2713, %v2658
      %v2716 = vmax.f32 %v2714, %v2664
      %v2717 = vmax.f32 %v2715, %v2668
      %v2718 = vmax.f32 %v2716, %v2674
      %v2719 = vmax.f32 %v2717, %v2678
      %v2720 = vmax.f32 %v2718, %v2684
      %v2721 = vmax.f32 %v2719, %v2688
      %v2722 = vmax.f32 %v2720, %v2721
      %v2723 = vrot.slane %v2722, 4
      %v2724 = vmax.f32 %v2722, %v2723
      %v2725 = vrot.slane %v2724, 2
      %v2726 = vmax.f32 %v2724, %v2725
      %v2727 = vrot.slane %v2726, 1
      %v2728 = vmax.f32 %v2726, %v2727
      %v2729 = vmax.f32 %v2536, %v2546
      %v2730 = vmax.f32 %v2540, %v2550
      %v2731 = vmax.f32 %v2729, %v2556
      %v2732 = vmax.f32 %v2730, %v2560
      %v2733 = vmax.f32 %v2731, %v2566
      %v2734 = vmax.f32 %v2732, %v2570
      %v2735 = vmax.f32 %v2733, %v2576
      %v2736 = vmax.f32 %v2734, %v2580
      %v2737 = vmax.f32 %v2735, %v2586
      %v2738 = vmax.f32 %v2736, %v2590
      %v2739 = vmax.f32 %v2737, %v2596
      %v2740 = vmax.f32 %v2738, %v2600
      %v2741 = vmax.f32 %v2739, %v2606
      %v2742 = vmax.f32 %v2740, %v2610
      %v2743 = vmax.f32 %v2741, %v2616
      %v2744 = vmax.f32 %v2742, %v2620
      %v2745 = vmax.f32 %v2743, %v2626
      %v2746 = vmax.f32 %v2744, %v2630
      %v2747 = vmax.f32 %v2745, %v2636
      %v2748 = vmax.f32 %v2746, %v2640
      %v2749 = vmax.f32 %v2747, %v2646
      %v2750 = vmax.f32 %v2748, %v2650
      %v2751 = vmax.f32 %v2749, %v2656
      %v2752 = vmax.f32 %v2750, %v2660
      %v2753 = vmax.f32 %v2751, %v2666
      %v2754 = vmax.f32 %v2752, %v2670
      %v2755 = vmax.f32 %v2753, %v2676
      %v2756 = vmax.f32 %v2754, %v2680
      %v2757 = vmax.f32 %v2755, %v2686
      %v2758 = vmax.f32 %v2756, %v2690
      %v2759 = vmax.f32 %v2757, %v2758
      %v2760 = vrot.slane %v2759, 4
      %v2761 = vmax.f32 %v2759, %v2760
      %v2762 = vrot.slane %v2761, 2
      %v2763 = vmax.f32 %v2761, %v2762
      %v2764 = vrot.slane %v2763, 1
      %v2765 = vmax.f32 %v2763, %v2764
      %v2766 = vsub.f32 %v2534, %v2728
      %v2767 = vsub.f32 %v2536, %v2765
      %v2768 = vsub.f32 %v2538, %v2728
      %v2769 = vsub.f32 %v2540, %v2765
      %v2770 = vsub.f32 %v2544, %v2728
      %v2771 = vsub.f32 %v2546, %v2765
      %v2772 = vsub.f32 %v2548, %v2728
      %v2773 = vsub.f32 %v2550, %v2765
      %v2774 = vsub.f32 %v2554, %v2728
      %v2775 = vsub.f32 %v2556, %v2765
      %v2776 = vsub.f32 %v2558, %v2728
      %v2777 = vsub.f32 %v2560, %v2765
      %v2778 = vsub.f32 %v2564, %v2728
      %v2779 = vsub.f32 %v2566, %v2765
      %v2780 = vsub.f32 %v2568, %v2728
      %v2781 = vsub.f32 %v2570, %v2765
      %v2782 = vsub.f32 %v2574, %v2728
      %v2783 = vsub.f32 %v2576, %v2765
      %v2784 = vsub.f32 %v2578, %v2728
      %v2785 = vsub.f32 %v2580, %v2765
      %v2786 = vsub.f32 %v2584, %v2728
      %v2787 = vsub.f32 %v2586, %v2765
      %v2788 = vsub.f32 %v2588, %v2728
      %v2789 = vsub.f32 %v2590, %v2765
      %v2790 = vsub.f32 %v2594, %v2728
      %v2791 = vsub.f32 %v2596, %v2765
      %v2792 = vsub.f32 %v2598, %v2728
      %v2793 = vsub.f32 %v2600, %v2765
      %v2794 = vsub.f32 %v2604, %v2728
      %v2795 = vsub.f32 %v2606, %v2765
      %v2796 = vsub.f32 %v2608, %v2728
      %v2797 = vsub.f32 %v2610, %v2765
      %v2798 = vsub.f32 %v2614, %v2728
      %v2799 = vsub.f32 %v2616, %v2765
      %v2800 = vsub.f32 %v2618, %v2728
      %v2801 = vsub.f32 %v2620, %v2765
      %v2802 = vsub.f32 %v2624, %v2728
      %v2803 = vsub.f32 %v2626, %v2765
      %v2804 = vsub.f32 %v2628, %v2728
      %v2805 = vsub.f32 %v2630, %v2765
      %v2806 = vsub.f32 %v2634, %v2728
      %v2807 = vsub.f32 %v2636, %v2765
      %v2808 = vsub.f32 %v2638, %v2728
      %v2809 = vsub.f32 %v2640, %v2765
      %v2810 = vsub.f32 %v2644, %v2728
      %v2811 = vsub.f32 %v2646, %v2765
      %v2812 = vsub.f32 %v2648, %v2728
      %v2813 = vsub.f32 %v2650, %v2765
      %v2814 = vsub.f32 %v2654, %v2728
      %v2815 = vsub.f32 %v2656, %v2765
      %v2816 = vsub.f32 %v2658, %v2728
      %v2817 = vsub.f32 %v2660, %v2765
      %v2818 = vsub.f32 %v2664, %v2728
      %v2819 = vsub.f32 %v2666, %v2765
      %v2820 = vsub.f32 %v2668, %v2728
      %v2821 = vsub.f32 %v2670, %v2765
      %v2822 = vsub.f32 %v2674, %v2728
      %v2823 = vsub.f32 %v2676, %v2765
      %v2824 = vsub.f32 %v2678, %v2728
      %v2825 = vsub.f32 %v2680, %v2765
      %v2826 = vsub.f32 %v2684, %v2728
      %v2827 = vsub.f32 %v2686, %v2765
      %v2828 = vsub.f32 %v2688, %v2728
      %v2829 = vsub.f32 %v2690, %v2765
      %v2830 = vmul.f32 %v2766, 1.442695
      %v2831 = vpow.pop %v2830
      %v2832 = vmul.f32 %v2767, 1.442695
      %v2833 = vpow.pop %v2832
      %v2834 = vmul.f32 %v2768, 1.442695
      %v2835 = vpow.pop %v2834
      %v2836 = vmul.f32 %v2769, 1.442695
      %v2837 = vpow.pop %v2836
      %v2838 = vmul.f32 %v2770, 1.442695
      %v2839 = vpow.pop %v2838
      %v2840 = vmul.f32 %v2771, 1.442695
      %v2841 = vpow.pop %v2840
      %v2842 = vmul.f32 %v2772, 1.442695
      %v2843 = vpow.pop %v2842
      %v2844 = vmul.f32 %v2773, 1.442695
      %v2845 = vpow.pop %v2844
      %v2846 = vmul.f32 %v2774, 1.442695
      %v2847 = vpow.pop %v2846
      %v2848 = vmul.f32 %v2775, 1.442695
      %v2849 = vpow.pop %v2848
      %v2850 = vmul.f32 %v2776, 1.442695
      %v2851 = vpow.pop %v2850
      %v2852 = vmul.f32 %v2777, 1.442695
      %v2853 = vpow.pop %v2852
      %v2854 = vmul.f32 %v2778, 1.442695
      %v2855 = vpow.pop %v2854
      %v2856 = vmul.f32 %v2779, 1.442695
      %v2857 = vpow.pop %v2856
      %v2858 = vmul.f32 %v2780, 1.442695
      %v2859 = vpow.pop %v2858
      %v2860 = vmul.f32 %v2781, 1.442695
      %v2861 = vpow.pop %v2860
      %v2862 = vmul.f32 %v2782, 1.442695
      %v2863 = vpow.pop %v2862
      %v2864 = vmul.f32 %v2783, 1.442695
      %v2865 = vpow.pop %v2864
      %v2866 = vmul.f32 %v2784, 1.442695
      %v2867 = vpow.pop %v2866
      %v2868 = vmul.f32 %v2785, 1.442695
      %v2869 = vpow.pop %v2868
      %v2870 = vmul.f32 %v2786, 1.442695
      %v2871 = vpow.pop %v2870
      %v2872 = vmul.f32 %v2787, 1.442695
      %v2873 = vpow.pop %v2872
      %v2874 = vmul.f32 %v2788, 1.442695
      %v2875 = vpow.pop %v2874
      %v2876 = vmul.f32 %v2789, 1.442695
      %v2877 = vpow.pop %v2876
      %v2878 = vmul.f32 %v2790, 1.442695
      %v2879 = vpow.pop %v2878
      %v2880 = vmul.f32 %v2791, 1.442695
      %v2881 = vpow.pop %v2880
      %v2882 = vmul.f32 %v2792, 1.442695
      %v2883 = vpow.pop %v2882
      %v2884 = vmul.f32 %v2793, 1.442695
      %v2885 = vpow.pop %v2884
      %v2886 = vmul.f32 %v2794, 1.442695
      %v2887 = vpow.pop %v2886
      %v2888 = vmul.f32 %v2795, 1.442695
      %v2889 = vpow.pop %v2888
      %v2890 = vmul.f32 %v2796, 1.442695
      %v2891 = vpow.pop %v2890
      %v2892 = vmul.f32 %v2797, 1.442695
      %v2893 = vpow.pop %v2892
      %v2894 = vmul.f32 %v2798, 1.442695
      %v2895 = vpow.pop %v2894
      %v2896 = vmul.f32 %v2799, 1.442695
      %v2897 = vpow.pop %v2896
      %v2898 = vmul.f32 %v2800, 1.442695
      %v2899 = vpow.pop %v2898
      %v2900 = vmul.f32 %v2801, 1.442695
      %v2901 = vpow.pop %v2900
      %v2902 = vmul.f32 %v2802, 1.442695
      %v2903 = vpow.pop %v2902
      %v2904 = vmul.f32 %v2803, 1.442695
      %v2905 = vpow.pop %v2904
      %v2906 = vmul.f32 %v2804, 1.442695
      %v2907 = vpow.pop %v2906
      %v2908 = vmul.f32 %v2805, 1.442695
      %v2909 = vpow.pop %v2908
      %v2910 = vmul.f32 %v2806, 1.442695
      %v2911 = vpow.pop %v2910
      %v2912 = vmul.f32 %v2807, 1.442695
      %v2913 = vpow.pop %v2912
      %v2914 = vmul.f32 %v2808, 1.442695
      %v2915 = vpow.pop %v2914
      %v2916 = vmul.f32 %v2809, 1.442695
      %v2917 = vpow.pop %v2916
      %v2918 = vmul.f32 %v2810, 1.442695
      %v2919 = vpow.pop %v2918
      %v2920 = vmul.f32 %v2811, 1.442695
      %v2921 = vpow.pop %v2920
      %v2922 = vmul.f32 %v2812, 1.442695
      %v2923 = vpow.pop %v2922
      %v2924 = vmul.f32 %v2813, 1.442695
      %v2925 = vpow.pop %v2924
      %v2926 = vmul.f32 %v2814, 1.442695
      %v2927 = vpow.pop %v2926
      %v2928 = vmul.f32 %v2815, 1.442695
      %v2929 = vpow.pop %v2928
      %v2930 = vmul.f32 %v2816, 1.442695
      %v2931 = vpow.pop %v2930
      %v2932 = vmul.f32 %v2817, 1.442695
      %v2933 = vpow.pop %v2932
      %v2934 = vmul.f32 %v2818, 1.442695
      %v2935 = vpow.pop %v2934
      %v2936 = vmul.f32 %v2819, 1.442695
      %v2937 = vpow.pop %v2936
      %v2938 = vmul.f32 %v2820, 1.442695
      %v2939 = vpow.pop %v2938
      %v2940 = vmul.f32 %v2821, 1.442695
      %v2941 = vpow.pop %v2940
      %v2942 = vmul.f32 %v2822, 1.442695
      %v2943 = vpow.pop %v2942
      %v2944 = vmul.f32 %v2823, 1.442695
      %v2945 = vpow.pop %v2944
      %v2946 = vmul.f32 %v2824, 1.442695
      %v2947 = vpow.pop %v2946
      %v2948 = vmul.f32 %v2825, 1.442695
      %v2949 = vpow.pop %v2948
      %v2950 = vmul.f32 %v2826, 1.442695
      %v2951 = vpow.pop %v2950
      %v2952 = vmul.f32 %v2827, 1.442695
      %v2953 = vpow.pop %v2952
      %v2954 = vmul.f32 %v2828, 1.442695
      %v2955 = vpow.pop %v2954
      %v2956 = vmul.f32 %v2829, 1.442695
      %v2957 = vpow.pop %v2956
      %v2958 = vadd.f32 %v2831, %v2835
      %v2959 = vadd.f32 %v2958, %v2839
      %v2960 = vadd.f32 %v2959, %v2843
      %v2961 = vadd.f32 %v2960, %v2847
      %v2962 = vadd.f32 %v2961, %v2851
      %v2963 = vadd.f32 %v2962, %v2855
      %v2964 = vadd.f32 %v2963, %v2859
      %v2965 = vadd.f32 %v2964, %v2863
      %v2966 = vadd.f32 %v2965, %v2867
      %v2967 = vadd.f32 %v2966, %v2871
      %v2968 = vadd.f32 %v2967, %v2875
      %v2969 = vadd.f32 %v2968, %v2879
      %v2970 = vadd.f32 %v2969, %v2883
      %v2971 = vadd.f32 %v2970, %v2887
      %v2972 = vadd.f32 %v2971, %v2891
      %v2973 = vadd.f32 %v2972, %v2895
      %v2974 = vadd.f32 %v2973, %v2899
      %v2975 = vadd.f32 %v2974, %v2903
      %v2976 = vadd.f32 %v2975, %v2907
      %v2977 = vadd.f32 %v2976, %v2911
      %v2978 = vadd.f32 %v2977, %v2915
      %v2979 = vadd.f32 %v2978, %v2919
      %v2980 = vadd.f32 %v2979, %v2923
      %v2981 = vadd.f32 %v2980, %v2927
      %v2982 = vadd.f32 %v2981, %v2931
      %v2983 = vadd.f32 %v2982, %v2935
      %v2984 = vadd.f32 %v2983, %v2939
      %v2985 = vadd.f32 %v2984, %v2943
      %v2986 = vadd.f32 %v2985, %v2947
      %v2987 = vadd.f32 %v2986, %v2951
      %v2988 = vadd.f32 %v2987, %v2955
      %v2989 = vrot.slane %v2988, 4
      %v2990 = vadd.f32 %v2988, %v2989
      %v2991 = vrot.slane %v2990, 2
      %v2992 = vadd.f32 %v2990, %v2991
      %v2993 = vrot.slane %v2992, 1
      %v2994 = vadd.f32 %v2992, %v2993
      %v2995 = vadd.f32 %v2833, %v2837
      %v2996 = vadd.f32 %v2995, %v2841
      %v2997 = vadd.f32 %v2996, %v2845
      %v2998 = vadd.f32 %v2997, %v2849
      %v2999 = vadd.f32 %v2998, %v2853
      %v3000 = vadd.f32 %v2999, %v2857
      %v3001 = vadd.f32 %v3000, %v2861
      %v3002 = vadd.f32 %v3001, %v2865
      %v3003 = vadd.f32 %v3002, %v2869
      %v3004 = vadd.f32 %v3003, %v2873
      %v3005 = vadd.f32 %v3004, %v2877
      %v3006 = vadd.f32 %v3005, %v2881
      %v3007 = vadd.f32 %v3006, %v2885
      %v3008 = vadd.f32 %v3007, %v2889
      %v3009 = vadd.f32 %v3008, %v2893
      %v3010 = vadd.f32 %v3009, %v2897
      %v3011 = vadd.f32 %v3010, %v2901
      %v3012 = vadd.f32 %v3011, %v2905
      %v3013 = vadd.f32 %v3012, %v2909
      %v3014 = vadd.f32 %v3013, %v2913
      %v3015 = vadd.f32 %v3014, %v2917
      %v3016 = vadd.f32 %v3015, %v2921
      %v3017 = vadd.f32 %v3016, %v2925
      %v3018 = vadd.f32 %v3017, %v2929
      %v3019 = vadd.f32 %v3018, %v2933
      %v3020 = vadd.f32 %v3019, %v2937
      %v3021 = vadd.f32 %v3020, %v2941
      %v3022 = vadd.f32 %v3021, %v2945
      %v3023 = vadd.f32 %v3022, %v2949
      %v3024 = vadd.f32 %v3023, %v2953
      %v3025 = vadd.f32 %v3024, %v2957
      %v3026 = vrot.slane %v3025, 4
      %v3027 = vadd.f32 %v3025, %v3026
      %v3028 = vrot.slane %v3027, 2
      %v3029 = vadd.f32 %v3027, %v3028
      %v3030 = vrot.slane %v3029, 1
      %v3031 = vadd.f32 %v3029, %v3030
      %v3032 = vrcp.pop %v2994
      %v3033 = vrcp.pop %v3031
      %v3034 = vmul.bf16 %v453, %v2492
      %v3035 = vmul.bf16 %v454, %v2492
      %v3036 = vpack.c.bf16 %v2835, %v2831
      %v3037 = vpack.c.bf16 %v2837, %v2833
      %v3038 = vpack.c.bf16 %v2843, %v2839
      %v3039 = vpack.c.bf16 %v2845, %v2841
      %v3040 = vpack.c.bf16 %v2851, %v2847
      %v3041 = vpack.c.bf16 %v2853, %v2849
      %v3042 = vpack.c.bf16 %v2859, %v2855
      %v3043 = vpack.c.bf16 %v2861, %v2857
      %v3044 = vpack.c.bf16 %v2867, %v2863
      %v3045 = vpack.c.bf16 %v2869, %v2865
      %v3046 = vpack.c.bf16 %v2875, %v2871
      %v3047 = vpack.c.bf16 %v2877, %v2873
      %v3048 = vpack.c.bf16 %v2883, %v2879
      %v3049 = vpack.c.bf16 %v2885, %v2881
      %v3050 = vpack.c.bf16 %v2891, %v2887
      %v3051 = vpack.c.bf16 %v2893, %v2889
      %v3052 = vpack.c.bf16 %v2899, %v2895
      %v3053 = vpack.c.bf16 %v2901, %v2897
      %v3054 = vpack.c.bf16 %v2907, %v2903
      %v3055 = vpack.c.bf16 %v2909, %v2905
      %v3056 = vpack.c.bf16 %v2915, %v2911
      %v3057 = vpack.c.bf16 %v2917, %v2913
      %v3058 = vpack.c.bf16 %v2923, %v2919
      %v3059 = vpack.c.bf16 %v2925, %v2921
      %v3060 = vpack.c.bf16 %v2931, %v2927
      %v3061 = vpack.c.bf16 %v2933, %v2929
      %v3062 = vpack.c.bf16 %v2939, %v2935
      %v3063 = vpack.c.bf16 %v2941, %v2937
      %v3064 = vpack.c.bf16 %v2947, %v2943
      %v3065 = vpack.c.bf16 %v2949, %v2945
      %v3066 = vpack.c.bf16 %v2955, %v2951
      %v3067 = vpack.c.bf16 %v2957, %v2953
      %3068 = vmatprep.subr.bf16.mxu0 %v3037
      %3069 = vmatpush1.bf16.msra.mxu0 %v3036
      %3070 = vmatprep.subr.bf16.mxu0 %v3039
      %3071 = vmatpush1.bf16.msra.mxu0 %v3038
      %3072 = vmatprep.subr.bf16.mxu0 %v3041
      %3073 = vmatpush1.bf16.msra.mxu0 %v3040
      %3074 = vmatprep.subr.bf16.mxu0 %v3043
      %3075 = vmatpush1.bf16.msra.mxu0 %v3042
      %3076 = vmatprep.subr.bf16.mxu0 %v3045
      %3077 = vmatpush1.bf16.msra.mxu0 %v3044
      %3078 = vmatprep.subr.bf16.mxu0 %v3047
      %3079 = vmatpush1.bf16.msra.mxu0 %v3046
      %3080 = vmatprep.subr.bf16.mxu0 %v3049
      %3081 = vmatpush1.bf16.msra.mxu0 %v3048
      %3082 = vmatprep.subr.bf16.mxu0 %v3051
      %3083 = vmatpush1.bf16.msra.mxu0 %v3050
      %3084 = vmatprep.subr.bf16.mxu0 %v3053
      %3085 = vmatpush1.bf16.msra.mxu0 %v3052
      %3086 = vmatprep.subr.bf16.mxu0 %v3055
      %3087 = vmatpush1.bf16.msra.mxu0 %v3054
      %3088 = vmatprep.subr.bf16.mxu0 %v3057
      %3089 = vmatpush1.bf16.msra.mxu0 %v3056
      %3090 = vmatprep.subr.bf16.mxu0 %v3059
      %3091 = vmatpush1.bf16.msra.mxu0 %v3058
      %3092 = vmatprep.subr.bf16.mxu0 %v3061
      %3093 = vmatpush1.bf16.msra.mxu0 %v3060
      %3094 = vmatprep.subr.bf16.mxu0 %v3063
      %3095 = vmatpush1.bf16.msra.mxu0 %v3062
      %3096 = vmatprep.subr.bf16.mxu0 %v3065
      %3097 = vmatpush1.bf16.msra.mxu0 %v3064
      %3098 = vmatprep.subr.bf16.mxu0 %v3067
      %3099 = vmatpush1.bf16.msra.mxu0 %v3066
      %3100 = vmatprep.mubr.bf16.mxu0 %v3035
      %3101 = vmatmul.mubr.bf16.gmra.mrb[0].mxu0 %v3034
      %v3102 = vpop.f32.mrb[0].mxu0
      %v3103 = vadd.f32 0.0, %v3102
      %v3104 = vpop.f32.mrb[0].mxu0
      %v3105 = vadd.f32 0.0, %v3104
      %v3106 = vpop.f32.mrb[0].mxu0
      %v3107 = vadd.f32 0.0, %v3106
      %v3108 = vpop.f32.mrb[0].mxu0
      %v3109 = vadd.f32 0.0, %v3108
      %3110 = vdwg.mxu0
      %v3111 = vmul.f32 %v3103, %v3032
      %v3112 = vmul.f32 %v3105, %v3033
      %v3113 = vmul.f32 %v3107, %v3032
      %v3114 = vmul.f32 %v3109, %v3033
      %v3115 = vadd.f32 %v2464, %v3111
      %v3116 = vadd.f32 %v2465, %v3112
      %v3117 = vadd.f32 %v2466, %v3113
      %v3118 = vadd.f32 %v2467, %v3114
      %vm3119 = vcmp.ge.s32.totalorder %v364, 8
      %vm3120 = vcmp.ge.s32.totalorder %v455, 8
      %vm3121 = vcmp.ge.s32.totalorder %v456, 8
      %vm3122 = vcmp.lt.s32.totalorder %v364, 10
      %vm3123 = vcmp.lt.s32.totalorder %v455, 10
      %vm3124 = vcmp.lt.s32.totalorder %v456, 10
      %vm3125 = vmand %vm3119, %vm3122
      %vm3126 = vmand %vm3120, %vm3123
      %vm3127 = vmand %vm3121, %vm3124
      %vm3128 = vmor %vm3125, %vm471
      %vm3129 = vmor %vm3126, %vm472
      %vm3130 = vmor %vm3127, %vm473
      %v3131 = vsel %vm3128, 1, 0
      %v3132 = vsel %vm3129, 1, 0
      %v3133 = vsel %vm3130, 1, 0
      %v3134 = vcvt.s32.f32 %v3131
      %v3135 = vcvt.s32.f32 %v3132
      %v3136 = vcvt.s32.f32 %v3133
      %v3137 = vpack.c.bf16 %v3135, %v3134
      %v3138 = vpack.c.bf16 %v3136, %v3136
      %v3139 = vsel %vm3125, 1, 0
      %v3140 = vsel %vm3126, 1, 0
      %v3141 = vcvt.s32.f32 %v3139
      %v3142 = vcvt.s32.f32 %v3140
      %v3143 = vpack.c.bf16 %v3142, %v3141
      %v3144 = vmul.bf16 %v370, %v3137
      %v3145 = vmul.bf16 %v371, %v3137
      %v3146 = vmul.bf16 %v372, %v3138
      %v3148 = vsel %vm542, %v3146, 0
      %3150 = vmatprep.subr.bf16.mxu0 %v3145
      %3151 = vmatpush1.bf16.msra.mxu0 %v3144
      %3152 = vmatprep.subr.bf16.mxu0 %v3148
      %3153 = vmatpush1.bf16.msra.mxu0 %v3148
      %3154 = vmatprep.subr.bf16.mxu0 0
      %3155 = vmatpush1.bf16.msra.mxu0 0
      %3156 = vmatprep.subr.bf16.mxu0 0
      %3157 = vmatpush1.bf16.msra.mxu0 0
      %3158 = vmatprep.subr.bf16.mxu0 0
      %3159 = vmatpush1.bf16.msra.mxu0 0
      %3160 = vmatprep.subr.bf16.mxu0 0
      %3161 = vmatpush1.bf16.msra.mxu0 0
      %3162 = vmatprep.subr.bf16.mxu0 0
      %3163 = vmatpush1.bf16.msra.mxu0 0
      %3164 = vmatprep.subr.bf16.mxu0 0
      %3165 = vmatpush1.bf16.msra.mxu0 0
      %3166 = vmatprep.subr.bf16.mxu0 0
      %3167 = vmatpush1.bf16.msra.mxu0 0
      %3168 = vmatprep.subr.bf16.mxu0 0
      %3169 = vmatpush1.bf16.msra.mxu0 0
      %3170 = vmatprep.subr.bf16.mxu0 0
      %3171 = vmatpush1.bf16.msra.mxu0 0
      %3172 = vmatprep.subr.bf16.mxu0 0
      %3173 = vmatpush1.bf16.msra.mxu0 0
      %3174 = vmatprep.subr.bf16.mxu0 0
      %3175 = vmatpush1.bf16.msra.mxu0 0
      %3176 = vmatprep.subr.bf16.mxu0 0
      %3177 = vmatpush1.bf16.msra.mxu0 0
      %3178 = vmatprep.subr.bf16.mxu0 0
      %3179 = vmatpush1.bf16.msra.mxu0 0
      %3180 = vmatprep.subr.bf16.mxu0 0
      %3181 = vmatpush1.bf16.msra.mxu0 0
      %3182 = vmatprep.mubr.bf16.mxu0 0
      %3183 = vmatmul.mubr.bf16.gmra.mrb[0].mxu0 %v495
      %v3184 = vpop.f32.mrb[0].mxu0
      %v3185 = vadd.f32 0.0, %v3184
      %v3186 = vpop.f32.mrb[0].mxu0
      %v3187 = vadd.f32 0.0, %v3186
      %v3188 = vpop.f32.mrb[0].mxu0
      %v3189 = vadd.f32 0.0, %v3188
      %v3190 = vpop.f32.mrb[0].mxu0
      %v3191 = vadd.f32 0.0, %v3190
      %3192 = vmatprep.mubr.bf16.mxu0 0
      %3193 = vmatmul.mubr.bf16.gmra.mrb[0].mxu0 %v498
      %v3194 = vpop.f32.mrb[0].mxu0
      %v3195 = vadd.f32 0.0, %v3194
      %v3196 = vpop.f32.mrb[0].mxu0
      %v3197 = vadd.f32 0.0, %v3196
      %v3198 = vpop.f32.mrb[0].mxu0
      %v3199 = vadd.f32 0.0, %v3198
      %v3200 = vpop.f32.mrb[0].mxu0
      %v3201 = vadd.f32 0.0, %v3200
      %3202 = vmatprep.mubr.bf16.mxu0 0
      %3203 = vmatmul.mubr.bf16.gmra.mrb[0].mxu0 %v501
      %v3204 = vpop.f32.mrb[0].mxu0
      %v3205 = vadd.f32 0.0, %v3204
      %v3206 = vpop.f32.mrb[0].mxu0
      %v3207 = vadd.f32 0.0, %v3206
      %v3208 = vpop.f32.mrb[0].mxu0
      %v3209 = vadd.f32 0.0, %v3208
      %v3210 = vpop.f32.mrb[0].mxu0
      %v3211 = vadd.f32 0.0, %v3210
      %3212 = vmatprep.mubr.bf16.mxu0 0
      %3213 = vmatmul.mubr.bf16.gmra.mrb[0].mxu0 %v504
      %v3214 = vpop.f32.mrb[0].mxu0
      %v3215 = vadd.f32 0.0, %v3214
      %v3216 = vpop.f32.mrb[0].mxu0
      %v3217 = vadd.f32 0.0, %v3216
      %v3218 = vpop.f32.mrb[0].mxu0
      %v3219 = vadd.f32 0.0, %v3218
      %v3220 = vpop.f32.mrb[0].mxu0
      %v3221 = vadd.f32 0.0, %v3220
      %3222 = vmatprep.mubr.bf16.mxu0 0
      %3223 = vmatmul.mubr.bf16.gmra.mrb[0].mxu0 %v507
      %v3224 = vpop.f32.mrb[0].mxu0
      %v3225 = vadd.f32 0.0, %v3224
      %v3226 = vpop.f32.mrb[0].mxu0
      %v3227 = vadd.f32 0.0, %v3226
      %v3228 = vpop.f32.mrb[0].mxu0
      %v3229 = vadd.f32 0.0, %v3228
      %v3230 = vpop.f32.mrb[0].mxu0
      %v3231 = vadd.f32 0.0, %v3230
      %3232 = vmatprep.mubr.bf16.mxu0 0
      %3233 = vmatmul.mubr.bf16.gmra.mrb[0].mxu0 %v510
      %v3234 = vpop.f32.mrb[0].mxu0
      %v3235 = vadd.f32 0.0, %v3234
      %v3236 = vpop.f32.mrb[0].mxu0
      %v3237 = vadd.f32 0.0, %v3236
      %v3238 = vpop.f32.mrb[0].mxu0
      %v3239 = vadd.f32 0.0, %v3238
      %v3240 = vpop.f32.mrb[0].mxu0
      %v3241 = vadd.f32 0.0, %v3240
      %3242 = vmatprep.mubr.bf16.mxu0 0
      %3243 = vmatmul.mubr.bf16.gmra.mrb[0].mxu0 %v513
      %v3244 = vpop.f32.mrb[0].mxu0
      %v3245 = vadd.f32 0.0, %v3244
      %v3246 = vpop.f32.mrb[0].mxu0
      %v3247 = vadd.f32 0.0, %v3246
      %v3248 = vpop.f32.mrb[0].mxu0
      %v3249 = vadd.f32 0.0, %v3248
      %v3250 = vpop.f32.mrb[0].mxu0
      %v3251 = vadd.f32 0.0, %v3250
      %3252 = vmatprep.mubr.bf16.mxu0 0
      %3253 = vmatmul.mubr.bf16.gmra.mrb[0].mxu0 %v516
      %v3254 = vpop.f32.mrb[0].mxu0
      %v3255 = vadd.f32 0.0, %v3254
      %v3256 = vpop.f32.mrb[0].mxu0
      %v3257 = vadd.f32 0.0, %v3256
      %v3258 = vpop.f32.mrb[0].mxu0
      %v3259 = vadd.f32 0.0, %v3258
      %v3260 = vpop.f32.mrb[0].mxu0
      %v3261 = vadd.f32 0.0, %v3260
      %3262 = vmatprep.mubr.bf16.mxu0 0
      %3263 = vmatmul.mubr.bf16.gmra.mrb[0].mxu0 %v519
      %v3264 = vpop.f32.mrb[0].mxu0
      %v3265 = vadd.f32 0.0, %v3264
      %v3266 = vpop.f32.mrb[0].mxu0
      %v3267 = vadd.f32 0.0, %v3266
      %v3268 = vpop.f32.mrb[0].mxu0
      %v3269 = vadd.f32 0.0, %v3268
      %v3270 = vpop.f32.mrb[0].mxu0
      %v3271 = vadd.f32 0.0, %v3270
      %3272 = vmatprep.mubr.bf16.mxu0 0
      %3273 = vmatmul.mubr.bf16.gmra.mrb[0].mxu0 %v522
      %v3274 = vpop.f32.mrb[0].mxu0
      %v3275 = vadd.f32 0.0, %v3274
      %v3276 = vpop.f32.mrb[0].mxu0
      %v3277 = vadd.f32 0.0, %v3276
      %v3278 = vpop.f32.mrb[0].mxu0
      %v3279 = vadd.f32 0.0, %v3278
      %v3280 = vpop.f32.mrb[0].mxu0
      %v3281 = vadd.f32 0.0, %v3280
      %3282 = vmatprep.mubr.bf16.mxu0 0
      %3283 = vmatmul.mubr.bf16.gmra.mrb[0].mxu0 %v525
      %v3284 = vpop.f32.mrb[0].mxu0
      %v3285 = vadd.f32 0.0, %v3284
      %v3286 = vpop.f32.mrb[0].mxu0
      %v3287 = vadd.f32 0.0, %v3286
      %v3288 = vpop.f32.mrb[0].mxu0
      %v3289 = vadd.f32 0.0, %v3288
      %v3290 = vpop.f32.mrb[0].mxu0
      %v3291 = vadd.f32 0.0, %v3290
      %3292 = vmatprep.mubr.bf16.mxu0 0
      %3293 = vmatmul.mubr.bf16.gmra.mrb[0].mxu0 %v528
      %v3294 = vpop.f32.mrb[0].mxu0
      %v3295 = vadd.f32 0.0, %v3294
      %v3296 = vpop.f32.mrb[0].mxu0
      %v3297 = vadd.f32 0.0, %v3296
      %v3298 = vpop.f32.mrb[0].mxu0
      %v3299 = vadd.f32 0.0, %v3298
      %v3300 = vpop.f32.mrb[0].mxu0
      %v3301 = vadd.f32 0.0, %v3300
      %3302 = vmatprep.mubr.bf16.mxu0 0
      %3303 = vmatmul.mubr.bf16.gmra.mrb[0].mxu0 %v531
      %v3304 = vpop.f32.mrb[0].mxu0
      %v3305 = vadd.f32 0.0, %v3304
      %v3306 = vpop.f32.mrb[0].mxu0
      %v3307 = vadd.f32 0.0, %v3306
      %v3308 = vpop.f32.mrb[0].mxu0
      %v3309 = vadd.f32 0.0, %v3308
      %v3310 = vpop.f32.mrb[0].mxu0
      %v3311 = vadd.f32 0.0, %v3310
      %3312 = vmatprep.mubr.bf16.mxu0 0
      %3313 = vmatmul.mubr.bf16.gmra.mrb[0].mxu0 %v534
      %v3314 = vpop.f32.mrb[0].mxu0
      %v3315 = vadd.f32 0.0, %v3314
      %v3316 = vpop.f32.mrb[0].mxu0
      %v3317 = vadd.f32 0.0, %v3316
      %v3318 = vpop.f32.mrb[0].mxu0
      %v3319 = vadd.f32 0.0, %v3318
      %v3320 = vpop.f32.mrb[0].mxu0
      %v3321 = vadd.f32 0.0, %v3320
      %3322 = vmatprep.mubr.bf16.mxu0 0
      %3323 = vmatmul.mubr.bf16.gmra.mrb[0].mxu0 %v537
      %v3324 = vpop.f32.mrb[0].mxu0
      %v3325 = vadd.f32 0.0, %v3324
      %v3326 = vpop.f32.mrb[0].mxu0
      %v3327 = vadd.f32 0.0, %v3326
      %v3328 = vpop.f32.mrb[0].mxu0
      %v3329 = vadd.f32 0.0, %v3328
      %v3330 = vpop.f32.mrb[0].mxu0
      %v3331 = vadd.f32 0.0, %v3330
      %3332 = vmatprep.mubr.bf16.mxu0 0
      %3333 = vmatmul.mubr.bf16.gmra.mrb[0].mxu0 %v540
      %v3334 = vpop.f32.mrb[0].mxu0
      %v3335 = vadd.f32 0.0, %v3334
      %v3336 = vpop.f32.mrb[0].mxu0
      %v3337 = vadd.f32 0.0, %v3336
      %v3338 = vpop.f32.mrb[0].mxu0
      %v3339 = vadd.f32 0.0, %v3338
      %v3340 = vpop.f32.mrb[0].mxu0
      %v3341 = vadd.f32 0.0, %v3340
      %3342 = vdwg.mxu0
      %v3343 = vmax.f32 %v3185, %v3195
      %v3344 = vmax.f32 %v3189, %v3199
      %v3345 = vmax.f32 %v3343, %v3205
      %v3346 = vmax.f32 %v3344, %v3209
      %v3347 = vmax.f32 %v3345, %v3215
      %v3348 = vmax.f32 %v3346, %v3219
      %v3349 = vmax.f32 %v3347, %v3225
      %v3350 = vmax.f32 %v3348, %v3229
      %v3351 = vmax.f32 %v3349, %v3235
      %v3352 = vmax.f32 %v3350, %v3239
      %v3353 = vmax.f32 %v3351, %v3245
      %v3354 = vmax.f32 %v3352, %v3249
      %v3355 = vmax.f32 %v3353, %v3255
      %v3356 = vmax.f32 %v3354, %v3259
      %v3357 = vmax.f32 %v3355, %v3265
      %v3358 = vmax.f32 %v3356, %v3269
      %v3359 = vmax.f32 %v3357, %v3275
      %v3360 = vmax.f32 %v3358, %v3279
      %v3361 = vmax.f32 %v3359, %v3285
      %v3362 = vmax.f32 %v3360, %v3289
      %v3363 = vmax.f32 %v3361, %v3295
      %v3364 = vmax.f32 %v3362, %v3299
      %v3365 = vmax.f32 %v3363, %v3305
      %v3366 = vmax.f32 %v3364, %v3309
      %v3367 = vmax.f32 %v3365, %v3315
      %v3368 = vmax.f32 %v3366, %v3319
      %v3369 = vmax.f32 %v3367, %v3325
      %v3370 = vmax.f32 %v3368, %v3329
      %v3371 = vmax.f32 %v3369, %v3335
      %v3372 = vmax.f32 %v3370, %v3339
      %v3373 = vmax.f32 %v3371, %v3372
      %v3374 = vrot.slane %v3373, 4
      %v3375 = vmax.f32 %v3373, %v3374
      %v3376 = vrot.slane %v3375, 2
      %v3377 = vmax.f32 %v3375, %v3376
      %v3378 = vrot.slane %v3377, 1
      %v3379 = vmax.f32 %v3377, %v3378
      %v3380 = vmax.f32 %v3187, %v3197
      %v3381 = vmax.f32 %v3191, %v3201
      %v3382 = vmax.f32 %v3380, %v3207
      %v3383 = vmax.f32 %v3381, %v3211
      %v3384 = vmax.f32 %v3382, %v3217
      %v3385 = vmax.f32 %v3383, %v3221
      %v3386 = vmax.f32 %v3384, %v3227
      %v3387 = vmax.f32 %v3385, %v3231
      %v3388 = vmax.f32 %v3386, %v3237
      %v3389 = vmax.f32 %v3387, %v3241
      %v3390 = vmax.f32 %v3388, %v3247
      %v3391 = vmax.f32 %v3389, %v3251
      %v3392 = vmax.f32 %v3390, %v3257
      %v3393 = vmax.f32 %v3391, %v3261
      %v3394 = vmax.f32 %v3392, %v3267
      %v3395 = vmax.f32 %v3393, %v3271
      %v3396 = vmax.f32 %v3394, %v3277
      %v3397 = vmax.f32 %v3395, %v3281
      %v3398 = vmax.f32 %v3396, %v3287
      %v3399 = vmax.f32 %v3397, %v3291
      %v3400 = vmax.f32 %v3398, %v3297
      %v3401 = vmax.f32 %v3399, %v3301
      %v3402 = vmax.f32 %v3400, %v3307
      %v3403 = vmax.f32 %v3401, %v3311
      %v3404 = vmax.f32 %v3402, %v3317
      %v3405 = vmax.f32 %v3403, %v3321
      %v3406 = vmax.f32 %v3404, %v3327
      %v3407 = vmax.f32 %v3405, %v3331
      %v3408 = vmax.f32 %v3406, %v3337
      %v3409 = vmax.f32 %v3407, %v3341
      %v3410 = vmax.f32 %v3408, %v3409
      %v3411 = vrot.slane %v3410, 4
      %v3412 = vmax.f32 %v3410, %v3411
      %v3413 = vrot.slane %v3412, 2
      %v3414 = vmax.f32 %v3412, %v3413
      %v3415 = vrot.slane %v3414, 1
      %v3416 = vmax.f32 %v3414, %v3415
      %v3417 = vsub.f32 %v3185, %v3379
      %v3418 = vsub.f32 %v3187, %v3416
      %v3419 = vsub.f32 %v3189, %v3379
      %v3420 = vsub.f32 %v3191, %v3416
      %v3421 = vsub.f32 %v3195, %v3379
      %v3422 = vsub.f32 %v3197, %v3416
      %v3423 = vsub.f32 %v3199, %v3379
      %v3424 = vsub.f32 %v3201, %v3416
      %v3425 = vsub.f32 %v3205, %v3379
      %v3426 = vsub.f32 %v3207, %v3416
      %v3427 = vsub.f32 %v3209, %v3379
      %v3428 = vsub.f32 %v3211, %v3416
      %v3429 = vsub.f32 %v3215, %v3379
      %v3430 = vsub.f32 %v3217, %v3416
      %v3431 = vsub.f32 %v3219, %v3379
      %v3432 = vsub.f32 %v3221, %v3416
      %v3433 = vsub.f32 %v3225, %v3379
      %v3434 = vsub.f32 %v3227, %v3416
      %v3435 = vsub.f32 %v3229, %v3379
      %v3436 = vsub.f32 %v3231, %v3416
      %v3437 = vsub.f32 %v3235, %v3379
      %v3438 = vsub.f32 %v3237, %v3416
      %v3439 = vsub.f32 %v3239, %v3379
      %v3440 = vsub.f32 %v3241, %v3416
      %v3441 = vsub.f32 %v3245, %v3379
      %v3442 = vsub.f32 %v3247, %v3416
      %v3443 = vsub.f32 %v3249, %v3379
      %v3444 = vsub.f32 %v3251, %v3416
      %v3445 = vsub.f32 %v3255, %v3379
      %v3446 = vsub.f32 %v3257, %v3416
      %v3447 = vsub.f32 %v3259, %v3379
      %v3448 = vsub.f32 %v3261, %v3416
      %v3449 = vsub.f32 %v3265, %v3379
      %v3450 = vsub.f32 %v3267, %v3416
      %v3451 = vsub.f32 %v3269, %v3379
      %v3452 = vsub.f32 %v3271, %v3416
      %v3453 = vsub.f32 %v3275, %v3379
      %v3454 = vsub.f32 %v3277, %v3416
      %v3455 = vsub.f32 %v3279, %v3379
      %v3456 = vsub.f32 %v3281, %v3416
      %v3457 = vsub.f32 %v3285, %v3379
      %v3458 = vsub.f32 %v3287, %v3416
      %v3459 = vsub.f32 %v3289, %v3379
      %v3460 = vsub.f32 %v3291, %v3416
      %v3461 = vsub.f32 %v3295, %v3379
      %v3462 = vsub.f32 %v3297, %v3416
      %v3463 = vsub.f32 %v3299, %v3379
      %v3464 = vsub.f32 %v3301, %v3416
      %v3465 = vsub.f32 %v3305, %v3379
      %v3466 = vsub.f32 %v3307, %v3416
      %v3467 = vsub.f32 %v3309, %v3379
      %v3468 = vsub.f32 %v3311, %v3416
      %v3469 = vsub.f32 %v3315, %v3379
      %v3470 = vsub.f32 %v3317, %v3416
      %v3471 = vsub.f32 %v3319, %v3379
      %v3472 = vsub.f32 %v3321, %v3416
      %v3473 = vsub.f32 %v3325, %v3379
      %v3474 = vsub.f32 %v3327, %v3416
      %v3475 = vsub.f32 %v3329, %v3379
      %v3476 = vsub.f32 %v3331, %v3416
      %v3477 = vsub.f32 %v3335, %v3379
      %v3478 = vsub.f32 %v3337, %v3416
      %v3479 = vsub.f32 %v3339, %v3379
      %v3480 = vsub.f32 %v3341, %v3416
      %v3481 = vmul.f32 %v3417, 1.442695
      %v3482 = vpow.pop %v3481
      %v3483 = vmul.f32 %v3418, 1.442695
      %v3484 = vpow.pop %v3483
      %v3485 = vmul.f32 %v3419, 1.442695
      %v3486 = vpow.pop %v3485
      %v3487 = vmul.f32 %v3420, 1.442695
      %v3488 = vpow.pop %v3487
      %v3489 = vmul.f32 %v3421, 1.442695
      %v3490 = vpow.pop %v3489
      %v3491 = vmul.f32 %v3422, 1.442695
      %v3492 = vpow.pop %v3491
      %v3493 = vmul.f32 %v3423, 1.442695
      %v3494 = vpow.pop %v3493
      %v3495 = vmul.f32 %v3424, 1.442695
      %v3496 = vpow.pop %v3495
      %v3497 = vmul.f32 %v3425, 1.442695
      %v3498 = vpow.pop %v3497
      %v3499 = vmul.f32 %v3426, 1.442695
      %v3500 = vpow.pop %v3499
      %v3501 = vmul.f32 %v3427, 1.442695
      %v3502 = vpow.pop %v3501
      %v3503 = vmul.f32 %v3428, 1.442695
      %v3504 = vpow.pop %v3503
      %v3505 = vmul.f32 %v3429, 1.442695
      %v3506 = vpow.pop %v3505
      %v3507 = vmul.f32 %v3430, 1.442695
      %v3508 = vpow.pop %v3507
      %v3509 = vmul.f32 %v3431, 1.442695
      %v3510 = vpow.pop %v3509
      %v3511 = vmul.f32 %v3432, 1.442695
      %v3512 = vpow.pop %v3511
      %v3513 = vmul.f32 %v3433, 1.442695
      %v3514 = vpow.pop %v3513
      %v3515 = vmul.f32 %v3434, 1.442695
      %v3516 = vpow.pop %v3515
      %v3517 = vmul.f32 %v3435, 1.442695
      %v3518 = vpow.pop %v3517
      %v3519 = vmul.f32 %v3436, 1.442695
      %v3520 = vpow.pop %v3519
      %v3521 = vmul.f32 %v3437, 1.442695
      %v3522 = vpow.pop %v3521
      %v3523 = vmul.f32 %v3438, 1.442695
      %v3524 = vpow.pop %v3523
      %v3525 = vmul.f32 %v3439, 1.442695
      %v3526 = vpow.pop %v3525
      %v3527 = vmul.f32 %v3440, 1.442695
      %v3528 = vpow.pop %v3527
      %v3529 = vmul.f32 %v3441, 1.442695
      %v3530 = vpow.pop %v3529
      %v3531 = vmul.f32 %v3442, 1.442695
      %v3532 = vpow.pop %v3531
      %v3533 = vmul.f32 %v3443, 1.442695
      %v3534 = vpow.pop %v3533
      %v3535 = vmul.f32 %v3444, 1.442695
      %v3536 = vpow.pop %v3535
      %v3537 = vmul.f32 %v3445, 1.442695
      %v3538 = vpow.pop %v3537
      %v3539 = vmul.f32 %v3446, 1.442695
      %v3540 = vpow.pop %v3539
      %v3541 = vmul.f32 %v3447, 1.442695
      %v3542 = vpow.pop %v3541
      %v3543 = vmul.f32 %v3448, 1.442695
      %v3544 = vpow.pop %v3543
      %v3545 = vmul.f32 %v3449, 1.442695
      %v3546 = vpow.pop %v3545
      %v3547 = vmul.f32 %v3450, 1.442695
      %v3548 = vpow.pop %v3547
      %v3549 = vmul.f32 %v3451, 1.442695
      %v3550 = vpow.pop %v3549
      %v3551 = vmul.f32 %v3452, 1.442695
      %v3552 = vpow.pop %v3551
      %v3553 = vmul.f32 %v3453, 1.442695
      %v3554 = vpow.pop %v3553
      %v3555 = vmul.f32 %v3454, 1.442695
      %v3556 = vpow.pop %v3555
      %v3557 = vmul.f32 %v3455, 1.442695
      %v3558 = vpow.pop %v3557
      %v3559 = vmul.f32 %v3456, 1.442695
      %v3560 = vpow.pop %v3559
      %v3561 = vmul.f32 %v3457, 1.442695
      %v3562 = vpow.pop %v3561
      %v3563 = vmul.f32 %v3458, 1.442695
      %v3564 = vpow.pop %v3563
      %v3565 = vmul.f32 %v3459, 1.442695
      %v3566 = vpow.pop %v3565
      %v3567 = vmul.f32 %v3460, 1.442695
      %v3568 = vpow.pop %v3567
      %v3569 = vmul.f32 %v3461, 1.442695
      %v3570 = vpow.pop %v3569
      %v3571 = vmul.f32 %v3462, 1.442695
      %v3572 = vpow.pop %v3571
      %v3573 = vmul.f32 %v3463, 1.442695
      %v3574 = vpow.pop %v3573
      %v3575 = vmul.f32 %v3464, 1.442695
      %v3576 = vpow.pop %v3575
      %v3577 = vmul.f32 %v3465, 1.442695
      %v3578 = vpow.pop %v3577
      %v3579 = vmul.f32 %v3466, 1.442695
      %v3580 = vpow.pop %v3579
      %v3581 = vmul.f32 %v3467, 1.442695
      %v3582 = vpow.pop %v3581
      %v3583 = vmul.f32 %v3468, 1.442695
      %v3584 = vpow.pop %v3583
      %v3585 = vmul.f32 %v3469, 1.442695
      %v3586 = vpow.pop %v3585
      %v3587 = vmul.f32 %v3470, 1.442695
      %v3588 = vpow.pop %v3587
      %v3589 = vmul.f32 %v3471, 1.442695
      %v3590 = vpow.pop %v3589
      %v3591 = vmul.f32 %v3472, 1.442695
      %v3592 = vpow.pop %v3591
      %v3593 = vmul.f32 %v3473, 1.442695
      %v3594 = vpow.pop %v3593
      %v3595 = vmul.f32 %v3474, 1.442695
      %v3596 = vpow.pop %v3595
      %v3597 = vmul.f32 %v3475, 1.442695
      %v3598 = vpow.pop %v3597
      %v3599 = vmul.f32 %v3476, 1.442695
      %v3600 = vpow.pop %v3599
      %v3601 = vmul.f32 %v3477, 1.442695
      %v3602 = vpow.pop %v3601
      %v3603 = vmul.f32 %v3478, 1.442695
      %v3604 = vpow.pop %v3603
      %v3605 = vmul.f32 %v3479, 1.442695
      %v3606 = vpow.pop %v3605
      %v3607 = vmul.f32 %v3480, 1.442695
      %v3608 = vpow.pop %v3607
      %v3609 = vadd.f32 %v3482, %v3486
      %v3610 = vadd.f32 %v3609, %v3490
      %v3611 = vadd.f32 %v3610, %v3494
      %v3612 = vadd.f32 %v3611, %v3498
      %v3613 = vadd.f32 %v3612, %v3502
      %v3614 = vadd.f32 %v3613, %v3506
      %v3615 = vadd.f32 %v3614, %v3510
      %v3616 = vadd.f32 %v3615, %v3514
      %v3617 = vadd.f32 %v3616, %v3518
      %v3618 = vadd.f32 %v3617, %v3522
      %v3619 = vadd.f32 %v3618, %v3526
      %v3620 = vadd.f32 %v3619, %v3530
      %v3621 = vadd.f32 %v3620, %v3534
      %v3622 = vadd.f32 %v3621, %v3538
      %v3623 = vadd.f32 %v3622, %v3542
      %v3624 = vadd.f32 %v3623, %v3546
      %v3625 = vadd.f32 %v3624, %v3550
      %v3626 = vadd.f32 %v3625, %v3554
      %v3627 = vadd.f32 %v3626, %v3558
      %v3628 = vadd.f32 %v3627, %v3562
      %v3629 = vadd.f32 %v3628, %v3566
      %v3630 = vadd.f32 %v3629, %v3570
      %v3631 = vadd.f32 %v3630, %v3574
      %v3632 = vadd.f32 %v3631, %v3578
      %v3633 = vadd.f32 %v3632, %v3582
      %v3634 = vadd.f32 %v3633, %v3586
      %v3635 = vadd.f32 %v3634, %v3590
      %v3636 = vadd.f32 %v3635, %v3594
      %v3637 = vadd.f32 %v3636, %v3598
      %v3638 = vadd.f32 %v3637, %v3602
      %v3639 = vadd.f32 %v3638, %v3606
      %v3640 = vrot.slane %v3639, 4
      %v3641 = vadd.f32 %v3639, %v3640
      %v3642 = vrot.slane %v3641, 2
      %v3643 = vadd.f32 %v3641, %v3642
      %v3644 = vrot.slane %v3643, 1
      %v3645 = vadd.f32 %v3643, %v3644
      %v3646 = vadd.f32 %v3484, %v3488
      %v3647 = vadd.f32 %v3646, %v3492
      %v3648 = vadd.f32 %v3647, %v3496
      %v3649 = vadd.f32 %v3648, %v3500
      %v3650 = vadd.f32 %v3649, %v3504
      %v3651 = vadd.f32 %v3650, %v3508
      %v3652 = vadd.f32 %v3651, %v3512
      %v3653 = vadd.f32 %v3652, %v3516
      %v3654 = vadd.f32 %v3653, %v3520
      %v3655 = vadd.f32 %v3654, %v3524
      %v3656 = vadd.f32 %v3655, %v3528
      %v3657 = vadd.f32 %v3656, %v3532
      %v3658 = vadd.f32 %v3657, %v3536
      %v3659 = vadd.f32 %v3658, %v3540
      %v3660 = vadd.f32 %v3659, %v3544
      %v3661 = vadd.f32 %v3660, %v3548
      %v3662 = vadd.f32 %v3661, %v3552
      %v3663 = vadd.f32 %v3662, %v3556
      %v3664 = vadd.f32 %v3663, %v3560
      %v3665 = vadd.f32 %v3664, %v3564
      %v3666 = vadd.f32 %v3665, %v3568
      %v3667 = vadd.f32 %v3666, %v3572
      %v3668 = vadd.f32 %v3667, %v3576
      %v3669 = vadd.f32 %v3668, %v3580
      %v3670 = vadd.f32 %v3669, %v3584
      %v3671 = vadd.f32 %v3670, %v3588
      %v3672 = vadd.f32 %v3671, %v3592
      %v3673 = vadd.f32 %v3672, %v3596
      %v3674 = vadd.f32 %v3673, %v3600
      %v3675 = vadd.f32 %v3674, %v3604
      %v3676 = vadd.f32 %v3675, %v3608
      %v3677 = vrot.slane %v3676, 4
      %v3678 = vadd.f32 %v3676, %v3677
      %v3679 = vrot.slane %v3678, 2
      %v3680 = vadd.f32 %v3678, %v3679
      %v3681 = vrot.slane %v3680, 1
      %v3682 = vadd.f32 %v3680, %v3681
      %v3683 = vrcp.pop %v3645
      %v3684 = vrcp.pop %v3682
      %v3685 = vmul.bf16 %v453, %v3143
      %v3686 = vmul.bf16 %v454, %v3143
      %v3687 = vpack.c.bf16 %v3486, %v3482
      %v3688 = vpack.c.bf16 %v3488, %v3484
      %v3689 = vpack.c.bf16 %v3494, %v3490
      %v3690 = vpack.c.bf16 %v3496, %v3492
      %v3691 = vpack.c.bf16 %v3502, %v3498
      %v3692 = vpack.c.bf16 %v3504, %v3500
      %v3693 = vpack.c.bf16 %v3510, %v3506
      %v3694 = vpack.c.bf16 %v3512, %v3508
      %v3695 = vpack.c.bf16 %v3518, %v3514
      %v3696 = vpack.c.bf16 %v3520, %v3516
      %v3697 = vpack.c.bf16 %v3526, %v3522
      %v3698 = vpack.c.bf16 %v3528, %v3524
      %v3699 = vpack.c.bf16 %v3534, %v3530
      %v3700 = vpack.c.bf16 %v3536, %v3532
      %v3701 = vpack.c.bf16 %v3542, %v3538
      %v3702 = vpack.c.bf16 %v3544, %v3540
      %v3703 = vpack.c.bf16 %v3550, %v3546
      %v3704 = vpack.c.bf16 %v3552, %v3548
      %v3705 = vpack.c.bf16 %v3558, %v3554
      %v3706 = vpack.c.bf16 %v3560, %v3556
      %v3707 = vpack.c.bf16 %v3566, %v3562
      %v3708 = vpack.c.bf16 %v3568, %v3564
      %v3709 = vpack.c.bf16 %v3574, %v3570
      %v3710 = vpack.c.bf16 %v3576, %v3572
      %v3711 = vpack.c.bf16 %v3582, %v3578
      %v3712 = vpack.c.bf16 %v3584, %v3580
      %v3713 = vpack.c.bf16 %v3590, %v3586
      %v3714 = vpack.c.bf16 %v3592, %v3588
      %v3715 = vpack.c.bf16 %v3598, %v3594
      %v3716 = vpack.c.bf16 %v3600, %v3596
      %v3717 = vpack.c.bf16 %v3606, %v3602
      %v3718 = vpack.c.bf16 %v3608, %v3604
      %3719 = vmatprep.subr.bf16.mxu0 %v3688
      %3720 = vmatpush1.bf16.msra.mxu0 %v3687
      %3721 = vmatprep.subr.bf16.mxu0 %v3690
      %3722 = vmatpush1.bf16.msra.mxu0 %v3689
      %3723 = vmatprep.subr.bf16.mxu0 %v3692
      %3724 = vmatpush1.bf16.msra.mxu0 %v3691
      %3725 = vmatprep.subr.bf16.mxu0 %v3694
      %3726 = vmatpush1.bf16.msra.mxu0 %v3693
      %3727 = vmatprep.subr.bf16.mxu0 %v3696
      %3728 = vmatpush1.bf16.msra.mxu0 %v3695
      %3729 = vmatprep.subr.bf16.mxu0 %v3698
      %3730 = vmatpush1.bf16.msra.mxu0 %v3697
      %3731 = vmatprep.subr.bf16.mxu0 %v3700
      %3732 = vmatpush1.bf16.msra.mxu0 %v3699
      %3733 = vmatprep.subr.bf16.mxu0 %v3702
      %3734 = vmatpush1.bf16.msra.mxu0 %v3701
      %3735 = vmatprep.subr.bf16.mxu0 %v3704
      %3736 = vmatpush1.bf16.msra.mxu0 %v3703
      %3737 = vmatprep.subr.bf16.mxu0 %v3706
      %3738 = vmatpush1.bf16.msra.mxu0 %v3705
      %3739 = vmatprep.subr.bf16.mxu0 %v3708
      %3740 = vmatpush1.bf16.msra.mxu0 %v3707
      %3741 = vmatprep.subr.bf16.mxu0 %v3710
      %3742 = vmatpush1.bf16.msra.mxu0 %v3709
      %3743 = vmatprep.subr.bf16.mxu0 %v3712
      %3744 = vmatpush1.bf16.msra.mxu0 %v3711
      %3745 = vmatprep.subr.bf16.mxu0 %v3714
      %3746 = vmatpush1.bf16.msra.mxu0 %v3713
      %3747 = vmatprep.subr.bf16.mxu0 %v3716
      %3748 = vmatpush1.bf16.msra.mxu0 %v3715
      %3749 = vmatprep.subr.bf16.mxu0 %v3718
      %3750 = vmatpush1.bf16.msra.mxu0 %v3717
      %3751 = vmatprep.mubr.bf16.mxu0 %v3686
      %3752 = vmatmul.mubr.bf16.gmra.mrb[0].mxu0 %v3685
      %v3753 = vpop.f32.mrb[0].mxu0
      %v3754 = vadd.f32 0.0, %v3753
      %v3755 = vpop.f32.mrb[0].mxu0
      %v3756 = vadd.f32 0.0, %v3755
      %v3757 = vpop.f32.mrb[0].mxu0
      %v3758 = vadd.f32 0.0, %v3757
      %v3759 = vpop.f32.mrb[0].mxu0
      %v3760 = vadd.f32 0.0, %v3759
      %3761 = vdwg.mxu0
      %v3762 = vmul.f32 %v3754, %v3683
      %v3763 = vmul.f32 %v3756, %v3684
      %v3764 = vmul.f32 %v3758, %v3683
      %v3765 = vmul.f32 %v3760, %v3684
      %v3766 = vadd.f32 %v3115, %v3762
      %v3767 = vadd.f32 %v3116, %v3763
      %v3768 = vadd.f32 %v3117, %v3764
      %v3769 = vadd.f32 %v3118, %v3765
      %vm3770 = vcmp.ge.s32.totalorder %v364, 10
      %vm3771 = vcmp.ge.s32.totalorder %v455, 10
      %vm3772 = vcmp.ge.s32.totalorder %v456, 10
      %vm3773 = vcmp.lt.s32.totalorder %v364, 12
      %vm3774 = vcmp.lt.s32.totalorder %v455, 12
      %vm3775 = vcmp.lt.s32.totalorder %v456, 12
      %vm3776 = vmand %vm3770, %vm3773
      %vm3777 = vmand %vm3771, %vm3774
      %vm3778 = vmand %vm3772, %vm3775
      %vm3779 = vmor %vm3776, %vm471
      %vm3780 = vmor %vm3777, %vm472
      %vm3781 = vmor %vm3778, %vm473
      %v3782 = vsel %vm3779, 1, 0
      %v3783 = vsel %vm3780, 1, 0
      %v3784 = vsel %vm3781, 1, 0
      %v3785 = vcvt.s32.f32 %v3782
      %v3786 = vcvt.s32.f32 %v3783
      %v3787 = vcvt.s32.f32 %v3784
      %v3788 = vpack.c.bf16 %v3786, %v3785
      %v3789 = vpack.c.bf16 %v3787, %v3787
      %v3790 = vsel %vm3776, 1, 0
      %v3791 = vsel %vm3777, 1, 0
      %v3792 = vcvt.s32.f32 %v3790
      %v3793 = vcvt.s32.f32 %v3791
      %v3794 = vpack.c.bf16 %v3793, %v3792
      %v3795 = vmul.bf16 %v370, %v3788
      %v3796 = vmul.bf16 %v371, %v3788
      %v3797 = vmul.bf16 %v372, %v3789
      %v3799 = vsel %vm542, %v3797, 0
      %3801 = vmatprep.subr.bf16.mxu0 %v3796
      %3802 = vmatpush1.bf16.msra.mxu0 %v3795
      %3803 = vmatprep.subr.bf16.mxu0 %v3799
      %3804 = vmatpush1.bf16.msra.mxu0 %v3799
      %3805 = vmatprep.subr.bf16.mxu0 0
      %3806 = vmatpush1.bf16.msra.mxu0 0
      %3807 = vmatprep.subr.bf16.mxu0 0
      %3808 = vmatpush1.bf16.msra.mxu0 0
      %3809 = vmatprep.subr.bf16.mxu0 0
      %3810 = vmatpush1.bf16.msra.mxu0 0
      %3811 = vmatprep.subr.bf16.mxu0 0
      %3812 = vmatpush1.bf16.msra.mxu0 0
      %3813 = vmatprep.subr.bf16.mxu0 0
      %3814 = vmatpush1.bf16.msra.mxu0 0
      %3815 = vmatprep.subr.bf16.mxu0 0
      %3816 = vmatpush1.bf16.msra.mxu0 0
      %3817 = vmatprep.subr.bf16.mxu0 0
      %3818 = vmatpush1.bf16.msra.mxu0 0
      %3819 = vmatprep.subr.bf16.mxu0 0
      %3820 = vmatpush1.bf16.msra.mxu0 0
      %3821 = vmatprep.subr.bf16.mxu0 0
      %3822 = vmatpush1.bf16.msra.mxu0 0
      %3823 = vmatprep.subr.bf16.mxu0 0
      %3824 = vmatpush1.bf16.msra.mxu0 0
      %3825 = vmatprep.subr.bf16.mxu0 0
      %3826 = vmatpush1.bf16.msra.mxu0 0
      %3827 = vmatprep.subr.bf16.mxu0 0
      %3828 = vmatpush1.bf16.msra.mxu0 0
      %3829 = vmatprep.subr.bf16.mxu0 0
      %3830 = vmatpush1.bf16.msra.mxu0 0
      %3831 = vmatprep.subr.bf16.mxu0 0
      %3832 = vmatpush1.bf16.msra.mxu0 0
      %3833 = vmatprep.mubr.bf16.mxu0 0
      %3834 = vmatmul.mubr.bf16.gmra.mrb[0].mxu0 %v495
      %v3835 = vpop.f32.mrb[0].mxu0
      %v3836 = vadd.f32 0.0, %v3835
      %v3837 = vpop.f32.mrb[0].mxu0
      %v3838 = vadd.f32 0.0, %v3837
      %v3839 = vpop.f32.mrb[0].mxu0
      %v3840 = vadd.f32 0.0, %v3839
      %v3841 = vpop.f32.mrb[0].mxu0
      %v3842 = vadd.f32 0.0, %v3841
      %3843 = vmatprep.mubr.bf16.mxu0 0
      %3844 = vmatmul.mubr.bf16.gmra.mrb[0].mxu0 %v498
      %v3845 = vpop.f32.mrb[0].mxu0
      %v3846 = vadd.f32 0.0, %v3845
      %v3847 = vpop.f32.mrb[0].mxu0
      %v3848 = vadd.f32 0.0, %v3847
      %v3849 = vpop.f32.mrb[0].mxu0
      %v3850 = vadd.f32 0.0, %v3849
      %v3851 = vpop.f32.mrb[0].mxu0
      %v3852 = vadd.f32 0.0, %v3851
      %3853 = vmatprep.mubr.bf16.mxu0 0
      %3854 = vmatmul.mubr.bf16.gmra.mrb[0].mxu0 %v501
      %v3855 = vpop.f32.mrb[0].mxu0
      %v3856 = vadd.f32 0.0, %v3855
      %v3857 = vpop.f32.mrb[0].mxu0
      %v3858 = vadd.f32 0.0, %v3857
      %v3859 = vpop.f32.mrb[0].mxu0
      %v3860 = vadd.f32 0.0, %v3859
      %v3861 = vpop.f32.mrb[0].mxu0
      %v3862 = vadd.f32 0.0, %v3861
      %3863 = vmatprep.mubr.bf16.mxu0 0
      %3864 = vmatmul.mubr.bf16.gmra.mrb[0].mxu0 %v504
      %v3865 = vpop.f32.mrb[0].mxu0
      %v3866 = vadd.f32 0.0, %v3865
      %v3867 = vpop.f32.mrb[0].mxu0
      %v3868 = vadd.f32 0.0, %v3867
      %v3869 = vpop.f32.mrb[0].mxu0
      %v3870 = vadd.f32 0.0, %v3869
      %v3871 = vpop.f32.mrb[0].mxu0
      %v3872 = vadd.f32 0.0, %v3871
      %3873 = vmatprep.mubr.bf16.mxu0 0
      %3874 = vmatmul.mubr.bf16.gmra.mrb[0].mxu0 %v507
      %v3875 = vpop.f32.mrb[0].mxu0
      %v3876 = vadd.f32 0.0, %v3875
      %v3877 = vpop.f32.mrb[0].mxu0
      %v3878 = vadd.f32 0.0, %v3877
      %v3879 = vpop.f32.mrb[0].mxu0
      %v3880 = vadd.f32 0.0, %v3879
      %v3881 = vpop.f32.mrb[0].mxu0
      %v3882 = vadd.f32 0.0, %v3881
      %3883 = vmatprep.mubr.bf16.mxu0 0
      %3884 = vmatmul.mubr.bf16.gmra.mrb[0].mxu0 %v510
      %v3885 = vpop.f32.mrb[0].mxu0
      %v3886 = vadd.f32 0.0, %v3885
      %v3887 = vpop.f32.mrb[0].mxu0
      %v3888 = vadd.f32 0.0, %v3887
      %v3889 = vpop.f32.mrb[0].mxu0
      %v3890 = vadd.f32 0.0, %v3889
      %v3891 = vpop.f32.mrb[0].mxu0
      %v3892 = vadd.f32 0.0, %v3891
      %3893 = vmatprep.mubr.bf16.mxu0 0
      %3894 = vmatmul.mubr.bf16.gmra.mrb[0].mxu0 %v513
      %v3895 = vpop.f32.mrb[0].mxu0
      %v3896 = vadd.f32 0.0, %v3895
      %v3897 = vpop.f32.mrb[0].mxu0
      %v3898 = vadd.f32 0.0, %v3897
      %v3899 = vpop.f32.mrb[0].mxu0
      %v3900 = vadd.f32 0.0, %v3899
      %v3901 = vpop.f32.mrb[0].mxu0
      %v3902 = vadd.f32 0.0, %v3901
      %3903 = vmatprep.mubr.bf16.mxu0 0
      %3904 = vmatmul.mubr.bf16.gmra.mrb[0].mxu0 %v516
      %v3905 = vpop.f32.mrb[0].mxu0
      %v3906 = vadd.f32 0.0, %v3905
      %v3907 = vpop.f32.mrb[0].mxu0
      %v3908 = vadd.f32 0.0, %v3907
      %v3909 = vpop.f32.mrb[0].mxu0
      %v3910 = vadd.f32 0.0, %v3909
      %v3911 = vpop.f32.mrb[0].mxu0
      %v3912 = vadd.f32 0.0, %v3911
      %3913 = vmatprep.mubr.bf16.mxu0 0
      %3914 = vmatmul.mubr.bf16.gmra.mrb[0].mxu0 %v519
      %v3915 = vpop.f32.mrb[0].mxu0
      %v3916 = vadd.f32 0.0, %v3915
      %v3917 = vpop.f32.mrb[0].mxu0
      %v3918 = vadd.f32 0.0, %v3917
      %v3919 = vpop.f32.mrb[0].mxu0
      %v3920 = vadd.f32 0.0, %v3919
      %v3921 = vpop.f32.mrb[0].mxu0
      %v3922 = vadd.f32 0.0, %v3921
      %3923 = vmatprep.mubr.bf16.mxu0 0
      %3924 = vmatmul.mubr.bf16.gmra.mrb[0].mxu0 %v522
      %v3925 = vpop.f32.mrb[0].mxu0
      %v3926 = vadd.f32 0.0, %v3925
      %v3927 = vpop.f32.mrb[0].mxu0
      %v3928 = vadd.f32 0.0, %v3927
      %v3929 = vpop.f32.mrb[0].mxu0
      %v3930 = vadd.f32 0.0, %v3929
      %v3931 = vpop.f32.mrb[0].mxu0
      %v3932 = vadd.f32 0.0, %v3931
      %3933 = vmatprep.mubr.bf16.mxu0 0
      %3934 = vmatmul.mubr.bf16.gmra.mrb[0].mxu0 %v525
      %v3935 = vpop.f32.mrb[0].mxu0
      %v3936 = vadd.f32 0.0, %v3935
      %v3937 = vpop.f32.mrb[0].mxu0
      %v3938 = vadd.f32 0.0, %v3937
      %v3939 = vpop.f32.mrb[0].mxu0
      %v3940 = vadd.f32 0.0, %v3939
      %v3941 = vpop.f32.mrb[0].mxu0
      %v3942 = vadd.f32 0.0, %v3941
      %3943 = vmatprep.mubr.bf16.mxu0 0
      %3944 = vmatmul.mubr.bf16.gmra.mrb[0].mxu0 %v528
      %v3945 = vpop.f32.mrb[0].mxu0
      %v3946 = vadd.f32 0.0, %v3945
      %v3947 = vpop.f32.mrb[0].mxu0
      %v3948 = vadd.f32 0.0, %v3947
      %v3949 = vpop.f32.mrb[0].mxu0
      %v3950 = vadd.f32 0.0, %v3949
      %v3951 = vpop.f32.mrb[0].mxu0
      %v3952 = vadd.f32 0.0, %v3951
      %3953 = vmatprep.mubr.bf16.mxu0 0
      %3954 = vmatmul.mubr.bf16.gmra.mrb[0].mxu0 %v531
      %v3955 = vpop.f32.mrb[0].mxu0
      %v3956 = vadd.f32 0.0, %v3955
      %v3957 = vpop.f32.mrb[0].mxu0
      %v3958 = vadd.f32 0.0, %v3957
      %v3959 = vpop.f32.mrb[0].mxu0
      %v3960 = vadd.f32 0.0, %v3959
      %v3961 = vpop.f32.mrb[0].mxu0
      %v3962 = vadd.f32 0.0, %v3961
      %3963 = vmatprep.mubr.bf16.mxu0 0
      %3964 = vmatmul.mubr.bf16.gmra.mrb[0].mxu0 %v534
      %v3965 = vpop.f32.mrb[0].mxu0
      %v3966 = vadd.f32 0.0, %v3965
      %v3967 = vpop.f32.mrb[0].mxu0
      %v3968 = vadd.f32 0.0, %v3967
      %v3969 = vpop.f32.mrb[0].mxu0
      %v3970 = vadd.f32 0.0, %v3969
      %v3971 = vpop.f32.mrb[0].mxu0
      %v3972 = vadd.f32 0.0, %v3971
      %3973 = vmatprep.mubr.bf16.mxu0 0
      %3974 = vmatmul.mubr.bf16.gmra.mrb[0].mxu0 %v537
      %v3975 = vpop.f32.mrb[0].mxu0
      %v3976 = vadd.f32 0.0, %v3975
      %v3977 = vpop.f32.mrb[0].mxu0
      %v3978 = vadd.f32 0.0, %v3977
      %v3979 = vpop.f32.mrb[0].mxu0
      %v3980 = vadd.f32 0.0, %v3979
      %v3981 = vpop.f32.mrb[0].mxu0
      %v3982 = vadd.f32 0.0, %v3981
      %3983 = vmatprep.mubr.bf16.mxu0 0
      %3984 = vmatmul.mubr.bf16.gmra.mrb[0].mxu0 %v540
      %v3985 = vpop.f32.mrb[0].mxu0
      %v3986 = vadd.f32 0.0, %v3985
      %v3987 = vpop.f32.mrb[0].mxu0
      %v3988 = vadd.f32 0.0, %v3987
      %v3989 = vpop.f32.mrb[0].mxu0
      %v3990 = vadd.f32 0.0, %v3989
      %v3991 = vpop.f32.mrb[0].mxu0
      %v3992 = vadd.f32 0.0, %v3991
      %3993 = vdwg.mxu0
      %v3994 = vmax.f32 %v3836, %v3846
      %v3995 = vmax.f32 %v3840, %v3850
      %v3996 = vmax.f32 %v3994, %v3856
      %v3997 = vmax.f32 %v3995, %v3860
      %v3998 = vmax.f32 %v3996, %v3866
      %v3999 = vmax.f32 %v3997, %v3870
      %v4000 = vmax.f32 %v3998, %v3876
      %v4001 = vmax.f32 %v3999, %v3880
      %v4002 = vmax.f32 %v4000, %v3886
      %v4003 = vmax.f32 %v4001, %v3890
      %v4004 = vmax.f32 %v4002, %v3896
      %v4005 = vmax.f32 %v4003, %v3900
      %v4006 = vmax.f32 %v4004, %v3906
      %v4007 = vmax.f32 %v4005, %v3910
      %v4008 = vmax.f32 %v4006, %v3916
      %v4009 = vmax.f32 %v4007, %v3920
      %v4010 = vmax.f32 %v4008, %v3926
      %v4011 = vmax.f32 %v4009, %v3930
      %v4012 = vmax.f32 %v4010, %v3936
      %v4013 = vmax.f32 %v4011, %v3940
      %v4014 = vmax.f32 %v4012, %v3946
      %v4015 = vmax.f32 %v4013, %v3950
      %v4016 = vmax.f32 %v4014, %v3956
      %v4017 = vmax.f32 %v4015, %v3960
      %v4018 = vmax.f32 %v4016, %v3966
      %v4019 = vmax.f32 %v4017, %v3970
      %v4020 = vmax.f32 %v4018, %v3976
      %v4021 = vmax.f32 %v4019, %v3980
      %v4022 = vmax.f32 %v4020, %v3986
      %v4023 = vmax.f32 %v4021, %v3990
      %v4024 = vmax.f32 %v4022, %v4023
      %v4025 = vrot.slane %v4024, 4
      %v4026 = vmax.f32 %v4024, %v4025
      %v4027 = vrot.slane %v4026, 2
      %v4028 = vmax.f32 %v4026, %v4027
      %v4029 = vrot.slane %v4028, 1
      %v4030 = vmax.f32 %v4028, %v4029
      %v4031 = vmax.f32 %v3838, %v3848
      %v4032 = vmax.f32 %v3842, %v3852
      %v4033 = vmax.f32 %v4031, %v3858
      %v4034 = vmax.f32 %v4032, %v3862
      %v4035 = vmax.f32 %v4033, %v3868
      %v4036 = vmax.f32 %v4034, %v3872
      %v4037 = vmax.f32 %v4035, %v3878
      %v4038 = vmax.f32 %v4036, %v3882
      %v4039 = vmax.f32 %v4037, %v3888
      %v4040 = vmax.f32 %v4038, %v3892
      %v4041 = vmax.f32 %v4039, %v3898
      %v4042 = vmax.f32 %v4040, %v3902
      %v4043 = vmax.f32 %v4041, %v3908
      %v4044 = vmax.f32 %v4042, %v3912
      %v4045 = vmax.f32 %v4043, %v3918
      %v4046 = vmax.f32 %v4044, %v3922
      %v4047 = vmax.f32 %v4045, %v3928
      %v4048 = vmax.f32 %v4046, %v3932
      %v4049 = vmax.f32 %v4047, %v3938
      %v4050 = vmax.f32 %v4048, %v3942
      %v4051 = vmax.f32 %v4049, %v3948
      %v4052 = vmax.f32 %v4050, %v3952
      %v4053 = vmax.f32 %v4051, %v3958
      %v4054 = vmax.f32 %v4052, %v3962
      %v4055 = vmax.f32 %v4053, %v3968
      %v4056 = vmax.f32 %v4054, %v3972
      %v4057 = vmax.f32 %v4055, %v3978
      %v4058 = vmax.f32 %v4056, %v3982
      %v4059 = vmax.f32 %v4057, %v3988
      %v4060 = vmax.f32 %v4058, %v3992
      %v4061 = vmax.f32 %v4059, %v4060
      %v4062 = vrot.slane %v4061, 4
      %v4063 = vmax.f32 %v4061, %v4062
      %v4064 = vrot.slane %v4063, 2
      %v4065 = vmax.f32 %v4063, %v4064
      %v4066 = vrot.slane %v4065, 1
      %v4067 = vmax.f32 %v4065, %v4066
      %v4068 = vsub.f32 %v3836, %v4030
      %v4069 = vsub.f32 %v3838, %v4067
      %v4070 = vsub.f32 %v3840, %v4030
      %v4071 = vsub.f32 %v3842, %v4067
      %v4072 = vsub.f32 %v3846, %v4030
      %v4073 = vsub.f32 %v3848, %v4067
      %v4074 = vsub.f32 %v3850, %v4030
      %v4075 = vsub.f32 %v3852, %v4067
      %v4076 = vsub.f32 %v3856, %v4030
      %v4077 = vsub.f32 %v3858, %v4067
      %v4078 = vsub.f32 %v3860, %v4030
      %v4079 = vsub.f32 %v3862, %v4067
      %v4080 = vsub.f32 %v3866, %v4030
      %v4081 = vsub.f32 %v3868, %v4067
      %v4082 = vsub.f32 %v3870, %v4030
      %v4083 = vsub.f32 %v3872, %v4067
      %v4084 = vsub.f32 %v3876, %v4030
      %v4085 = vsub.f32 %v3878, %v4067
      %v4086 = vsub.f32 %v3880, %v4030
      %v4087 = vsub.f32 %v3882, %v4067
      %v4088 = vsub.f32 %v3886, %v4030
      %v4089 = vsub.f32 %v3888, %v4067
      %v4090 = vsub.f32 %v3890, %v4030
      %v4091 = vsub.f32 %v3892, %v4067
      %v4092 = vsub.f32 %v3896, %v4030
      %v4093 = vsub.f32 %v3898, %v4067
      %v4094 = vsub.f32 %v3900, %v4030
      %v4095 = vsub.f32 %v3902, %v4067
      %v4096 = vsub.f32 %v3906, %v4030
      %v4097 = vsub.f32 %v3908, %v4067
      %v4098 = vsub.f32 %v3910, %v4030
      %v4099 = vsub.f32 %v3912, %v4067
      %v4100 = vsub.f32 %v3916, %v4030
      %v4101 = vsub.f32 %v3918, %v4067
      %v4102 = vsub.f32 %v3920, %v4030
      %v4103 = vsub.f32 %v3922, %v4067
      %v4104 = vsub.f32 %v3926, %v4030
      %v4105 = vsub.f32 %v3928, %v4067
      %v4106 = vsub.f32 %v3930, %v4030
      %v4107 = vsub.f32 %v3932, %v4067
      %v4108 = vsub.f32 %v3936, %v4030
      %v4109 = vsub.f32 %v3938, %v4067
      %v4110 = vsub.f32 %v3940, %v4030
      %v4111 = vsub.f32 %v3942, %v4067
      %v4112 = vsub.f32 %v3946, %v4030
      %v4113 = vsub.f32 %v3948, %v4067
      %v4114 = vsub.f32 %v3950, %v4030
      %v4115 = vsub.f32 %v3952, %v4067
      %v4116 = vsub.f32 %v3956, %v4030
      %v4117 = vsub.f32 %v3958, %v4067
      %v4118 = vsub.f32 %v3960, %v4030
      %v4119 = vsub.f32 %v3962, %v4067
      %v4120 = vsub.f32 %v3966, %v4030
      %v4121 = vsub.f32 %v3968, %v4067
      %v4122 = vsub.f32 %v3970, %v4030
      %v4123 = vsub.f32 %v3972, %v4067
      %v4124 = vsub.f32 %v3976, %v4030
      %v4125 = vsub.f32 %v3978, %v4067
      %v4126 = vsub.f32 %v3980, %v4030
      %v4127 = vsub.f32 %v3982, %v4067
      %v4128 = vsub.f32 %v3986, %v4030
      %v4129 = vsub.f32 %v3988, %v4067
      %v4130 = vsub.f32 %v3990, %v4030
      %v4131 = vsub.f32 %v3992, %v4067
      %v4132 = vmul.f32 %v4068, 1.442695
      %v4133 = vpow.pop %v4132
      %v4134 = vmul.f32 %v4069, 1.442695
      %v4135 = vpow.pop %v4134
      %v4136 = vmul.f32 %v4070, 1.442695
      %v4137 = vpow.pop %v4136
      %v4138 = vmul.f32 %v4071, 1.442695
      %v4139 = vpow.pop %v4138
      %v4140 = vmul.f32 %v4072, 1.442695
      %v4141 = vpow.pop %v4140
      %v4142 = vmul.f32 %v4073, 1.442695
      %v4143 = vpow.pop %v4142
      %v4144 = vmul.f32 %v4074, 1.442695
      %v4145 = vpow.pop %v4144
      %v4146 = vmul.f32 %v4075, 1.442695
      %v4147 = vpow.pop %v4146
      %v4148 = vmul.f32 %v4076, 1.442695
      %v4149 = vpow.pop %v4148
      %v4150 = vmul.f32 %v4077, 1.442695
      %v4151 = vpow.pop %v4150
      %v4152 = vmul.f32 %v4078, 1.442695
      %v4153 = vpow.pop %v4152
      %v4154 = vmul.f32 %v4079, 1.442695
      %v4155 = vpow.pop %v4154
      %v4156 = vmul.f32 %v4080, 1.442695
      %v4157 = vpow.pop %v4156
      %v4158 = vmul.f32 %v4081, 1.442695
      %v4159 = vpow.pop %v4158
      %v4160 = vmul.f32 %v4082, 1.442695
      %v4161 = vpow.pop %v4160
      %v4162 = vmul.f32 %v4083, 1.442695
      %v4163 = vpow.pop %v4162
      %v4164 = vmul.f32 %v4084, 1.442695
      %v4165 = vpow.pop %v4164
      %v4166 = vmul.f32 %v4085, 1.442695
      %v4167 = vpow.pop %v4166
      %v4168 = vmul.f32 %v4086, 1.442695
      %v4169 = vpow.pop %v4168
      %v4170 = vmul.f32 %v4087, 1.442695
      %v4171 = vpow.pop %v4170
      %v4172 = vmul.f32 %v4088, 1.442695
      %v4173 = vpow.pop %v4172
      %v4174 = vmul.f32 %v4089, 1.442695
      %v4175 = vpow.pop %v4174
      %v4176 = vmul.f32 %v4090, 1.442695
      %v4177 = vpow.pop %v4176
      %v4178 = vmul.f32 %v4091, 1.442695
      %v4179 = vpow.pop %v4178
      %v4180 = vmul.f32 %v4092, 1.442695
      %v4181 = vpow.pop %v4180
      %v4182 = vmul.f32 %v4093, 1.442695
      %v4183 = vpow.pop %v4182
      %v4184 = vmul.f32 %v4094, 1.442695
      %v4185 = vpow.pop %v4184
      %v4186 = vmul.f32 %v4095, 1.442695
      %v4187 = vpow.pop %v4186
      %v4188 = vmul.f32 %v4096, 1.442695
      %v4189 = vpow.pop %v4188
      %v4190 = vmul.f32 %v4097, 1.442695
      %v4191 = vpow.pop %v4190
      %v4192 = vmul.f32 %v4098, 1.442695
      %v4193 = vpow.pop %v4192
      %v4194 = vmul.f32 %v4099, 1.442695
      %v4195 = vpow.pop %v4194
      %v4196 = vmul.f32 %v4100, 1.442695
      %v4197 = vpow.pop %v4196
      %v4198 = vmul.f32 %v4101, 1.442695
      %v4199 = vpow.pop %v4198
      %v4200 = vmul.f32 %v4102, 1.442695
      %v4201 = vpow.pop %v4200
      %v4202 = vmul.f32 %v4103, 1.442695
      %v4203 = vpow.pop %v4202
      %v4204 = vmul.f32 %v4104, 1.442695
      %v4205 = vpow.pop %v4204
      %v4206 = vmul.f32 %v4105, 1.442695
      %v4207 = vpow.pop %v4206
      %v4208 = vmul.f32 %v4106, 1.442695
      %v4209 = vpow.pop %v4208
      %v4210 = vmul.f32 %v4107, 1.442695
      %v4211 = vpow.pop %v4210
      %v4212 = vmul.f32 %v4108, 1.442695
      %v4213 = vpow.pop %v4212
      %v4214 = vmul.f32 %v4109, 1.442695
      %v4215 = vpow.pop %v4214
      %v4216 = vmul.f32 %v4110, 1.442695
      %v4217 = vpow.pop %v4216
      %v4218 = vmul.f32 %v4111, 1.442695
      %v4219 = vpow.pop %v4218
      %v4220 = vmul.f32 %v4112, 1.442695
      %v4221 = vpow.pop %v4220
      %v4222 = vmul.f32 %v4113, 1.442695
      %v4223 = vpow.pop %v4222
      %v4224 = vmul.f32 %v4114, 1.442695
      %v4225 = vpow.pop %v4224
      %v4226 = vmul.f32 %v4115, 1.442695
      %v4227 = vpow.pop %v4226
      %v4228 = vmul.f32 %v4116, 1.442695
      %v4229 = vpow.pop %v4228
      %v4230 = vmul.f32 %v4117, 1.442695
      %v4231 = vpow.pop %v4230
      %v4232 = vmul.f32 %v4118, 1.442695
      %v4233 = vpow.pop %v4232
      %v4234 = vmul.f32 %v4119, 1.442695
      %v4235 = vpow.pop %v4234
      %v4236 = vmul.f32 %v4120, 1.442695
      %v4237 = vpow.pop %v4236
      %v4238 = vmul.f32 %v4121, 1.442695
      %v4239 = vpow.pop %v4238
      %v4240 = vmul.f32 %v4122, 1.442695
      %v4241 = vpow.pop %v4240
      %v4242 = vmul.f32 %v4123, 1.442695
      %v4243 = vpow.pop %v4242
      %v4244 = vmul.f32 %v4124, 1.442695
      %v4245 = vpow.pop %v4244
      %v4246 = vmul.f32 %v4125, 1.442695
      %v4247 = vpow.pop %v4246
      %v4248 = vmul.f32 %v4126, 1.442695
      %v4249 = vpow.pop %v4248
      %v4250 = vmul.f32 %v4127, 1.442695
      %v4251 = vpow.pop %v4250
      %v4252 = vmul.f32 %v4128, 1.442695
      %v4253 = vpow.pop %v4252
      %v4254 = vmul.f32 %v4129, 1.442695
      %v4255 = vpow.pop %v4254
      %v4256 = vmul.f32 %v4130, 1.442695
      %v4257 = vpow.pop %v4256
      %v4258 = vmul.f32 %v4131, 1.442695
      %v4259 = vpow.pop %v4258
      %v4260 = vadd.f32 %v4133, %v4137
      %v4261 = vadd.f32 %v4260, %v4141
      %v4262 = vadd.f32 %v4261, %v4145
      %v4263 = vadd.f32 %v4262, %v4149
      %v4264 = vadd.f32 %v4263, %v4153
      %v4265 = vadd.f32 %v4264, %v4157
      %v4266 = vadd.f32 %v4265, %v4161
      %v4267 = vadd.f32 %v4266, %v4165
      %v4268 = vadd.f32 %v4267, %v4169
      %v4269 = vadd.f32 %v4268, %v4173
      %v4270 = vadd.f32 %v4269, %v4177
      %v4271 = vadd.f32 %v4270, %v4181
      %v4272 = vadd.f32 %v4271, %v4185
      %v4273 = vadd.f32 %v4272, %v4189
      %v4274 = vadd.f32 %v4273, %v4193
      %v4275 = vadd.f32 %v4274, %v4197
      %v4276 = vadd.f32 %v4275, %v4201
      %v4277 = vadd.f32 %v4276, %v4205
      %v4278 = vadd.f32 %v4277, %v4209
      %v4279 = vadd.f32 %v4278, %v4213
      %v4280 = vadd.f32 %v4279, %v4217
      %v4281 = vadd.f32 %v4280, %v4221
      %v4282 = vadd.f32 %v4281, %v4225
      %v4283 = vadd.f32 %v4282, %v4229
      %v4284 = vadd.f32 %v4283, %v4233
      %v4285 = vadd.f32 %v4284, %v4237
      %v4286 = vadd.f32 %v4285, %v4241
      %v4287 = vadd.f32 %v4286, %v4245
      %v4288 = vadd.f32 %v4287, %v4249
      %v4289 = vadd.f32 %v4288, %v4253
      %v4290 = vadd.f32 %v4289, %v4257
      %v4291 = vrot.slane %v4290, 4
      %v4292 = vadd.f32 %v4290, %v4291
      %v4293 = vrot.slane %v4292, 2
      %v4294 = vadd.f32 %v4292, %v4293
      %v4295 = vrot.slane %v4294, 1
      %v4296 = vadd.f32 %v4294, %v4295
      %v4297 = vadd.f32 %v4135, %v4139
      %v4298 = vadd.f32 %v4297, %v4143
      %v4299 = vadd.f32 %v4298, %v4147
      %v4300 = vadd.f32 %v4299, %v4151
      %v4301 = vadd.f32 %v4300, %v4155
      %v4302 = vadd.f32 %v4301, %v4159
      %v4303 = vadd.f32 %v4302, %v4163
      %v4304 = vadd.f32 %v4303, %v4167
      %v4305 = vadd.f32 %v4304, %v4171
      %v4306 = vadd.f32 %v4305, %v4175
      %v4307 = vadd.f32 %v4306, %v4179
      %v4308 = vadd.f32 %v4307, %v4183
      %v4309 = vadd.f32 %v4308, %v4187
      %v4310 = vadd.f32 %v4309, %v4191
      %v4311 = vadd.f32 %v4310, %v4195
      %v4312 = vadd.f32 %v4311, %v4199
      %v4313 = vadd.f32 %v4312, %v4203
      %v4314 = vadd.f32 %v4313, %v4207
      %v4315 = vadd.f32 %v4314, %v4211
      %v4316 = vadd.f32 %v4315, %v4215
      %v4317 = vadd.f32 %v4316, %v4219
      %v4318 = vadd.f32 %v4317, %v4223
      %v4319 = vadd.f32 %v4318, %v4227
      %v4320 = vadd.f32 %v4319, %v4231
      %v4321 = vadd.f32 %v4320, %v4235
      %v4322 = vadd.f32 %v4321, %v4239
      %v4323 = vadd.f32 %v4322, %v4243
      %v4324 = vadd.f32 %v4323, %v4247
      %v4325 = vadd.f32 %v4324, %v4251
      %v4326 = vadd.f32 %v4325, %v4255
      %v4327 = vadd.f32 %v4326, %v4259
      %v4328 = vrot.slane %v4327, 4
      %v4329 = vadd.f32 %v4327, %v4328
      %v4330 = vrot.slane %v4329, 2
      %v4331 = vadd.f32 %v4329, %v4330
      %v4332 = vrot.slane %v4331, 1
      %v4333 = vadd.f32 %v4331, %v4332
      %v4334 = vrcp.pop %v4296
      %v4335 = vrcp.pop %v4333
      %v4336 = vmul.bf16 %v453, %v3794
      %v4337 = vmul.bf16 %v454, %v3794
      %v4338 = vpack.c.bf16 %v4137, %v4133
      %v4339 = vpack.c.bf16 %v4139, %v4135
      %v4340 = vpack.c.bf16 %v4145, %v4141
      %v4341 = vpack.c.bf16 %v4147, %v4143
      %v4342 = vpack.c.bf16 %v4153, %v4149
      %v4343 = vpack.c.bf16 %v4155, %v4151
      %v4344 = vpack.c.bf16 %v4161, %v4157
      %v4345 = vpack.c.bf16 %v4163, %v4159
      %v4346 = vpack.c.bf16 %v4169, %v4165
      %v4347 = vpack.c.bf16 %v4171, %v4167
      %v4348 = vpack.c.bf16 %v4177, %v4173
      %v4349 = vpack.c.bf16 %v4179, %v4175
      %v4350 = vpack.c.bf16 %v4185, %v4181
      %v4351 = vpack.c.bf16 %v4187, %v4183
      %v4352 = vpack.c.bf16 %v4193, %v4189
      %v4353 = vpack.c.bf16 %v4195, %v4191
      %v4354 = vpack.c.bf16 %v4201, %v4197
      %v4355 = vpack.c.bf16 %v4203, %v4199
      %v4356 = vpack.c.bf16 %v4209, %v4205
      %v4357 = vpack.c.bf16 %v4211, %v4207
      %v4358 = vpack.c.bf16 %v4217, %v4213
      %v4359 = vpack.c.bf16 %v4219, %v4215
      %v4360 = vpack.c.bf16 %v4225, %v4221
      %v4361 = vpack.c.bf16 %v4227, %v4223
      %v4362 = vpack.c.bf16 %v4233, %v4229
      %v4363 = vpack.c.bf16 %v4235, %v4231
      %v4364 = vpack.c.bf16 %v4241, %v4237
      %v4365 = vpack.c.bf16 %v4243, %v4239
      %v4366 = vpack.c.bf16 %v4249, %v4245
      %v4367 = vpack.c.bf16 %v4251, %v4247
      %v4368 = vpack.c.bf16 %v4257, %v4253
      %v4369 = vpack.c.bf16 %v4259, %v4255
      %4370 = vmatprep.subr.bf16.mxu0 %v4339
      %4371 = vmatpush1.bf16.msra.mxu0 %v4338
      %4372 = vmatprep.subr.bf16.mxu0 %v4341
      %4373 = vmatpush1.bf16.msra.mxu0 %v4340
      %4374 = vmatprep.subr.bf16.mxu0 %v4343
      %4375 = vmatpush1.bf16.msra.mxu0 %v4342
      %4376 = vmatprep.subr.bf16.mxu0 %v4345
      %4377 = vmatpush1.bf16.msra.mxu0 %v4344
      %4378 = vmatprep.subr.bf16.mxu0 %v4347
      %4379 = vmatpush1.bf16.msra.mxu0 %v4346
      %4380 = vmatprep.subr.bf16.mxu0 %v4349
      %4381 = vmatpush1.bf16.msra.mxu0 %v4348
      %4382 = vmatprep.subr.bf16.mxu0 %v4351
      %4383 = vmatpush1.bf16.msra.mxu0 %v4350
      %4384 = vmatprep.subr.bf16.mxu0 %v4353
      %4385 = vmatpush1.bf16.msra.mxu0 %v4352
      %4386 = vmatprep.subr.bf16.mxu0 %v4355
      %4387 = vmatpush1.bf16.msra.mxu0 %v4354
      %4388 = vmatprep.subr.bf16.mxu0 %v4357
      %4389 = vmatpush1.bf16.msra.mxu0 %v4356
      %4390 = vmatprep.subr.bf16.mxu0 %v4359
      %4391 = vmatpush1.bf16.msra.mxu0 %v4358
      %4392 = vmatprep.subr.bf16.mxu0 %v4361
      %4393 = vmatpush1.bf16.msra.mxu0 %v4360
      %4394 = vmatprep.subr.bf16.mxu0 %v4363
      %4395 = vmatpush1.bf16.msra.mxu0 %v4362
      %4396 = vmatprep.subr.bf16.mxu0 %v4365
      %4397 = vmatpush1.bf16.msra.mxu0 %v4364
      %4398 = vmatprep.subr.bf16.mxu0 %v4367
      %4399 = vmatpush1.bf16.msra.mxu0 %v4366
      %4400 = vmatprep.subr.bf16.mxu0 %v4369
      %4401 = vmatpush1.bf16.msra.mxu0 %v4368
      %4402 = vmatprep.mubr.bf16.mxu0 %v4337
      %4403 = vmatmul.mubr.bf16.gmra.mrb[0].mxu0 %v4336
      %v4404 = vpop.f32.mrb[0].mxu0
      %v4405 = vadd.f32 0.0, %v4404
      %v4406 = vpop.f32.mrb[0].mxu0
      %v4407 = vadd.f32 0.0, %v4406
      %v4408 = vpop.f32.mrb[0].mxu0
      %v4409 = vadd.f32 0.0, %v4408
      %v4410 = vpop.f32.mrb[0].mxu0
      %v4411 = vadd.f32 0.0, %v4410
      %4412 = vdwg.mxu0
      %v4413 = vmul.f32 %v4405, %v4334
      %v4414 = vmul.f32 %v4407, %v4335
      %v4415 = vmul.f32 %v4409, %v4334
      %v4416 = vmul.f32 %v4411, %v4335
      %v4417 = vadd.f32 %v3766, %v4413
      %v4418 = vadd.f32 %v3767, %v4414
      %v4419 = vadd.f32 %v3768, %v4415
      %v4420 = vadd.f32 %v3769, %v4416
      %vm4421 = vcmp.ge.s32.totalorder %v364, 12
      %vm4422 = vcmp.ge.s32.totalorder %v455, 12
      %vm4423 = vcmp.ge.s32.totalorder %v456, 12
      %vm4424 = vcmp.lt.s32.totalorder %v364, 14
      %vm4425 = vcmp.lt.s32.totalorder %v455, 14
      %vm4426 = vcmp.lt.s32.totalorder %v456, 14
      %vm4427 = vmand %vm4421, %vm4424
      %vm4428 = vmand %vm4422, %vm4425
      %vm4429 = vmand %vm4423, %vm4426
      %vm4430 = vmor %vm4427, %vm471
      %vm4431 = vmor %vm4428, %vm472
      %vm4432 = vmor %vm4429, %vm473
      %v4433 = vsel %vm4430, 1, 0
      %v4434 = vsel %vm4431, 1, 0
      %v4435 = vsel %vm4432, 1, 0
      %v4436 = vcvt.s32.f32 %v4433
      %v4437 = vcvt.s32.f32 %v4434
      %v4438 = vcvt.s32.f32 %v4435
      %v4439 = vpack.c.bf16 %v4437, %v4436
      %v4440 = vpack.c.bf16 %v4438, %v4438
      %v4441 = vsel %vm4427, 1, 0
      %v4442 = vsel %vm4428, 1, 0
      %v4443 = vcvt.s32.f32 %v4441
      %v4444 = vcvt.s32.f32 %v4442
      %v4445 = vpack.c.bf16 %v4444, %v4443
      %v4446 = vmul.bf16 %v370, %v4439
      %v4447 = vmul.bf16 %v371, %v4439
      %v4448 = vmul.bf16 %v372, %v4440
      %v4450 = vsel %vm542, %v4448, 0
      %4452 = vmatprep.subr.bf16.mxu0 %v4447
      %4453 = vmatpush1.bf16.msra.mxu0 %v4446
      %4454 = vmatprep.subr.bf16.mxu0 %v4450
      %4455 = vmatpush1.bf16.msra.mxu0 %v4450
      %4456 = vmatprep.subr.bf16.mxu0 0
      %4457 = vmatpush1.bf16.msra.mxu0 0
      %4458 = vmatprep.subr.bf16.mxu0 0
      %4459 = vmatpush1.bf16.msra.mxu0 0
      %4460 = vmatprep.subr.bf16.mxu0 0
      %4461 = vmatpush1.bf16.msra.mxu0 0
      %4462 = vmatprep.subr.bf16.mxu0 0
      %4463 = vmatpush1.bf16.msra.mxu0 0
      %4464 = vmatprep.subr.bf16.mxu0 0
      %4465 = vmatpush1.bf16.msra.mxu0 0
      %4466 = vmatprep.subr.bf16.mxu0 0
      %4467 = vmatpush1.bf16.msra.mxu0 0
      %4468 = vmatprep.subr.bf16.mxu0 0
      %4469 = vmatpush1.bf16.msra.mxu0 0
      %4470 = vmatprep.subr.bf16.mxu0 0
      %4471 = vmatpush1.bf16.msra.mxu0 0
      %4472 = vmatprep.subr.bf16.mxu0 0
      %4473 = vmatpush1.bf16.msra.mxu0 0
      %4474 = vmatprep.subr.bf16.mxu0 0
      %4475 = vmatpush1.bf16.msra.mxu0 0
      %4476 = vmatprep.subr.bf16.mxu0 0
      %4477 = vmatpush1.bf16.msra.mxu0 0
      %4478 = vmatprep.subr.bf16.mxu0 0
      %4479 = vmatpush1.bf16.msra.mxu0 0
      %4480 = vmatprep.subr.bf16.mxu0 0
      %4481 = vmatpush1.bf16.msra.mxu0 0
      %4482 = vmatprep.subr.bf16.mxu0 0
      %4483 = vmatpush1.bf16.msra.mxu0 0
      %4484 = vmatprep.mubr.bf16.mxu0 0
      %4485 = vmatmul.mubr.bf16.gmra.mrb[0].mxu0 %v495
      %v4486 = vpop.f32.mrb[0].mxu0
      %v4487 = vadd.f32 0.0, %v4486
      %v4488 = vpop.f32.mrb[0].mxu0
      %v4489 = vadd.f32 0.0, %v4488
      %v4490 = vpop.f32.mrb[0].mxu0
      %v4491 = vadd.f32 0.0, %v4490
      %v4492 = vpop.f32.mrb[0].mxu0
      %v4493 = vadd.f32 0.0, %v4492
      %4494 = vmatprep.mubr.bf16.mxu0 0
      %4495 = vmatmul.mubr.bf16.gmra.mrb[0].mxu0 %v498
      %v4496 = vpop.f32.mrb[0].mxu0
      %v4497 = vadd.f32 0.0, %v4496
      %v4498 = vpop.f32.mrb[0].mxu0
      %v4499 = vadd.f32 0.0, %v4498
      %v4500 = vpop.f32.mrb[0].mxu0
      %v4501 = vadd.f32 0.0, %v4500
      %v4502 = vpop.f32.mrb[0].mxu0
      %v4503 = vadd.f32 0.0, %v4502
      %4504 = vmatprep.mubr.bf16.mxu0 0
      %4505 = vmatmul.mubr.bf16.gmra.mrb[0].mxu0 %v501
      %v4506 = vpop.f32.mrb[0].mxu0
      %v4507 = vadd.f32 0.0, %v4506
      %v4508 = vpop.f32.mrb[0].mxu0
      %v4509 = vadd.f32 0.0, %v4508
      %v4510 = vpop.f32.mrb[0].mxu0
      %v4511 = vadd.f32 0.0, %v4510
      %v4512 = vpop.f32.mrb[0].mxu0
      %v4513 = vadd.f32 0.0, %v4512
      %4514 = vmatprep.mubr.bf16.mxu0 0
      %4515 = vmatmul.mubr.bf16.gmra.mrb[0].mxu0 %v504
      %v4516 = vpop.f32.mrb[0].mxu0
      %v4517 = vadd.f32 0.0, %v4516
      %v4518 = vpop.f32.mrb[0].mxu0
      %v4519 = vadd.f32 0.0, %v4518
      %v4520 = vpop.f32.mrb[0].mxu0
      %v4521 = vadd.f32 0.0, %v4520
      %v4522 = vpop.f32.mrb[0].mxu0
      %v4523 = vadd.f32 0.0, %v4522
      %4524 = vmatprep.mubr.bf16.mxu0 0
      %4525 = vmatmul.mubr.bf16.gmra.mrb[0].mxu0 %v507
      %v4526 = vpop.f32.mrb[0].mxu0
      %v4527 = vadd.f32 0.0, %v4526
      %v4528 = vpop.f32.mrb[0].mxu0
      %v4529 = vadd.f32 0.0, %v4528
      %v4530 = vpop.f32.mrb[0].mxu0
      %v4531 = vadd.f32 0.0, %v4530
      %v4532 = vpop.f32.mrb[0].mxu0
      %v4533 = vadd.f32 0.0, %v4532
      %4534 = vmatprep.mubr.bf16.mxu0 0
      %4535 = vmatmul.mubr.bf16.gmra.mrb[0].mxu0 %v510
      %v4536 = vpop.f32.mrb[0].mxu0
      %v4537 = vadd.f32 0.0, %v4536
      %v4538 = vpop.f32.mrb[0].mxu0
      %v4539 = vadd.f32 0.0, %v4538
      %v4540 = vpop.f32.mrb[0].mxu0
      %v4541 = vadd.f32 0.0, %v4540
      %v4542 = vpop.f32.mrb[0].mxu0
      %v4543 = vadd.f32 0.0, %v4542
      %4544 = vmatprep.mubr.bf16.mxu0 0
      %4545 = vmatmul.mubr.bf16.gmra.mrb[0].mxu0 %v513
      %v4546 = vpop.f32.mrb[0].mxu0
      %v4547 = vadd.f32 0.0, %v4546
      %v4548 = vpop.f32.mrb[0].mxu0
      %v4549 = vadd.f32 0.0, %v4548
      %v4550 = vpop.f32.mrb[0].mxu0
      %v4551 = vadd.f32 0.0, %v4550
      %v4552 = vpop.f32.mrb[0].mxu0
      %v4553 = vadd.f32 0.0, %v4552
      %4554 = vmatprep.mubr.bf16.mxu0 0
      %4555 = vmatmul.mubr.bf16.gmra.mrb[0].mxu0 %v516
      %v4556 = vpop.f32.mrb[0].mxu0
      %v4557 = vadd.f32 0.0, %v4556
      %v4558 = vpop.f32.mrb[0].mxu0
      %v4559 = vadd.f32 0.0, %v4558
      %v4560 = vpop.f32.mrb[0].mxu0
      %v4561 = vadd.f32 0.0, %v4560
      %v4562 = vpop.f32.mrb[0].mxu0
      %v4563 = vadd.f32 0.0, %v4562
      %4564 = vmatprep.mubr.bf16.mxu0 0
      %4565 = vmatmul.mubr.bf16.gmra.mrb[0].mxu0 %v519
      %v4566 = vpop.f32.mrb[0].mxu0
      %v4567 = vadd.f32 0.0, %v4566
      %v4568 = vpop.f32.mrb[0].mxu0
      %v4569 = vadd.f32 0.0, %v4568
      %v4570 = vpop.f32.mrb[0].mxu0
      %v4571 = vadd.f32 0.0, %v4570
      %v4572 = vpop.f32.mrb[0].mxu0
      %v4573 = vadd.f32 0.0, %v4572
      %4574 = vmatprep.mubr.bf16.mxu0 0
      %4575 = vmatmul.mubr.bf16.gmra.mrb[0].mxu0 %v522
      %v4576 = vpop.f32.mrb[0].mxu0
      %v4577 = vadd.f32 0.0, %v4576
      %v4578 = vpop.f32.mrb[0].mxu0
      %v4579 = vadd.f32 0.0, %v4578
      %v4580 = vpop.f32.mrb[0].mxu0
      %v4581 = vadd.f32 0.0, %v4580
      %v4582 = vpop.f32.mrb[0].mxu0
      %v4583 = vadd.f32 0.0, %v4582
      %4584 = vmatprep.mubr.bf16.mxu0 0
      %4585 = vmatmul.mubr.bf16.gmra.mrb[0].mxu0 %v525
      %v4586 = vpop.f32.mrb[0].mxu0
      %v4587 = vadd.f32 0.0, %v4586
      %v4588 = vpop.f32.mrb[0].mxu0
      %v4589 = vadd.f32 0.0, %v4588
      %v4590 = vpop.f32.mrb[0].mxu0
      %v4591 = vadd.f32 0.0, %v4590
      %v4592 = vpop.f32.mrb[0].mxu0
      %v4593 = vadd.f32 0.0, %v4592
      %4594 = vmatprep.mubr.bf16.mxu0 0
      %4595 = vmatmul.mubr.bf16.gmra.mrb[0].mxu0 %v528
      %v4596 = vpop.f32.mrb[0].mxu0
      %v4597 = vadd.f32 0.0, %v4596
      %v4598 = vpop.f32.mrb[0].mxu0
      %v4599 = vadd.f32 0.0, %v4598
      %v4600 = vpop.f32.mrb[0].mxu0
      %v4601 = vadd.f32 0.0, %v4600
      %v4602 = vpop.f32.mrb[0].mxu0
      %v4603 = vadd.f32 0.0, %v4602
      %4604 = vmatprep.mubr.bf16.mxu0 0
      %4605 = vmatmul.mubr.bf16.gmra.mrb[0].mxu0 %v531
      %v4606 = vpop.f32.mrb[0].mxu0
      %v4607 = vadd.f32 0.0, %v4606
      %v4608 = vpop.f32.mrb[0].mxu0
      %v4609 = vadd.f32 0.0, %v4608
      %v4610 = vpop.f32.mrb[0].mxu0
      %v4611 = vadd.f32 0.0, %v4610
      %v4612 = vpop.f32.mrb[0].mxu0
      %v4613 = vadd.f32 0.0, %v4612
      %4614 = vmatprep.mubr.bf16.mxu0 0
      %4615 = vmatmul.mubr.bf16.gmra.mrb[0].mxu0 %v534
      %v4616 = vpop.f32.mrb[0].mxu0
      %v4617 = vadd.f32 0.0, %v4616
      %v4618 = vpop.f32.mrb[0].mxu0
      %v4619 = vadd.f32 0.0, %v4618
      %v4620 = vpop.f32.mrb[0].mxu0
      %v4621 = vadd.f32 0.0, %v4620
      %v4622 = vpop.f32.mrb[0].mxu0
      %v4623 = vadd.f32 0.0, %v4622
      %4624 = vmatprep.mubr.bf16.mxu0 0
      %4625 = vmatmul.mubr.bf16.gmra.mrb[0].mxu0 %v537
      %v4626 = vpop.f32.mrb[0].mxu0
      %v4627 = vadd.f32 0.0, %v4626
      %v4628 = vpop.f32.mrb[0].mxu0
      %v4629 = vadd.f32 0.0, %v4628
      %v4630 = vpop.f32.mrb[0].mxu0
      %v4631 = vadd.f32 0.0, %v4630
      %v4632 = vpop.f32.mrb[0].mxu0
      %v4633 = vadd.f32 0.0, %v4632
      %4634 = vmatprep.mubr.bf16.mxu0 0
      %4635 = vmatmul.mubr.bf16.gmra.mrb[0].mxu0 %v540
      %v4636 = vpop.f32.mrb[0].mxu0
      %v4637 = vadd.f32 0.0, %v4636
      %v4638 = vpop.f32.mrb[0].mxu0
      %v4639 = vadd.f32 0.0, %v4638
      %v4640 = vpop.f32.mrb[0].mxu0
      %v4641 = vadd.f32 0.0, %v4640
      %v4642 = vpop.f32.mrb[0].mxu0
      %v4643 = vadd.f32 0.0, %v4642
      %4644 = vdwg.mxu0
      %v4645 = vmax.f32 %v4487, %v4497
      %v4646 = vmax.f32 %v4491, %v4501
      %v4647 = vmax.f32 %v4645, %v4507
      %v4648 = vmax.f32 %v4646, %v4511
      %v4649 = vmax.f32 %v4647, %v4517
      %v4650 = vmax.f32 %v4648, %v4521
      %v4651 = vmax.f32 %v4649, %v4527
      %v4652 = vmax.f32 %v4650, %v4531
      %v4653 = vmax.f32 %v4651, %v4537
      %v4654 = vmax.f32 %v4652, %v4541
      %v4655 = vmax.f32 %v4653, %v4547
      %v4656 = vmax.f32 %v4654, %v4551
      %v4657 = vmax.f32 %v4655, %v4557
      %v4658 = vmax.f32 %v4656, %v4561
      %v4659 = vmax.f32 %v4657, %v4567
      %v4660 = vmax.f32 %v4658, %v4571
      %v4661 = vmax.f32 %v4659, %v4577
      %v4662 = vmax.f32 %v4660, %v4581
      %v4663 = vmax.f32 %v4661, %v4587
      %v4664 = vmax.f32 %v4662, %v4591
      %v4665 = vmax.f32 %v4663, %v4597
      %v4666 = vmax.f32 %v4664, %v4601
      %v4667 = vmax.f32 %v4665, %v4607
      %v4668 = vmax.f32 %v4666, %v4611
      %v4669 = vmax.f32 %v4667, %v4617
      %v4670 = vmax.f32 %v4668, %v4621
      %v4671 = vmax.f32 %v4669, %v4627
      %v4672 = vmax.f32 %v4670, %v4631
      %v4673 = vmax.f32 %v4671, %v4637
      %v4674 = vmax.f32 %v4672, %v4641
      %v4675 = vmax.f32 %v4673, %v4674
      %v4676 = vrot.slane %v4675, 4
      %v4677 = vmax.f32 %v4675, %v4676
      %v4678 = vrot.slane %v4677, 2
      %v4679 = vmax.f32 %v4677, %v4678
      %v4680 = vrot.slane %v4679, 1
      %v4681 = vmax.f32 %v4679, %v4680
      %v4682 = vmax.f32 %v4489, %v4499
      %v4683 = vmax.f32 %v4493, %v4503
      %v4684 = vmax.f32 %v4682, %v4509
      %v4685 = vmax.f32 %v4683, %v4513
      %v4686 = vmax.f32 %v4684, %v4519
      %v4687 = vmax.f32 %v4685, %v4523
      %v4688 = vmax.f32 %v4686, %v4529
      %v4689 = vmax.f32 %v4687, %v4533
      %v4690 = vmax.f32 %v4688, %v4539
      %v4691 = vmax.f32 %v4689, %v4543
      %v4692 = vmax.f32 %v4690, %v4549
      %v4693 = vmax.f32 %v4691, %v4553
      %v4694 = vmax.f32 %v4692, %v4559
      %v4695 = vmax.f32 %v4693, %v4563
      %v4696 = vmax.f32 %v4694, %v4569
      %v4697 = vmax.f32 %v4695, %v4573
      %v4698 = vmax.f32 %v4696, %v4579
      %v4699 = vmax.f32 %v4697, %v4583
      %v4700 = vmax.f32 %v4698, %v4589
      %v4701 = vmax.f32 %v4699, %v4593
      %v4702 = vmax.f32 %v4700, %v4599
      %v4703 = vmax.f32 %v4701, %v4603
      %v4704 = vmax.f32 %v4702, %v4609
      %v4705 = vmax.f32 %v4703, %v4613
      %v4706 = vmax.f32 %v4704, %v4619
      %v4707 = vmax.f32 %v4705, %v4623
      %v4708 = vmax.f32 %v4706, %v4629
      %v4709 = vmax.f32 %v4707, %v4633
      %v4710 = vmax.f32 %v4708, %v4639
      %v4711 = vmax.f32 %v4709, %v4643
      %v4712 = vmax.f32 %v4710, %v4711
      %v4713 = vrot.slane %v4712, 4
      %v4714 = vmax.f32 %v4712, %v4713
      %v4715 = vrot.slane %v4714, 2
      %v4716 = vmax.f32 %v4714, %v4715
      %v4717 = vrot.slane %v4716, 1
      %v4718 = vmax.f32 %v4716, %v4717
      %v4719 = vsub.f32 %v4487, %v4681
      %v4720 = vsub.f32 %v4489, %v4718
      %v4721 = vsub.f32 %v4491, %v4681
      %v4722 = vsub.f32 %v4493, %v4718
      %v4723 = vsub.f32 %v4497, %v4681
      %v4724 = vsub.f32 %v4499, %v4718
      %v4725 = vsub.f32 %v4501, %v4681
      %v4726 = vsub.f32 %v4503, %v4718
      %v4727 = vsub.f32 %v4507, %v4681
      %v4728 = vsub.f32 %v4509, %v4718
      %v4729 = vsub.f32 %v4511, %v4681
      %v4730 = vsub.f32 %v4513, %v4718
      %v4731 = vsub.f32 %v4517, %v4681
      %v4732 = vsub.f32 %v4519, %v4718
      %v4733 = vsub.f32 %v4521, %v4681
      %v4734 = vsub.f32 %v4523, %v4718
      %v4735 = vsub.f32 %v4527, %v4681
      %v4736 = vsub.f32 %v4529, %v4718
      %v4737 = vsub.f32 %v4531, %v4681
      %v4738 = vsub.f32 %v4533, %v4718
      %v4739 = vsub.f32 %v4537, %v4681
      %v4740 = vsub.f32 %v4539, %v4718
      %v4741 = vsub.f32 %v4541, %v4681
      %v4742 = vsub.f32 %v4543, %v4718
      %v4743 = vsub.f32 %v4547, %v4681
      %v4744 = vsub.f32 %v4549, %v4718
      %v4745 = vsub.f32 %v4551, %v4681
      %v4746 = vsub.f32 %v4553, %v4718
      %v4747 = vsub.f32 %v4557, %v4681
      %v4748 = vsub.f32 %v4559, %v4718
      %v4749 = vsub.f32 %v4561, %v4681
      %v4750 = vsub.f32 %v4563, %v4718
      %v4751 = vsub.f32 %v4567, %v4681
      %v4752 = vsub.f32 %v4569, %v4718
      %v4753 = vsub.f32 %v4571, %v4681
      %v4754 = vsub.f32 %v4573, %v4718
      %v4755 = vsub.f32 %v4577, %v4681
      %v4756 = vsub.f32 %v4579, %v4718
      %v4757 = vsub.f32 %v4581, %v4681
      %v4758 = vsub.f32 %v4583, %v4718
      %v4759 = vsub.f32 %v4587, %v4681
      %v4760 = vsub.f32 %v4589, %v4718
      %v4761 = vsub.f32 %v4591, %v4681
      %v4762 = vsub.f32 %v4593, %v4718
      %v4763 = vsub.f32 %v4597, %v4681
      %v4764 = vsub.f32 %v4599, %v4718
      %v4765 = vsub.f32 %v4601, %v4681
      %v4766 = vsub.f32 %v4603, %v4718
      %v4767 = vsub.f32 %v4607, %v4681
      %v4768 = vsub.f32 %v4609, %v4718
      %v4769 = vsub.f32 %v4611, %v4681
      %v4770 = vsub.f32 %v4613, %v4718
      %v4771 = vsub.f32 %v4617, %v4681
      %v4772 = vsub.f32 %v4619, %v4718
      %v4773 = vsub.f32 %v4621, %v4681
      %v4774 = vsub.f32 %v4623, %v4718
      %v4775 = vsub.f32 %v4627, %v4681
      %v4776 = vsub.f32 %v4629, %v4718
      %v4777 = vsub.f32 %v4631, %v4681
      %v4778 = vsub.f32 %v4633, %v4718
      %v4779 = vsub.f32 %v4637, %v4681
      %v4780 = vsub.f32 %v4639, %v4718
      %v4781 = vsub.f32 %v4641, %v4681
      %v4782 = vsub.f32 %v4643, %v4718
      %v4783 = vmul.f32 %v4719, 1.442695
      %v4784 = vpow.pop %v4783
      %v4785 = vmul.f32 %v4720, 1.442695
      %v4786 = vpow.pop %v4785
      %v4787 = vmul.f32 %v4721, 1.442695
      %v4788 = vpow.pop %v4787
      %v4789 = vmul.f32 %v4722, 1.442695
      %v4790 = vpow.pop %v4789
      %v4791 = vmul.f32 %v4723, 1.442695
      %v4792 = vpow.pop %v4791
      %v4793 = vmul.f32 %v4724, 1.442695
      %v4794 = vpow.pop %v4793
      %v4795 = vmul.f32 %v4725, 1.442695
      %v4796 = vpow.pop %v4795
      %v4797 = vmul.f32 %v4726, 1.442695
      %v4798 = vpow.pop %v4797
      %v4799 = vmul.f32 %v4727, 1.442695
      %v4800 = vpow.pop %v4799
      %v4801 = vmul.f32 %v4728, 1.442695
      %v4802 = vpow.pop %v4801
      %v4803 = vmul.f32 %v4729, 1.442695
      %v4804 = vpow.pop %v4803
      %v4805 = vmul.f32 %v4730, 1.442695
      %v4806 = vpow.pop %v4805
      %v4807 = vmul.f32 %v4731, 1.442695
      %v4808 = vpow.pop %v4807
      %v4809 = vmul.f32 %v4732, 1.442695
      %v4810 = vpow.pop %v4809
      %v4811 = vmul.f32 %v4733, 1.442695
      %v4812 = vpow.pop %v4811
      %v4813 = vmul.f32 %v4734, 1.442695
      %v4814 = vpow.pop %v4813
      %v4815 = vmul.f32 %v4735, 1.442695
      %v4816 = vpow.pop %v4815
      %v4817 = vmul.f32 %v4736, 1.442695
      %v4818 = vpow.pop %v4817
      %v4819 = vmul.f32 %v4737, 1.442695
      %v4820 = vpow.pop %v4819
      %v4821 = vmul.f32 %v4738, 1.442695
      %v4822 = vpow.pop %v4821
      %v4823 = vmul.f32 %v4739, 1.442695
      %v4824 = vpow.pop %v4823
      %v4825 = vmul.f32 %v4740, 1.442695
      %v4826 = vpow.pop %v4825
      %v4827 = vmul.f32 %v4741, 1.442695
      %v4828 = vpow.pop %v4827
      %v4829 = vmul.f32 %v4742, 1.442695
      %v4830 = vpow.pop %v4829
      %v4831 = vmul.f32 %v4743, 1.442695
      %v4832 = vpow.pop %v4831
      %v4833 = vmul.f32 %v4744, 1.442695
      %v4834 = vpow.pop %v4833
      %v4835 = vmul.f32 %v4745, 1.442695
      %v4836 = vpow.pop %v4835
      %v4837 = vmul.f32 %v4746, 1.442695
      %v4838 = vpow.pop %v4837
      %v4839 = vmul.f32 %v4747, 1.442695
      %v4840 = vpow.pop %v4839
      %v4841 = vmul.f32 %v4748, 1.442695
      %v4842 = vpow.pop %v4841
      %v4843 = vmul.f32 %v4749, 1.442695
      %v4844 = vpow.pop %v4843
      %v4845 = vmul.f32 %v4750, 1.442695
      %v4846 = vpow.pop %v4845
      %v4847 = vmul.f32 %v4751, 1.442695
      %v4848 = vpow.pop %v4847
      %v4849 = vmul.f32 %v4752, 1.442695
      %v4850 = vpow.pop %v4849
      %v4851 = vmul.f32 %v4753, 1.442695
      %v4852 = vpow.pop %v4851
      %v4853 = vmul.f32 %v4754, 1.442695
      %v4854 = vpow.pop %v4853
      %v4855 = vmul.f32 %v4755, 1.442695
      %v4856 = vpow.pop %v4855
      %v4857 = vmul.f32 %v4756, 1.442695
      %v4858 = vpow.pop %v4857
      %v4859 = vmul.f32 %v4757, 1.442695
      %v4860 = vpow.pop %v4859
      %v4861 = vmul.f32 %v4758, 1.442695
      %v4862 = vpow.pop %v4861
      %v4863 = vmul.f32 %v4759, 1.442695
      %v4864 = vpow.pop %v4863
      %v4865 = vmul.f32 %v4760, 1.442695
      %v4866 = vpow.pop %v4865
      %v4867 = vmul.f32 %v4761, 1.442695
      %v4868 = vpow.pop %v4867
      %v4869 = vmul.f32 %v4762, 1.442695
      %v4870 = vpow.pop %v4869
      %v4871 = vmul.f32 %v4763, 1.442695
      %v4872 = vpow.pop %v4871
      %v4873 = vmul.f32 %v4764, 1.442695
      %v4874 = vpow.pop %v4873
      %v4875 = vmul.f32 %v4765, 1.442695
      %v4876 = vpow.pop %v4875
      %v4877 = vmul.f32 %v4766, 1.442695
      %v4878 = vpow.pop %v4877
      %v4879 = vmul.f32 %v4767, 1.442695
      %v4880 = vpow.pop %v4879
      %v4881 = vmul.f32 %v4768, 1.442695
      %v4882 = vpow.pop %v4881
      %v4883 = vmul.f32 %v4769, 1.442695
      %v4884 = vpow.pop %v4883
      %v4885 = vmul.f32 %v4770, 1.442695
      %v4886 = vpow.pop %v4885
      %v4887 = vmul.f32 %v4771, 1.442695
      %v4888 = vpow.pop %v4887
      %v4889 = vmul.f32 %v4772, 1.442695
      %v4890 = vpow.pop %v4889
      %v4891 = vmul.f32 %v4773, 1.442695
      %v4892 = vpow.pop %v4891
      %v4893 = vmul.f32 %v4774, 1.442695
      %v4894 = vpow.pop %v4893
      %v4895 = vmul.f32 %v4775, 1.442695
      %v4896 = vpow.pop %v4895
      %v4897 = vmul.f32 %v4776, 1.442695
      %v4898 = vpow.pop %v4897
      %v4899 = vmul.f32 %v4777, 1.442695
      %v4900 = vpow.pop %v4899
      %v4901 = vmul.f32 %v4778, 1.442695
      %v4902 = vpow.pop %v4901
      %v4903 = vmul.f32 %v4779, 1.442695
      %v4904 = vpow.pop %v4903
      %v4905 = vmul.f32 %v4780, 1.442695
      %v4906 = vpow.pop %v4905
      %v4907 = vmul.f32 %v4781, 1.442695
      %v4908 = vpow.pop %v4907
      %v4909 = vmul.f32 %v4782, 1.442695
      %v4910 = vpow.pop %v4909
      %v4911 = vadd.f32 %v4784, %v4788
      %v4912 = vadd.f32 %v4911, %v4792
      %v4913 = vadd.f32 %v4912, %v4796
      %v4914 = vadd.f32 %v4913, %v4800
      %v4915 = vadd.f32 %v4914, %v4804
      %v4916 = vadd.f32 %v4915, %v4808
      %v4917 = vadd.f32 %v4916, %v4812
      %v4918 = vadd.f32 %v4917, %v4816
      %v4919 = vadd.f32 %v4918, %v4820
      %v4920 = vadd.f32 %v4919, %v4824
      %v4921 = vadd.f32 %v4920, %v4828
      %v4922 = vadd.f32 %v4921, %v4832
      %v4923 = vadd.f32 %v4922, %v4836
      %v4924 = vadd.f32 %v4923, %v4840
      %v4925 = vadd.f32 %v4924, %v4844
      %v4926 = vadd.f32 %v4925, %v4848
      %v4927 = vadd.f32 %v4926, %v4852
      %v4928 = vadd.f32 %v4927, %v4856
      %v4929 = vadd.f32 %v4928, %v4860
      %v4930 = vadd.f32 %v4929, %v4864
      %v4931 = vadd.f32 %v4930, %v4868
      %v4932 = vadd.f32 %v4931, %v4872
      %v4933 = vadd.f32 %v4932, %v4876
      %v4934 = vadd.f32 %v4933, %v4880
      %v4935 = vadd.f32 %v4934, %v4884
      %v4936 = vadd.f32 %v4935, %v4888
      %v4937 = vadd.f32 %v4936, %v4892
      %v4938 = vadd.f32 %v4937, %v4896
      %v4939 = vadd.f32 %v4938, %v4900
      %v4940 = vadd.f32 %v4939, %v4904
      %v4941 = vadd.f32 %v4940, %v4908
      %v4942 = vrot.slane %v4941, 4
      %v4943 = vadd.f32 %v4941, %v4942
      %v4944 = vrot.slane %v4943, 2
      %v4945 = vadd.f32 %v4943, %v4944
      %v4946 = vrot.slane %v4945, 1
      %v4947 = vadd.f32 %v4945, %v4946
      %v4948 = vadd.f32 %v4786, %v4790
      %v4949 = vadd.f32 %v4948, %v4794
      %v4950 = vadd.f32 %v4949, %v4798
      %v4951 = vadd.f32 %v4950, %v4802
      %v4952 = vadd.f32 %v4951, %v4806
      %v4953 = vadd.f32 %v4952, %v4810
      %v4954 = vadd.f32 %v4953, %v4814
      %v4955 = vadd.f32 %v4954, %v4818
      %v4956 = vadd.f32 %v4955, %v4822
      %v4957 = vadd.f32 %v4956, %v4826
      %v4958 = vadd.f32 %v4957, %v4830
      %v4959 = vadd.f32 %v4958, %v4834
      %v4960 = vadd.f32 %v4959, %v4838
      %v4961 = vadd.f32 %v4960, %v4842
      %v4962 = vadd.f32 %v4961, %v4846
      %v4963 = vadd.f32 %v4962, %v4850
      %v4964 = vadd.f32 %v4963, %v4854
      %v4965 = vadd.f32 %v4964, %v4858
      %v4966 = vadd.f32 %v4965, %v4862
      %v4967 = vadd.f32 %v4966, %v4866
      %v4968 = vadd.f32 %v4967, %v4870
      %v4969 = vadd.f32 %v4968, %v4874
      %v4970 = vadd.f32 %v4969, %v4878
      %v4971 = vadd.f32 %v4970, %v4882
      %v4972 = vadd.f32 %v4971, %v4886
      %v4973 = vadd.f32 %v4972, %v4890
      %v4974 = vadd.f32 %v4973, %v4894
      %v4975 = vadd.f32 %v4974, %v4898
      %v4976 = vadd.f32 %v4975, %v4902
      %v4977 = vadd.f32 %v4976, %v4906
      %v4978 = vadd.f32 %v4977, %v4910
      %v4979 = vrot.slane %v4978, 4
      %v4980 = vadd.f32 %v4978, %v4979
      %v4981 = vrot.slane %v4980, 2
      %v4982 = vadd.f32 %v4980, %v4981
      %v4983 = vrot.slane %v4982, 1
      %v4984 = vadd.f32 %v4982, %v4983
      %v4985 = vrcp.pop %v4947
      %v4986 = vrcp.pop %v4984
      %v4987 = vmul.bf16 %v453, %v4445
      %v4988 = vmul.bf16 %v454, %v4445
      %v4989 = vpack.c.bf16 %v4788, %v4784
      %v4990 = vpack.c.bf16 %v4790, %v4786
      %v4991 = vpack.c.bf16 %v4796, %v4792
      %v4992 = vpack.c.bf16 %v4798, %v4794
      %v4993 = vpack.c.bf16 %v4804, %v4800
      %v4994 = vpack.c.bf16 %v4806, %v4802
      %v4995 = vpack.c.bf16 %v4812, %v4808
      %v4996 = vpack.c.bf16 %v4814, %v4810
      %v4997 = vpack.c.bf16 %v4820, %v4816
      %v4998 = vpack.c.bf16 %v4822, %v4818
      %v4999 = vpack.c.bf16 %v4828, %v4824
      %v5000 = vpack.c.bf16 %v4830, %v4826
      %v5001 = vpack.c.bf16 %v4836, %v4832
      %v5002 = vpack.c.bf16 %v4838, %v4834
      %v5003 = vpack.c.bf16 %v4844, %v4840
      %v5004 = vpack.c.bf16 %v4846, %v4842
      %v5005 = vpack.c.bf16 %v4852, %v4848
      %v5006 = vpack.c.bf16 %v4854, %v4850
      %v5007 = vpack.c.bf16 %v4860, %v4856
      %v5008 = vpack.c.bf16 %v4862, %v4858
      %v5009 = vpack.c.bf16 %v4868, %v4864
      %v5010 = vpack.c.bf16 %v4870, %v4866
      %v5011 = vpack.c.bf16 %v4876, %v4872
      %v5012 = vpack.c.bf16 %v4878, %v4874
      %v5013 = vpack.c.bf16 %v4884, %v4880
      %v5014 = vpack.c.bf16 %v4886, %v4882
      %v5015 = vpack.c.bf16 %v4892, %v4888
      %v5016 = vpack.c.bf16 %v4894, %v4890
      %v5017 = vpack.c.bf16 %v4900, %v4896
      %v5018 = vpack.c.bf16 %v4902, %v4898
      %v5019 = vpack.c.bf16 %v4908, %v4904
      %v5020 = vpack.c.bf16 %v4910, %v4906
      %5021 = vmatprep.subr.bf16.mxu0 %v4990
      %5022 = vmatpush1.bf16.msra.mxu0 %v4989
      %5023 = vmatprep.subr.bf16.mxu0 %v4992
      %5024 = vmatpush1.bf16.msra.mxu0 %v4991
      %5025 = vmatprep.subr.bf16.mxu0 %v4994
      %5026 = vmatpush1.bf16.msra.mxu0 %v4993
      %5027 = vmatprep.subr.bf16.mxu0 %v4996
      %5028 = vmatpush1.bf16.msra.mxu0 %v4995
      %5029 = vmatprep.subr.bf16.mxu0 %v4998
      %5030 = vmatpush1.bf16.msra.mxu0 %v4997
      %5031 = vmatprep.subr.bf16.mxu0 %v5000
      %5032 = vmatpush1.bf16.msra.mxu0 %v4999
      %5033 = vmatprep.subr.bf16.mxu0 %v5002
      %5034 = vmatpush1.bf16.msra.mxu0 %v5001
      %5035 = vmatprep.subr.bf16.mxu0 %v5004
      %5036 = vmatpush1.bf16.msra.mxu0 %v5003
      %5037 = vmatprep.subr.bf16.mxu0 %v5006
      %5038 = vmatpush1.bf16.msra.mxu0 %v5005
      %5039 = vmatprep.subr.bf16.mxu0 %v5008
      %5040 = vmatpush1.bf16.msra.mxu0 %v5007
      %5041 = vmatprep.subr.bf16.mxu0 %v5010
      %5042 = vmatpush1.bf16.msra.mxu0 %v5009
      %5043 = vmatprep.subr.bf16.mxu0 %v5012
      %5044 = vmatpush1.bf16.msra.mxu0 %v5011
      %5045 = vmatprep.subr.bf16.mxu0 %v5014
      %5046 = vmatpush1.bf16.msra.mxu0 %v5013
      %5047 = vmatprep.subr.bf16.mxu0 %v5016
      %5048 = vmatpush1.bf16.msra.mxu0 %v5015
      %5049 = vmatprep.subr.bf16.mxu0 %v5018
      %5050 = vmatpush1.bf16.msra.mxu0 %v5017
      %5051 = vmatprep.subr.bf16.mxu0 %v5020
      %5052 = vmatpush1.bf16.msra.mxu0 %v5019
      %5053 = vmatprep.mubr.bf16.mxu0 %v4988
      %5054 = vmatmul.mubr.bf16.gmra.mrb[0].mxu0 %v4987
      %v5055 = vpop.f32.mrb[0].mxu0
      %v5056 = vadd.f32 0.0, %v5055
      %v5057 = vpop.f32.mrb[0].mxu0
      %v5058 = vadd.f32 0.0, %v5057
      %v5059 = vpop.f32.mrb[0].mxu0
      %v5060 = vadd.f32 0.0, %v5059
      %v5061 = vpop.f32.mrb[0].mxu0
      %v5062 = vadd.f32 0.0, %v5061
      %5063 = vdwg.mxu0
      %v5064 = vmul.f32 %v5056, %v4985
      %v5065 = vmul.f32 %v5058, %v4986
      %v5066 = vmul.f32 %v5060, %v4985
      %v5067 = vmul.f32 %v5062, %v4986
      %v5068 = vadd.f32 %v4417, %v5064
      %v5069 = vadd.f32 %v4418, %v5065
      %v5070 = vadd.f32 %v4419, %v5066
      %v5071 = vadd.f32 %v4420, %v5067
      %vm5072 = vcmp.ge.s32.totalorder %v364, 14
      %vm5073 = vcmp.ge.s32.totalorder %v455, 14
      %vm5074 = vcmp.ge.s32.totalorder %v456, 14
      %vm5075 = vcmp.lt.s32.totalorder %v364, 16
      %vm5076 = vcmp.lt.s32.totalorder %v455, 16
      %vm5077 = vcmp.lt.s32.totalorder %v456, 16
      %vm5078 = vmand %vm5072, %vm5075
      %vm5079 = vmand %vm5073, %vm5076
      %vm5080 = vmand %vm5074, %vm5077
      %vm5081 = vmor %vm5078, %vm471
      %vm5082 = vmor %vm5079, %vm472
      %vm5083 = vmor %vm5080, %vm473
      %v5084 = vsel %vm5081, 1, 0
      %v5085 = vsel %vm5082, 1, 0
      %v5086 = vsel %vm5083, 1, 0
      %v5087 = vcvt.s32.f32 %v5084
      %v5088 = vcvt.s32.f32 %v5085
      %v5089 = vcvt.s32.f32 %v5086
      %v5090 = vpack.c.bf16 %v5088, %v5087
      %v5091 = vpack.c.bf16 %v5089, %v5089
      %v5092 = vsel %vm5078, 1, 0
      %v5093 = vsel %vm5079, 1, 0
      %v5094 = vcvt.s32.f32 %v5092
      %v5095 = vcvt.s32.f32 %v5093
      %v5096 = vpack.c.bf16 %v5095, %v5094
      %v5097 = vmul.bf16 %v370, %v5090
      %v5098 = vmul.bf16 %v371, %v5090
      %v5099 = vmul.bf16 %v372, %v5091
      %v5101 = vsel %vm542, %v5099, 0
      %5103 = vmatprep.subr.bf16.mxu0 %v5098
      %5104 = vmatpush1.bf16.msra.mxu0 %v5097
      %5105 = vmatprep.subr.bf16.mxu0 %v5101
      %5106 = vmatpush1.bf16.msra.mxu0 %v5101
      %5107 = vmatprep.subr.bf16.mxu0 0
      %5108 = vmatpush1.bf16.msra.mxu0 0
      %5109 = vmatprep.subr.bf16.mxu0 0
      %5110 = vmatpush1.bf16.msra.mxu0 0
      %5111 = vmatprep.subr.bf16.mxu0 0
      %5112 = vmatpush1.bf16.msra.mxu0 0
      %5113 = vmatprep.subr.bf16.mxu0 0
      %5114 = vmatpush1.bf16.msra.mxu0 0
      %5115 = vmatprep.subr.bf16.mxu0 0
      %5116 = vmatpush1.bf16.msra.mxu0 0
      %5117 = vmatprep.subr.bf16.mxu0 0
      %5118 = vmatpush1.bf16.msra.mxu0 0
      %5119 = vmatprep.subr.bf16.mxu0 0
      %5120 = vmatpush1.bf16.msra.mxu0 0
      %5121 = vmatprep.subr.bf16.mxu0 0
      %5122 = vmatpush1.bf16.msra.mxu0 0
      %5123 = vmatprep.subr.bf16.mxu0 0
      %5124 = vmatpush1.bf16.msra.mxu0 0
      %5125 = vmatprep.subr.bf16.mxu0 0
      %5126 = vmatpush1.bf16.msra.mxu0 0
      %5127 = vmatprep.subr.bf16.mxu0 0
      %5128 = vmatpush1.bf16.msra.mxu0 0
      %5129 = vmatprep.subr.bf16.mxu0 0
      %5130 = vmatpush1.bf16.msra.mxu0 0
      %5131 = vmatprep.subr.bf16.mxu0 0
      %5132 = vmatpush1.bf16.msra.mxu0 0
      %5133 = vmatprep.subr.bf16.mxu0 0
      %5134 = vmatpush1.bf16.msra.mxu0 0
      %5135 = vmatprep.mubr.bf16.mxu0 0
      %5136 = vmatmul.mubr.bf16.gmra.mrb[0].mxu0 %v495
      %v5137 = vpop.f32.mrb[0].mxu0
      %v5138 = vadd.f32 0.0, %v5137
      %v5139 = vpop.f32.mrb[0].mxu0
      %v5140 = vadd.f32 0.0, %v5139
      %v5141 = vpop.f32.mrb[0].mxu0
      %v5142 = vadd.f32 0.0, %v5141
      %v5143 = vpop.f32.mrb[0].mxu0
      %v5144 = vadd.f32 0.0, %v5143
      %5145 = vmatprep.mubr.bf16.mxu0 0
      %5146 = vmatmul.mubr.bf16.gmra.mrb[0].mxu0 %v498
      %v5147 = vpop.f32.mrb[0].mxu0
      %v5148 = vadd.f32 0.0, %v5147
      %v5149 = vpop.f32.mrb[0].mxu0
      %v5150 = vadd.f32 0.0, %v5149
      %v5151 = vpop.f32.mrb[0].mxu0
      %v5152 = vadd.f32 0.0, %v5151
      %v5153 = vpop.f32.mrb[0].mxu0
      %v5154 = vadd.f32 0.0, %v5153
      %5155 = vmatprep.mubr.bf16.mxu0 0
      %5156 = vmatmul.mubr.bf16.gmra.mrb[0].mxu0 %v501
      %v5157 = vpop.f32.mrb[0].mxu0
      %v5158 = vadd.f32 0.0, %v5157
      %v5159 = vpop.f32.mrb[0].mxu0
      %v5160 = vadd.f32 0.0, %v5159
      %v5161 = vpop.f32.mrb[0].mxu0
      %v5162 = vadd.f32 0.0, %v5161
      %v5163 = vpop.f32.mrb[0].mxu0
      %v5164 = vadd.f32 0.0, %v5163
      %5165 = vmatprep.mubr.bf16.mxu0 0
      %5166 = vmatmul.mubr.bf16.gmra.mrb[0].mxu0 %v504
      %v5167 = vpop.f32.mrb[0].mxu0
      %v5168 = vadd.f32 0.0, %v5167
      %v5169 = vpop.f32.mrb[0].mxu0
      %v5170 = vadd.f32 0.0, %v5169
      %v5171 = vpop.f32.mrb[0].mxu0
      %v5172 = vadd.f32 0.0, %v5171
      %v5173 = vpop.f32.mrb[0].mxu0
      %v5174 = vadd.f32 0.0, %v5173
      %5175 = vmatprep.mubr.bf16.mxu0 0
      %5176 = vmatmul.mubr.bf16.gmra.mrb[0].mxu0 %v507
      %v5177 = vpop.f32.mrb[0].mxu0
      %v5178 = vadd.f32 0.0, %v5177
      %v5179 = vpop.f32.mrb[0].mxu0
      %v5180 = vadd.f32 0.0, %v5179
      %v5181 = vpop.f32.mrb[0].mxu0
      %v5182 = vadd.f32 0.0, %v5181
      %v5183 = vpop.f32.mrb[0].mxu0
      %v5184 = vadd.f32 0.0, %v5183
      %5185 = vmatprep.mubr.bf16.mxu0 0
      %5186 = vmatmul.mubr.bf16.gmra.mrb[0].mxu0 %v510
      %v5187 = vpop.f32.mrb[0].mxu0
      %v5188 = vadd.f32 0.0, %v5187
      %v5189 = vpop.f32.mrb[0].mxu0
      %v5190 = vadd.f32 0.0, %v5189
      %v5191 = vpop.f32.mrb[0].mxu0
      %v5192 = vadd.f32 0.0, %v5191
      %v5193 = vpop.f32.mrb[0].mxu0
      %v5194 = vadd.f32 0.0, %v5193
      %5195 = vmatprep.mubr.bf16.mxu0 0
      %5196 = vmatmul.mubr.bf16.gmra.mrb[0].mxu0 %v513
      %v5197 = vpop.f32.mrb[0].mxu0
      %v5198 = vadd.f32 0.0, %v5197
      %v5199 = vpop.f32.mrb[0].mxu0
      %v5200 = vadd.f32 0.0, %v5199
      %v5201 = vpop.f32.mrb[0].mxu0
      %v5202 = vadd.f32 0.0, %v5201
      %v5203 = vpop.f32.mrb[0].mxu0
      %v5204 = vadd.f32 0.0, %v5203
      %5205 = vmatprep.mubr.bf16.mxu0 0
      %5206 = vmatmul.mubr.bf16.gmra.mrb[0].mxu0 %v516
      %v5207 = vpop.f32.mrb[0].mxu0
      %v5208 = vadd.f32 0.0, %v5207
      %v5209 = vpop.f32.mrb[0].mxu0
      %v5210 = vadd.f32 0.0, %v5209
      %v5211 = vpop.f32.mrb[0].mxu0
      %v5212 = vadd.f32 0.0, %v5211
      %v5213 = vpop.f32.mrb[0].mxu0
      %v5214 = vadd.f32 0.0, %v5213
      %5215 = vmatprep.mubr.bf16.mxu0 0
      %5216 = vmatmul.mubr.bf16.gmra.mrb[0].mxu0 %v519
      %v5217 = vpop.f32.mrb[0].mxu0
      %v5218 = vadd.f32 0.0, %v5217
      %v5219 = vpop.f32.mrb[0].mxu0
      %v5220 = vadd.f32 0.0, %v5219
      %v5221 = vpop.f32.mrb[0].mxu0
      %v5222 = vadd.f32 0.0, %v5221
      %v5223 = vpop.f32.mrb[0].mxu0
      %v5224 = vadd.f32 0.0, %v5223
      %5225 = vmatprep.mubr.bf16.mxu0 0
      %5226 = vmatmul.mubr.bf16.gmra.mrb[0].mxu0 %v522
      %v5227 = vpop.f32.mrb[0].mxu0
      %v5228 = vadd.f32 0.0, %v5227
      %v5229 = vpop.f32.mrb[0].mxu0
      %v5230 = vadd.f32 0.0, %v5229
      %v5231 = vpop.f32.mrb[0].mxu0
      %v5232 = vadd.f32 0.0, %v5231
      %v5233 = vpop.f32.mrb[0].mxu0
      %v5234 = vadd.f32 0.0, %v5233
      %5235 = vmatprep.mubr.bf16.mxu0 0
      %5236 = vmatmul.mubr.bf16.gmra.mrb[0].mxu0 %v525
      %v5237 = vpop.f32.mrb[0].mxu0
      %v5238 = vadd.f32 0.0, %v5237
      %v5239 = vpop.f32.mrb[0].mxu0
      %v5240 = vadd.f32 0.0, %v5239
      %v5241 = vpop.f32.mrb[0].mxu0
      %v5242 = vadd.f32 0.0, %v5241
      %v5243 = vpop.f32.mrb[0].mxu0
      %v5244 = vadd.f32 0.0, %v5243
      %5245 = vmatprep.mubr.bf16.mxu0 0
      %5246 = vmatmul.mubr.bf16.gmra.mrb[0].mxu0 %v528
      %v5247 = vpop.f32.mrb[0].mxu0
      %v5248 = vadd.f32 0.0, %v5247
      %v5249 = vpop.f32.mrb[0].mxu0
      %v5250 = vadd.f32 0.0, %v5249
      %v5251 = vpop.f32.mrb[0].mxu0
      %v5252 = vadd.f32 0.0, %v5251
      %v5253 = vpop.f32.mrb[0].mxu0
      %v5254 = vadd.f32 0.0, %v5253
      %5255 = vmatprep.mubr.bf16.mxu0 0
      %5256 = vmatmul.mubr.bf16.gmra.mrb[0].mxu0 %v531
      %v5257 = vpop.f32.mrb[0].mxu0
      %v5258 = vadd.f32 0.0, %v5257
      %v5259 = vpop.f32.mrb[0].mxu0
      %v5260 = vadd.f32 0.0, %v5259
      %v5261 = vpop.f32.mrb[0].mxu0
      %v5262 = vadd.f32 0.0, %v5261
      %v5263 = vpop.f32.mrb[0].mxu0
      %v5264 = vadd.f32 0.0, %v5263
      %5265 = vmatprep.mubr.bf16.mxu0 0
      %5266 = vmatmul.mubr.bf16.gmra.mrb[0].mxu0 %v534
      %v5267 = vpop.f32.mrb[0].mxu0
      %v5268 = vadd.f32 0.0, %v5267
      %v5269 = vpop.f32.mrb[0].mxu0
      %v5270 = vadd.f32 0.0, %v5269
      %v5271 = vpop.f32.mrb[0].mxu0
      %v5272 = vadd.f32 0.0, %v5271
      %v5273 = vpop.f32.mrb[0].mxu0
      %v5274 = vadd.f32 0.0, %v5273
      %5275 = vmatprep.mubr.bf16.mxu0 0
      %5276 = vmatmul.mubr.bf16.gmra.mrb[0].mxu0 %v537
      %v5277 = vpop.f32.mrb[0].mxu0
      %v5278 = vadd.f32 0.0, %v5277
      %v5279 = vpop.f32.mrb[0].mxu0
      %v5280 = vadd.f32 0.0, %v5279
      %v5281 = vpop.f32.mrb[0].mxu0
      %v5282 = vadd.f32 0.0, %v5281
      %v5283 = vpop.f32.mrb[0].mxu0
      %v5284 = vadd.f32 0.0, %v5283
      %5285 = vmatprep.mubr.bf16.mxu0 0
      %5286 = vmatmul.mubr.bf16.gmra.mrb[0].mxu0 %v540
      %v5287 = vpop.f32.mrb[0].mxu0
      %v5288 = vadd.f32 0.0, %v5287
      %v5289 = vpop.f32.mrb[0].mxu0
      %v5290 = vadd.f32 0.0, %v5289
      %v5291 = vpop.f32.mrb[0].mxu0
      %v5292 = vadd.f32 0.0, %v5291
      %v5293 = vpop.f32.mrb[0].mxu0
      %v5294 = vadd.f32 0.0, %v5293
      %5295 = vdwg.mxu0
      %v5296 = vmax.f32 %v5138, %v5148
      %v5297 = vmax.f32 %v5142, %v5152
      %v5298 = vmax.f32 %v5296, %v5158
      %v5299 = vmax.f32 %v5297, %v5162
      %v5300 = vmax.f32 %v5298, %v5168
      %v5301 = vmax.f32 %v5299, %v5172
      %v5302 = vmax.f32 %v5300, %v5178
      %v5303 = vmax.f32 %v5301, %v5182
      %v5304 = vmax.f32 %v5302, %v5188
      %v5305 = vmax.f32 %v5303, %v5192
      %v5306 = vmax.f32 %v5304, %v5198
      %v5307 = vmax.f32 %v5305, %v5202
      %v5308 = vmax.f32 %v5306, %v5208
      %v5309 = vmax.f32 %v5307, %v5212
      %v5310 = vmax.f32 %v5308, %v5218
      %v5311 = vmax.f32 %v5309, %v5222
      %v5312 = vmax.f32 %v5310, %v5228
      %v5313 = vmax.f32 %v5311, %v5232
      %v5314 = vmax.f32 %v5312, %v5238
      %v5315 = vmax.f32 %v5313, %v5242
      %v5316 = vmax.f32 %v5314, %v5248
      %v5317 = vmax.f32 %v5315, %v5252
      %v5318 = vmax.f32 %v5316, %v5258
      %v5319 = vmax.f32 %v5317, %v5262
      %v5320 = vmax.f32 %v5318, %v5268
      %v5321 = vmax.f32 %v5319, %v5272
      %v5322 = vmax.f32 %v5320, %v5278
      %v5323 = vmax.f32 %v5321, %v5282
      %v5324 = vmax.f32 %v5322, %v5288
      %v5325 = vmax.f32 %v5323, %v5292
      %v5326 = vmax.f32 %v5324, %v5325
      %v5327 = vrot.slane %v5326, 4
      %v5328 = vmax.f32 %v5326, %v5327
      %v5329 = vrot.slane %v5328, 2
      %v5330 = vmax.f32 %v5328, %v5329
      %v5331 = vrot.slane %v5330, 1
      %v5332 = vmax.f32 %v5330, %v5331
      %v5333 = vmax.f32 %v5140, %v5150
      %v5334 = vmax.f32 %v5144, %v5154
      %v5335 = vmax.f32 %v5333, %v5160
      %v5336 = vmax.f32 %v5334, %v5164
      %v5337 = vmax.f32 %v5335, %v5170
      %v5338 = vmax.f32 %v5336, %v5174
      %v5339 = vmax.f32 %v5337, %v5180
      %v5340 = vmax.f32 %v5338, %v5184
      %v5341 = vmax.f32 %v5339, %v5190
      %v5342 = vmax.f32 %v5340, %v5194
      %v5343 = vmax.f32 %v5341, %v5200
      %v5344 = vmax.f32 %v5342, %v5204
      %v5345 = vmax.f32 %v5343, %v5210
      %v5346 = vmax.f32 %v5344, %v5214
      %v5347 = vmax.f32 %v5345, %v5220
      %v5348 = vmax.f32 %v5346, %v5224
      %v5349 = vmax.f32 %v5347, %v5230
      %v5350 = vmax.f32 %v5348, %v5234
      %v5351 = vmax.f32 %v5349, %v5240
      %v5352 = vmax.f32 %v5350, %v5244
      %v5353 = vmax.f32 %v5351, %v5250
      %v5354 = vmax.f32 %v5352, %v5254
      %v5355 = vmax.f32 %v5353, %v5260
      %v5356 = vmax.f32 %v5354, %v5264
      %v5357 = vmax.f32 %v5355, %v5270
      %v5358 = vmax.f32 %v5356, %v5274
      %v5359 = vmax.f32 %v5357, %v5280
      %v5360 = vmax.f32 %v5358, %v5284
      %v5361 = vmax.f32 %v5359, %v5290
      %v5362 = vmax.f32 %v5360, %v5294
      %v5363 = vmax.f32 %v5361, %v5362
      %v5364 = vrot.slane %v5363, 4
      %v5365 = vmax.f32 %v5363, %v5364
      %v5366 = vrot.slane %v5365, 2
      %v5367 = vmax.f32 %v5365, %v5366
      %v5368 = vrot.slane %v5367, 1
      %v5369 = vmax.f32 %v5367, %v5368
      %v5370 = vsub.f32 %v5138, %v5332
      %v5371 = vsub.f32 %v5140, %v5369
      %v5372 = vsub.f32 %v5142, %v5332
      %v5373 = vsub.f32 %v5144, %v5369
      %v5374 = vsub.f32 %v5148, %v5332
      %v5375 = vsub.f32 %v5150, %v5369
      %v5376 = vsub.f32 %v5152, %v5332
      %v5377 = vsub.f32 %v5154, %v5369
      %v5378 = vsub.f32 %v5158, %v5332
      %v5379 = vsub.f32 %v5160, %v5369
      %v5380 = vsub.f32 %v5162, %v5332
      %v5381 = vsub.f32 %v5164, %v5369
      %v5382 = vsub.f32 %v5168, %v5332
      %v5383 = vsub.f32 %v5170, %v5369
      %v5384 = vsub.f32 %v5172, %v5332
      %v5385 = vsub.f32 %v5174, %v5369
      %v5386 = vsub.f32 %v5178, %v5332
      %v5387 = vsub.f32 %v5180, %v5369
      %v5388 = vsub.f32 %v5182, %v5332
      %v5389 = vsub.f32 %v5184, %v5369
      %v5390 = vsub.f32 %v5188, %v5332
      %v5391 = vsub.f32 %v5190, %v5369
      %v5392 = vsub.f32 %v5192, %v5332
      %v5393 = vsub.f32 %v5194, %v5369
      %v5394 = vsub.f32 %v5198, %v5332
      %v5395 = vsub.f32 %v5200, %v5369
      %v5396 = vsub.f32 %v5202, %v5332
      %v5397 = vsub.f32 %v5204, %v5369
      %v5398 = vsub.f32 %v5208, %v5332
      %v5399 = vsub.f32 %v5210, %v5369
      %v5400 = vsub.f32 %v5212, %v5332
      %v5401 = vsub.f32 %v5214, %v5369
      %v5402 = vsub.f32 %v5218, %v5332
      %v5403 = vsub.f32 %v5220, %v5369
      %v5404 = vsub.f32 %v5222, %v5332
      %v5405 = vsub.f32 %v5224, %v5369
      %v5406 = vsub.f32 %v5228, %v5332
      %v5407 = vsub.f32 %v5230, %v5369
      %v5408 = vsub.f32 %v5232, %v5332
      %v5409 = vsub.f32 %v5234, %v5369
      %v5410 = vsub.f32 %v5238, %v5332
      %v5411 = vsub.f32 %v5240, %v5369
      %v5412 = vsub.f32 %v5242, %v5332
      %v5413 = vsub.f32 %v5244, %v5369
      %v5414 = vsub.f32 %v5248, %v5332
      %v5415 = vsub.f32 %v5250, %v5369
      %v5416 = vsub.f32 %v5252, %v5332
      %v5417 = vsub.f32 %v5254, %v5369
      %v5418 = vsub.f32 %v5258, %v5332
      %v5419 = vsub.f32 %v5260, %v5369
      %v5420 = vsub.f32 %v5262, %v5332
      %v5421 = vsub.f32 %v5264, %v5369
      %v5422 = vsub.f32 %v5268, %v5332
      %v5423 = vsub.f32 %v5270, %v5369
      %v5424 = vsub.f32 %v5272, %v5332
      %v5425 = vsub.f32 %v5274, %v5369
      %v5426 = vsub.f32 %v5278, %v5332
      %v5427 = vsub.f32 %v5280, %v5369
      %v5428 = vsub.f32 %v5282, %v5332
      %v5429 = vsub.f32 %v5284, %v5369
      %v5430 = vsub.f32 %v5288, %v5332
      %v5431 = vsub.f32 %v5290, %v5369
      %v5432 = vsub.f32 %v5292, %v5332
      %v5433 = vsub.f32 %v5294, %v5369
      %v5434 = vmul.f32 %v5370, 1.442695
      %v5435 = vpow.pop %v5434
      %v5436 = vmul.f32 %v5371, 1.442695
      %v5437 = vpow.pop %v5436
      %v5438 = vmul.f32 %v5372, 1.442695
      %v5439 = vpow.pop %v5438
      %v5440 = vmul.f32 %v5373, 1.442695
      %v5441 = vpow.pop %v5440
      %v5442 = vmul.f32 %v5374, 1.442695
      %v5443 = vpow.pop %v5442
      %v5444 = vmul.f32 %v5375, 1.442695
      %v5445 = vpow.pop %v5444
      %v5446 = vmul.f32 %v5376, 1.442695
      %v5447 = vpow.pop %v5446
      %v5448 = vmul.f32 %v5377, 1.442695
      %v5449 = vpow.pop %v5448
      %v5450 = vmul.f32 %v5378, 1.442695
      %v5451 = vpow.pop %v5450
      %v5452 = vmul.f32 %v5379, 1.442695
      %v5453 = vpow.pop %v5452
      %v5454 = vmul.f32 %v5380, 1.442695
      %v5455 = vpow.pop %v5454
      %v5456 = vmul.f32 %v5381, 1.442695
      %v5457 = vpow.pop %v5456
      %v5458 = vmul.f32 %v5382, 1.442695
      %v5459 = vpow.pop %v5458
      %v5460 = vmul.f32 %v5383, 1.442695
      %v5461 = vpow.pop %v5460
      %v5462 = vmul.f32 %v5384, 1.442695
      %v5463 = vpow.pop %v5462
      %v5464 = vmul.f32 %v5385, 1.442695
      %v5465 = vpow.pop %v5464
      %v5466 = vmul.f32 %v5386, 1.442695
      %v5467 = vpow.pop %v5466
      %v5468 = vmul.f32 %v5387, 1.442695
      %v5469 = vpow.pop %v5468
      %v5470 = vmul.f32 %v5388, 1.442695
      %v5471 = vpow.pop %v5470
      %v5472 = vmul.f32 %v5389, 1.442695
      %v5473 = vpow.pop %v5472
      %v5474 = vmul.f32 %v5390, 1.442695
      %v5475 = vpow.pop %v5474
      %v5476 = vmul.f32 %v5391, 1.442695
      %v5477 = vpow.pop %v5476
      %v5478 = vmul.f32 %v5392, 1.442695
      %v5479 = vpow.pop %v5478
      %v5480 = vmul.f32 %v5393, 1.442695
      %v5481 = vpow.pop %v5480
      %v5482 = vmul.f32 %v5394, 1.442695
      %v5483 = vpow.pop %v5482
      %v5484 = vmul.f32 %v5395, 1.442695
      %v5485 = vpow.pop %v5484
      %v5486 = vmul.f32 %v5396, 1.442695
      %v5487 = vpow.pop %v5486
      %v5488 = vmul.f32 %v5397, 1.442695
      %v5489 = vpow.pop %v5488
      %v5490 = vmul.f32 %v5398, 1.442695
      %v5491 = vpow.pop %v5490
      %v5492 = vmul.f32 %v5399, 1.442695
      %v5493 = vpow.pop %v5492
      %v5494 = vmul.f32 %v5400, 1.442695
      %v5495 = vpow.pop %v5494
      %v5496 = vmul.f32 %v5401, 1.442695
      %v5497 = vpow.pop %v5496
      %v5498 = vmul.f32 %v5402, 1.442695
      %v5499 = vpow.pop %v5498
      %v5500 = vmul.f32 %v5403, 1.442695
      %v5501 = vpow.pop %v5500
      %v5502 = vmul.f32 %v5404, 1.442695
      %v5503 = vpow.pop %v5502
      %v5504 = vmul.f32 %v5405, 1.442695
      %v5505 = vpow.pop %v5504
      %v5506 = vmul.f32 %v5406, 1.442695
      %v5507 = vpow.pop %v5506
      %v5508 = vmul.f32 %v5407, 1.442695
      %v5509 = vpow.pop %v5508
      %v5510 = vmul.f32 %v5408, 1.442695
      %v5511 = vpow.pop %v5510
      %v5512 = vmul.f32 %v5409, 1.442695
      %v5513 = vpow.pop %v5512
      %v5514 = vmul.f32 %v5410, 1.442695
      %v5515 = vpow.pop %v5514
      %v5516 = vmul.f32 %v5411, 1.442695
      %v5517 = vpow.pop %v5516
      %v5518 = vmul.f32 %v5412, 1.442695
      %v5519 = vpow.pop %v5518
      %v5520 = vmul.f32 %v5413, 1.442695
      %v5521 = vpow.pop %v5520
      %v5522 = vmul.f32 %v5414, 1.442695
      %v5523 = vpow.pop %v5522
      %v5524 = vmul.f32 %v5415, 1.442695
      %v5525 = vpow.pop %v5524
      %v5526 = vmul.f32 %v5416, 1.442695
      %v5527 = vpow.pop %v5526
      %v5528 = vmul.f32 %v5417, 1.442695
      %v5529 = vpow.pop %v5528
      %v5530 = vmul.f32 %v5418, 1.442695
      %v5531 = vpow.pop %v5530
      %v5532 = vmul.f32 %v5419, 1.442695
      %v5533 = vpow.pop %v5532
      %v5534 = vmul.f32 %v5420, 1.442695
      %v5535 = vpow.pop %v5534
      %v5536 = vmul.f32 %v5421, 1.442695
      %v5537 = vpow.pop %v5536
      %v5538 = vmul.f32 %v5422, 1.442695
      %v5539 = vpow.pop %v5538
      %v5540 = vmul.f32 %v5423, 1.442695
      %v5541 = vpow.pop %v5540
      %v5542 = vmul.f32 %v5424, 1.442695
      %v5543 = vpow.pop %v5542
      %v5544 = vmul.f32 %v5425, 1.442695
      %v5545 = vpow.pop %v5544
      %v5546 = vmul.f32 %v5426, 1.442695
      %v5547 = vpow.pop %v5546
      %v5548 = vmul.f32 %v5427, 1.442695
      %v5549 = vpow.pop %v5548
      %v5550 = vmul.f32 %v5428, 1.442695
      %v5551 = vpow.pop %v5550
      %v5552 = vmul.f32 %v5429, 1.442695
      %v5553 = vpow.pop %v5552
      %v5554 = vmul.f32 %v5430, 1.442695
      %v5555 = vpow.pop %v5554
      %v5556 = vmul.f32 %v5431, 1.442695
      %v5557 = vpow.pop %v5556
      %v5558 = vmul.f32 %v5432, 1.442695
      %v5559 = vpow.pop %v5558
      %v5560 = vmul.f32 %v5433, 1.442695
      %v5561 = vpow.pop %v5560
      %v5562 = vadd.f32 %v5435, %v5439
      %v5563 = vadd.f32 %v5562, %v5443
      %v5564 = vadd.f32 %v5563, %v5447
      %v5565 = vadd.f32 %v5564, %v5451
      %v5566 = vadd.f32 %v5565, %v5455
      %v5567 = vadd.f32 %v5566, %v5459
      %v5568 = vadd.f32 %v5567, %v5463
      %v5569 = vadd.f32 %v5568, %v5467
      %v5570 = vadd.f32 %v5569, %v5471
      %v5571 = vadd.f32 %v5570, %v5475
      %v5572 = vadd.f32 %v5571, %v5479
      %v5573 = vadd.f32 %v5572, %v5483
      %v5574 = vadd.f32 %v5573, %v5487
      %v5575 = vadd.f32 %v5574, %v5491
      %v5576 = vadd.f32 %v5575, %v5495
      %v5577 = vadd.f32 %v5576, %v5499
      %v5578 = vadd.f32 %v5577, %v5503
      %v5579 = vadd.f32 %v5578, %v5507
      %v5580 = vadd.f32 %v5579, %v5511
      %v5581 = vadd.f32 %v5580, %v5515
      %v5582 = vadd.f32 %v5581, %v5519
      %v5583 = vadd.f32 %v5582, %v5523
      %v5584 = vadd.f32 %v5583, %v5527
      %v5585 = vadd.f32 %v5584, %v5531
      %v5586 = vadd.f32 %v5585, %v5535
      %v5587 = vadd.f32 %v5586, %v5539
      %v5588 = vadd.f32 %v5587, %v5543
      %v5589 = vadd.f32 %v5588, %v5547
      %v5590 = vadd.f32 %v5589, %v5551
      %v5591 = vadd.f32 %v5590, %v5555
      %v5592 = vadd.f32 %v5591, %v5559
      %v5593 = vrot.slane %v5592, 4
      %v5594 = vadd.f32 %v5592, %v5593
      %v5595 = vrot.slane %v5594, 2
      %v5596 = vadd.f32 %v5594, %v5595
      %v5597 = vrot.slane %v5596, 1
      %v5598 = vadd.f32 %v5596, %v5597
      %v5599 = vadd.f32 %v5437, %v5441
      %v5600 = vadd.f32 %v5599, %v5445
      %v5601 = vadd.f32 %v5600, %v5449
      %v5602 = vadd.f32 %v5601, %v5453
      %v5603 = vadd.f32 %v5602, %v5457
      %v5604 = vadd.f32 %v5603, %v5461
      %v5605 = vadd.f32 %v5604, %v5465
      %v5606 = vadd.f32 %v5605, %v5469
      %v5607 = vadd.f32 %v5606, %v5473
      %v5608 = vadd.f32 %v5607, %v5477
      %v5609 = vadd.f32 %v5608, %v5481
      %v5610 = vadd.f32 %v5609, %v5485
      %v5611 = vadd.f32 %v5610, %v5489
      %v5612 = vadd.f32 %v5611, %v5493
      %v5613 = vadd.f32 %v5612, %v5497
      %v5614 = vadd.f32 %v5613, %v5501
      %v5615 = vadd.f32 %v5614, %v5505
      %v5616 = vadd.f32 %v5615, %v5509
      %v5617 = vadd.f32 %v5616, %v5513
      %v5618 = vadd.f32 %v5617, %v5517
      %v5619 = vadd.f32 %v5618, %v5521
      %v5620 = vadd.f32 %v5619, %v5525
      %v5621 = vadd.f32 %v5620, %v5529
      %v5622 = vadd.f32 %v5621, %v5533
      %v5623 = vadd.f32 %v5622, %v5537
      %v5624 = vadd.f32 %v5623, %v5541
      %v5625 = vadd.f32 %v5624, %v5545
      %v5626 = vadd.f32 %v5625, %v5549
      %v5627 = vadd.f32 %v5626, %v5553
      %v5628 = vadd.f32 %v5627, %v5557
      %v5629 = vadd.f32 %v5628, %v5561
      %v5630 = vrot.slane %v5629, 4
      %v5631 = vadd.f32 %v5629, %v5630
      %v5632 = vrot.slane %v5631, 2
      %v5633 = vadd.f32 %v5631, %v5632
      %v5634 = vrot.slane %v5633, 1
      %v5635 = vadd.f32 %v5633, %v5634
      %v5636 = vrcp.pop %v5598
      %v5637 = vrcp.pop %v5635
      %v5638 = vmul.bf16 %v453, %v5096
      %v5639 = vmul.bf16 %v454, %v5096
      %v5640 = vpack.c.bf16 %v5439, %v5435
      %v5641 = vpack.c.bf16 %v5441, %v5437
      %v5642 = vpack.c.bf16 %v5447, %v5443
      %v5643 = vpack.c.bf16 %v5449, %v5445
      %v5644 = vpack.c.bf16 %v5455, %v5451
      %v5645 = vpack.c.bf16 %v5457, %v5453
      %v5646 = vpack.c.bf16 %v5463, %v5459
      %v5647 = vpack.c.bf16 %v5465, %v5461
      %v5648 = vpack.c.bf16 %v5471, %v5467
      %v5649 = vpack.c.bf16 %v5473, %v5469
      %v5650 = vpack.c.bf16 %v5479, %v5475
      %v5651 = vpack.c.bf16 %v5481, %v5477
      %v5652 = vpack.c.bf16 %v5487, %v5483
      %v5653 = vpack.c.bf16 %v5489, %v5485
      %v5654 = vpack.c.bf16 %v5495, %v5491
      %v5655 = vpack.c.bf16 %v5497, %v5493
      %v5656 = vpack.c.bf16 %v5503, %v5499
      %v5657 = vpack.c.bf16 %v5505, %v5501
      %v5658 = vpack.c.bf16 %v5511, %v5507
      %v5659 = vpack.c.bf16 %v5513, %v5509
      %v5660 = vpack.c.bf16 %v5519, %v5515
      %v5661 = vpack.c.bf16 %v5521, %v5517
      %v5662 = vpack.c.bf16 %v5527, %v5523
      %v5663 = vpack.c.bf16 %v5529, %v5525
      %v5664 = vpack.c.bf16 %v5535, %v5531
      %v5665 = vpack.c.bf16 %v5537, %v5533
      %v5666 = vpack.c.bf16 %v5543, %v5539
      %v5667 = vpack.c.bf16 %v5545, %v5541
      %v5668 = vpack.c.bf16 %v5551, %v5547
      %v5669 = vpack.c.bf16 %v5553, %v5549
      %v5670 = vpack.c.bf16 %v5559, %v5555
      %v5671 = vpack.c.bf16 %v5561, %v5557
      %5672 = vmatprep.subr.bf16.mxu0 %v5641
      %5673 = vmatpush1.bf16.msra.mxu0 %v5640
      %5674 = vmatprep.subr.bf16.mxu0 %v5643
      %5675 = vmatpush1.bf16.msra.mxu0 %v5642
      %5676 = vmatprep.subr.bf16.mxu0 %v5645
      %5677 = vmatpush1.bf16.msra.mxu0 %v5644
      %5678 = vmatprep.subr.bf16.mxu0 %v5647
      %5679 = vmatpush1.bf16.msra.mxu0 %v5646
      %5680 = vmatprep.subr.bf16.mxu0 %v5649
      %5681 = vmatpush1.bf16.msra.mxu0 %v5648
      %5682 = vmatprep.subr.bf16.mxu0 %v5651
      %5683 = vmatpush1.bf16.msra.mxu0 %v5650
      %5684 = vmatprep.subr.bf16.mxu0 %v5653
      %5685 = vmatpush1.bf16.msra.mxu0 %v5652
      %5686 = vmatprep.subr.bf16.mxu0 %v5655
      %5687 = vmatpush1.bf16.msra.mxu0 %v5654
      %5688 = vmatprep.subr.bf16.mxu0 %v5657
      %5689 = vmatpush1.bf16.msra.mxu0 %v5656
      %5690 = vmatprep.subr.bf16.mxu0 %v5659
      %5691 = vmatpush1.bf16.msra.mxu0 %v5658
      %5692 = vmatprep.subr.bf16.mxu0 %v5661
      %5693 = vmatpush1.bf16.msra.mxu0 %v5660
      %5694 = vmatprep.subr.bf16.mxu0 %v5663
      %5695 = vmatpush1.bf16.msra.mxu0 %v5662
      %5696 = vmatprep.subr.bf16.mxu0 %v5665
      %5697 = vmatpush1.bf16.msra.mxu0 %v5664
      %5698 = vmatprep.subr.bf16.mxu0 %v5667
      %5699 = vmatpush1.bf16.msra.mxu0 %v5666
      %5700 = vmatprep.subr.bf16.mxu0 %v5669
      %5701 = vmatpush1.bf16.msra.mxu0 %v5668
      %5702 = vmatprep.subr.bf16.mxu0 %v5671
      %5703 = vmatpush1.bf16.msra.mxu0 %v5670
      %5704 = vmatprep.mubr.bf16.mxu0 %v5639
      %5705 = vmatmul.mubr.bf16.gmra.mrb[0].mxu0 %v5638
      %v5706 = vpop.f32.mrb[0].mxu0
      %v5707 = vadd.f32 0.0, %v5706
      %v5708 = vpop.f32.mrb[0].mxu0
      %v5709 = vadd.f32 0.0, %v5708
      %v5710 = vpop.f32.mrb[0].mxu0
      %v5711 = vadd.f32 0.0, %v5710
      %v5712 = vpop.f32.mrb[0].mxu0
      %v5713 = vadd.f32 0.0, %v5712
      %5714 = vdwg.mxu0
      %v5715 = vmul.f32 %v5707, %v5636
      %v5716 = vmul.f32 %v5709, %v5637
      %v5717 = vmul.f32 %v5711, %v5636
      %v5718 = vmul.f32 %v5713, %v5637
      %v5719 = vadd.f32 %v5068, %v5715
      %v5720 = vadd.f32 %v5069, %v5716
      %v5721 = vadd.f32 %v5070, %v5717
      %v5722 = vadd.f32 %v5071, %v5718
      %s5723 = sld [smem:[#allocation2]]
      %v5724 = vstv %s5723
      %v5725 = vmul.f32 %v5724, %v5719
      %v5726 = vmul.f32 %v5724, %v5720
      %v5727 = vmul.f32 %v5724, %v5721
      %v5728 = vmul.f32 %v5724, %v5722
      %v5729 = vadd.f32 %v5725, %v227
      %v5730 = vadd.f32 %v5726, %v228
      %v5731 = vadd.f32 %v5727, %v229
      %v5732 = vadd.f32 %v5728, %v230
      %5733 = vst [vmem:[%s225] sm:$0xff] %v5729
      %5734 = vst [vmem:[%s225 + $0x8] sm:$0xff] %v5730
      %5735 = vst [vmem:[%s225 + $0x10] sm:$0xff] %v5731
      %5736 = vst [vmem:[%s225 + $0x18] sm:$0xff] %v5732
      %p5737 = scmp.lt.s32.totalorder %s17, 1
      %s5738 = scalar_select %p5737, %s17, 1
      %s5739 = smul.addr %s5738, 4
      %s5740 = smul.addr %s5739, 8
      %s5741 = scalar_lea.vmem %s5, %s5740
      // Predicated region
      $region41: #{swa_forward.1} parent=39 // pred_check
        %p5742 = pneg %p145
      $region42: #{swa_forward.1} parent=39 // pred_check_branch
        %5744 = sbr.rel (%p5742) target = $region44
      $region43: #{swa_forward.1} parent=39 // pred_region
        _
      $region44: #{swa_forward.1} parent=39 // pred_fallthru
        _
    $region40: #{swa_forward.1} parent=5 // pred_fallthru
      _
    %p5745 = scmp.le.s32.totalorder 2, %s12
    // Predicated region
    $region45: #{swa_forward.1} parent=5 // pred_check
      %p5746 = pneg %p5745
    $region46: #{swa_forward.1} parent=5 // pred_check_branch
      %5748 = sbr.rel (%p5746) target = $region48
    $region47: #{swa_forward.1} parent=5 // pred_region
      %s5749 = ssub.s32 %s12, 2
      // Predicated region
      $region49: #{swa_forward.1} parent=47 // pred_check
        %p5750 = pneg %p151
      $region50: #{swa_forward.1} parent=47 // pred_check_branch
        %5752 = sbr.rel (%p5750) target = $region52
      $region51: #{swa_forward.1} parent=47 // pred_region
        %p5753 = scmp.lt.s32.totalorder %s18, 1
        %s5754 = scalar_select %p5753, %s18, 1
        %s5755 = smul.addr %s5754, 4
        %s5756 = smul.addr %s5755, 8
        %s5757 = scalar_lea.vmem %s5, %s5756
      $region52: #{swa_forward.1} parent=47 // pred_fallthru
        _
    $region48: #{swa_forward.1} parent=5 // pred_fallthru
      _
  $region6: #{swa_forward.1} parent=0 // loop_footer
    %s16 = sadd.s32 1, %s12
  $region7: #{swa_forward.1} parent=0 // loop_footer_branch
    %11 = sbr.rel target = $region3
  $region8: #{swa_forward.1} parent=0 // loop_exit
    _

</llo_original>
